<compile_context>
chip_gen: v7x
topology: tpu7x:2x2x1
jax: 0.10.0
libtpu: 0.0.40
codegen_flags: <defaults>
</compile_context>

<pallas_src>
from functools import partial

import jax
import jax.numpy as jnp
from jax import lax
from jax.experimental import pallas as pl
from jax.experimental.pallas import tpu as pltpu

# Make the pure-JAX reference use full f32 matmul precision so the correctness check
# compares accurate-vs-accurate.
jax.config.update("jax_default_matmul_precision", "highest")

_LN_EPS = 1e-5
_VMEM_LIMIT = 32 * 1024 * 1024  # safe on v5e/v6e/v7x (v7x physical VMEM is 64 MiB)


# ---------------------------------------------------------------------------
# Kernel 1: fused LayerNorm(feat) + K/V projection, row-tiled.
# ---------------------------------------------------------------------------
def _ln_kv_kernel(x_ref, g_ref, b_ref, wk_ref, wv_ref, k_ref, v_ref, *, ln_eps):
    x = x_ref[...].astype(jnp.float32)                      # [TM, C]
    mu = jnp.mean(x, axis=-1, keepdims=True)
    xc = x - mu
    var = jnp.mean(xc * xc, axis=-1, keepdims=True)
    xn = xc * lax.rsqrt(var + ln_eps)
    xn = xn * g_ref[...].astype(jnp.float32) + b_ref[...].astype(jnp.float32)
    k_ref[...] = jnp.dot(xn, wk_ref[...].astype(jnp.float32),
                         preferred_element_type=jnp.float32).astype(k_ref.dtype)
    v_ref[...] = jnp.dot(xn, wv_ref[...].astype(jnp.float32),
                         preferred_element_type=jnp.float32).astype(v_ref.dtype)


def ln_project_kv(x2d, gamma, beta, wk_T, wv_T, *, tile_m=256, ln_eps=_LN_EPS):
    rows, C = x2d.shape
    D = wk_T.shape[1]
    tile_m = min(tile_m, rows)
    if rows % tile_m != 0:
        tile_m = rows
    grid_m = rows // tile_m
    k2d, v2d = pl.pallas_call(
        partial(_ln_kv_kernel, ln_eps=ln_eps),
        out_shape=(jax.ShapeDtypeStruct((rows, D), jnp.float32),
                   jax.ShapeDtypeStruct((rows, D), jnp.float32)),
        grid=(grid_m,),
        in_specs=[
            pl.BlockSpec((tile_m, C), lambda i: (i, 0)),
            pl.BlockSpec((1, C), lambda i: (0, 0)),
            pl.BlockSpec((1, C), lambda i: (0, 0)),
            pl.BlockSpec((C, D), lambda i: (0, 0)),
            pl.BlockSpec((C, D), lambda i: (0, 0)),
        ],
        out_specs=(
            pl.BlockSpec((tile_m, D), lambda i: (i, 0)),
            pl.BlockSpec((tile_m, D), lambda i: (i, 0)),
        ),
        compiler_params=pltpu.CompilerParams(
            dimension_semantics=("parallel",),
            vmem_limit_bytes=_VMEM_LIMIT,
        ),
    )(x2d, gamma, beta, wk_T, wv_T)
    return k2d, v2d


# ---------------------------------------------------------------------------
# Kernel 2: LayerNorm + Linear (no bias) for the slot -> query projections.
# ---------------------------------------------------------------------------
def _ln_linear_kernel(x_ref, g_ref, b_ref, w_ref, o_ref, *, ln_eps):
    x = x_ref[...].astype(jnp.float32)
    mu = jnp.mean(x, axis=-1, keepdims=True)
    xc = x - mu
    var = jnp.mean(xc * xc, axis=-1, keepdims=True)
    xn = xc * lax.rsqrt(var + ln_eps)
    xn = xn * g_ref[...].astype(jnp.float32) + b_ref[...].astype(jnp.float32)
    o_ref[...] = jnp.dot(xn, w_ref[...].astype(jnp.float32),
                         preferred_element_type=jnp.float32).astype(o_ref.dtype)


def ln_linear(x2d, gamma, beta, w_T, *, ln_eps=_LN_EPS):
    rows, din = x2d.shape
    dout = w_T.shape[1]
    return pl.pallas_call(
        partial(_ln_linear_kernel, ln_eps=ln_eps),
        out_shape=jax.ShapeDtypeStruct((rows, dout), jnp.float32),
        grid=(1,),
        in_specs=[
            pl.BlockSpec((rows, din), lambda i: (0, 0)),
            pl.BlockSpec((1, din), lambda i: (0, 0)),
            pl.BlockSpec((1, din), lambda i: (0, 0)),
            pl.BlockSpec((din, dout), lambda i: (0, 0)),
        ],
        out_specs=pl.BlockSpec((rows, dout), lambda i: (0, 0)),
        compiler_params=pltpu.CompilerParams(dimension_semantics=("arbitrary",)),
    )(x2d, gamma, beta, w_T)


# ---------------------------------------------------------------------------
# Kernel 3: attention core.  Grid (B, N/TILE_N); softmax over slots, streams the
# attention map out per-tile and accumulates weighted-mean slot updates in scratch.
# ---------------------------------------------------------------------------
def _attn_update_kernel(q_ref, k_ref, v_ref, upd_ref, attn_ref,
                        num_acc, den_acc, *, scale, eps):
    ni = pl.program_id(1)

    @pl.when(ni == 0)
    def _():
        num_acc[...] = jnp.zeros_like(num_acc)
        den_acc[...] = jnp.zeros_like(den_acc)

    q = q_ref[0].astype(jnp.float32)        # [K, D]
    k = k_ref[0].astype(jnp.float32)        # [TN, D]
    v = v_ref[0].astype(jnp.float32)        # [TN, D]

    # dots[s, n] = <q_s, k_n> * scale  (contract over D; no transposed copy)
    dots = lax.dot_general(q, k, (((1,), (1,)), ((), ())),
                           preferred_element_type=jnp.float32) * scale   # [K, TN]
    m = jnp.max(dots, axis=0, keepdims=True)
    e = jnp.exp(dots - m)
    attn = e / jnp.sum(e, axis=0, keepdims=True) + eps   # softmax over slots (+eps)
    attn_ref[0] = attn.astype(attn_ref.dtype)

    # Accumulate unnormalized updates and per-slot attention mass.
    num_acc[...] += lax.dot_general(attn, v, (((1,), (0,)), ((), ())),
                                    preferred_element_type=jnp.float32)  # [K, D]
    den_acc[...] += jnp.sum(attn, axis=1, keepdims=True)                 # [K, 1]

    @pl.when(ni == pl.num_programs(1) - 1)
    def _():
        upd_ref[0] = (num_acc[...] / den_acc[...]).astype(upd_ref.dtype)


def attention_update(q, k, v, *, scale, eps, tile_n=128):
    B, K, D = q.shape
    N = k.shape[1]
    tile_n = min(tile_n, N)
    if N % tile_n != 0:
        tile_n = N
    grid = (B, N // tile_n)
    updates, attn = pl.pallas_call(
        partial(_attn_update_kernel, scale=scale, eps=eps),
        out_shape=(jax.ShapeDtypeStruct((B, K, D), jnp.float32),
                   jax.ShapeDtypeStruct((B, K, N), jnp.float32)),
        grid=grid,
        in_specs=[
            pl.BlockSpec((1, K, D), lambda b, n: (b, 0, 0)),
            pl.BlockSpec((1, tile_n, D), lambda b, n: (b, n, 0)),
            pl.BlockSpec((1, tile_n, D), lambda b, n: (b, n, 0)),
        ],
        out_specs=(
            pl.BlockSpec((1, K, D), lambda b, n: (b, 0, 0)),       # accumulator output
            pl.BlockSpec((1, K, tile_n), lambda b, n: (b, 0, n)),  # lane-dense attn tiles
        ),
        scratch_shapes=[
            pltpu.VMEM((K, D), jnp.float32),
            pltpu.VMEM((K, 1), jnp.float32),
        ],
        compiler_params=pltpu.CompilerParams(
            dimension_semantics=("parallel", "arbitrary"),
            vmem_limit_bytes=_VMEM_LIMIT,
        ),
    )(q, k, v)
    return updates, attn


# ---------------------------------------------------------------------------
# Kernel 4: fused GRUCell + residual MLP (LN -> Linear -> ReLU -> Linear).
# GRU weights are gate-major pre-transposed: wih[(r,z,n), in, hidden].
# ---------------------------------------------------------------------------
def _gru_res_kernel(x_ref, h_ref, wih_ref, whh_ref, bih_ref, bhh_ref,
                    g_ref, b_ref, w1_ref, b1_ref, w2_ref, b2_ref,
                    o_ref, *, ln_eps):
    x = x_ref[...].astype(jnp.float32)      # [R, Din]  (slot updates)
    h = h_ref[...].astype(jnp.float32)      # [R, Dh]   (previous slots)

    def gates(idx):
        gi = jnp.dot(x, wih_ref[idx].astype(jnp.float32),
                     preferred_element_type=jnp.float32) + bih_ref[idx].astype(jnp.float32)
        gh = jnp.dot(h, whh_ref[idx].astype(jnp.float32),
                     preferred_element_type=jnp.float32) + bhh_ref[idx].astype(jnp.float32)
        return gi, gh

    gi_r, gh_r = gates(0)
    gi_z, gh_z = gates(1)
    gi_n, gh_n = gates(2)
    r = jax.nn.sigmoid(gi_r + gh_r)
    z = jax.nn.sigmoid(gi_z + gh_z)
    n = jnp.tanh(gi_n + r * gh_n)
    h_new = (1.0 - z) * n + z * h           # [R, Dh]

    # residual branch: LayerNorm -> Linear -> ReLU -> Linear
    mu = jnp.mean(h_new, axis=-1, keepdims=True)
    xc = h_new - mu
    var = jnp.mean(xc * xc, axis=-1, keepdims=True)
    xn = xc * lax.rsqrt(var + ln_eps)
    xn = xn * g_ref[...].astype(jnp.float32) + b_ref[...].astype(jnp.float32)
    h1 = jnp.maximum(
        jnp.dot(xn, w1_ref[...].astype(jnp.float32),
                preferred_element_type=jnp.float32) + b1_ref[...].astype(jnp.float32), 0.0)
    res = jnp.dot(h1, w2_ref[...].astype(jnp.float32),
                  preferred_element_type=jnp.float32) + b2_ref[...].astype(jnp.float32)
    o_ref[...] = (h_new + res).astype(o_ref.dtype)


def gru_residual(x2d, h2d, wih3, whh3, bih3, bhh3, ln_g, ln_b, w1_T, b1, w2_T, b2,
                 *, ln_eps=_LN_EPS):
    rows, din = x2d.shape
    dh = h2d.shape[1]
    hid = w1_T.shape[1]

    def full(shape):
        nd = len(shape)
        return pl.BlockSpec(shape, lambda i, _nd=nd: (0,) * _nd)

    return pl.pallas_call(
        partial(_gru_res_kernel, ln_eps=ln_eps),
        out_shape=jax.ShapeDtypeStruct((rows, dh), jnp.float32),
        grid=(1,),
        in_specs=[
            full((rows, din)), full((rows, dh)),
            full((3, din, dh)), full((3, dh, dh)),
            full((3, 1, dh)), full((3, 1, dh)),
            full((1, dh)), full((1, dh)),
            full((dh, hid)), full((1, hid)),
            full((hid, dh)), full((1, dh)),
        ],
        out_specs=full((rows, dh)),
        compiler_params=pltpu.CompilerParams(dimension_semantics=("arbitrary",)),
    )(x2d, h2d, wih3, whh3, bih3, bhh3, ln_g, ln_b, w1_T, b1, w2_T, b2)


# ---------------------------------------------------------------------------
# Full SlotAttention forward (Pallas path).
# ---------------------------------------------------------------------------
def slot_attention_forward(p, feat, slot_bg, slot_fg, *, iters=3, eps=1e-8, slot_dim=64):
    B, N, C = feat.shape
    Kfg = slot_fg.shape[1]
    fg_dim = slot_fg.shape[2]
    bg_dim = slot_bg.shape[2]
    scale = slot_dim ** (-0.5)

    k2d, v2d = ln_project_kv(feat.reshape(B * N, C),
                             p["norm_feat_g"], p["norm_feat_b"], p["wk_T"], p["wv_T"])
    k = k2d.reshape(B, N, slot_dim)
    v = v2d.reshape(B, N, slot_dim)

    attn = None
    for _ in range(iters):
        prev_bg, prev_fg = slot_bg, slot_fg

        q_fg = ln_linear(slot_fg.reshape(B * Kfg, fg_dim),
                         p["q_ln_g"], p["q_ln_b"], p["wq_T"]).reshape(B, Kfg, slot_dim)
        q_bg = ln_linear(slot_bg.reshape(B, bg_dim),
                         p["qbg_ln_g"], p["qbg_ln_b"], p["wq_bg_T"]).reshape(B, 1, slot_dim)
        q = jnp.concatenate([q_bg, q_fg], axis=1)          # bg slot first (matches cat order)

        updates, attn = attention_update(q, k, v, scale=scale, eps=eps)
        upd_bg = updates[:, :1].reshape(B, slot_dim)
        upd_fg = updates[:, 1:].reshape(B * Kfg, slot_dim)

        slot_bg = gru_residual(
            upd_bg, prev_bg.reshape(B, bg_dim),
            p["gru_bg_wih"], p["gru_bg_whh"], p["gru_bg_bih"], p["gru_bg_bhh"],
            p["res_bg_ln_g"], p["res_bg_ln_b"],
            p["res_bg_w1_T"], p["res_bg_b1"], p["res_bg_w2_T"], p["res_bg_b2"],
        ).reshape(B, 1, bg_dim)
        slot_fg = gru_residual(
            upd_fg, prev_fg.reshape(B * Kfg, fg_dim),
            p["gru_fg_wih"], p["gru_fg_whh"], p["gru_fg_bih"], p["gru_fg_bhh"],
            p["res_fg_ln_g"], p["res_fg_ln_b"],
            p["res_fg_w1_T"], p["res_fg_b1"], p["res_fg_w2_T"], p["res_fg_b2"],
        ).reshape(B, Kfg, fg_dim)

    if bg_dim != fg_dim:
        pad = jnp.ones((B, 1, fg_dim - bg_dim), slot_fg.dtype)
        slot_bg = jnp.concatenate([slot_bg, pad], axis=-1)
    slots = jnp.concatenate([slot_bg, slot_fg], axis=1)
    return slots, attn


# ---------------------------------------------------------------------------
# Pure-JAX reference (mirrors the PyTorch module), for correctness checking.
# ---------------------------------------------------------------------------
def _ln_ref(x, g, b, eps=_LN_EPS):
    mu = x.mean(-1, keepdims=True)
    var = ((x - mu) ** 2).mean(-1, keepdims=True)
    return (x - mu) / jnp.sqrt(var + eps) * g + b


def _gru_ref(x, h, wih3, whh3, bih3, bhh3):
    def gate(i):
        return x @ wih3[i] + bih3[i], h @ whh3[i] + bhh3[i]
    gi_r, gh_r = gate(0)
    gi_z, gh_z = gate(1)
    gi_n, gh_n = gate(2)
    r = jax.nn.sigmoid(gi_r + gh_r)
    z = jax.nn.sigmoid(gi_z + gh_z)
    n = jnp.tanh(gi_n + r * gh_n)
    return (1.0 - z) * n + z * h


def slot_attention_reference(p, feat, slot_bg, slot_fg, *, iters, eps, slot_dim):
    B = feat.shape[0]
    scale = slot_dim ** (-0.5)
    featn = _ln_ref(feat, p["norm_feat_g"], p["norm_feat_b"])
    k = featn @ p["wk_T"]
    v = featn @ p["wv_T"]
    attn = None
    for _ in range(iters):
        prev_bg, prev_fg = slot_bg, slot_fg
        q_fg = _ln_ref(slot_fg, p["q_ln_g"], p["q_ln_b"]) @ p["wq_T"]
        q_bg = _ln_ref(slot_bg, p["qbg_ln_g"], p["qbg_ln_b"]) @ p["wq_bg_T"]
        dots_fg = jnp.einsum("bid,bjd->bij", q_fg, k) * scale
        dots_bg = jnp.einsum("bid,bjd->bij", q_bg, k) * scale
        dots = jnp.concatenate([dots_bg, dots_fg], axis=1)
        attn = jax.nn.softmax(dots, axis=1) + eps
        attn_bg, attn_fg = attn[:, :1], attn[:, 1:]
        w_bg = attn_bg / attn_bg.sum(-1, keepdims=True)
        w_fg = attn_fg / attn_fg.sum(-1, keepdims=True)
        upd_fg = jnp.einsum("bjd,bij->bid", v, w_fg)
        upd_bg = jnp.einsum("bjd,bij->bid", v, w_bg)

        sb = _gru_ref(upd_bg, prev_bg, p["gru_bg_wih"], p["gru_bg_whh"],
                      p["gru_bg_bih"], p["gru_bg_bhh"])
        sb = sb + (jnp.maximum(_ln_ref(sb, p["res_bg_ln_g"], p["res_bg_ln_b"]) @ p["res_bg_w1_T"]
                               + p["res_bg_b1"], 0.0) @ p["res_bg_w2_T"] + p["res_bg_b2"])
        slot_bg = sb

        sf = _gru_ref(upd_fg, prev_fg, p["gru_fg_wih"], p["gru_fg_whh"],
                      p["gru_fg_bih"], p["gru_fg_bhh"])
        sf = sf + (jnp.maximum(_ln_ref(sf, p["res_fg_ln_g"], p["res_fg_ln_b"]) @ p["res_fg_w1_T"]
                               + p["res_fg_b1"], 0.0) @ p["res_fg_w2_T"] + p["res_fg_b2"])
        slot_fg = sf
    if slot_bg.shape[-1] != slot_fg.shape[-1]:
        pad = jnp.ones((B, 1, slot_fg.shape[-1] - slot_bg.shape[-1]), slot_fg.dtype)
        slot_bg = jnp.concatenate([slot_bg, pad], axis=-1)
    return jnp.concatenate([slot_bg, slot_fg], axis=1), attn


if __name__ == "__main__":
    B, H, W = 2, 16, 16
    N = H * W           # 256 feature positions
    C = 128             # in_dim
    D = 64              # slot_dim == fg_slot_dim == bg_slot_dim
    HID = 128           # hidden dim of the residual MLP
    K = 5               # num_slots (1 bg + 4 fg)
    ITERS = 3
    EPS = 1e-8

    key = jax.random.PRNGKey(0)
    keys = iter(jax.random.split(key, 32))

    def rnd(shape, s):
        return jax.random.normal(next(keys), shape, jnp.float32) * s

    params = {
        "norm_feat_g": jnp.ones((1, C), jnp.float32),
        "norm_feat_b": jnp.zeros((1, C), jnp.float32),
        "wk_T": rnd((C, D), C ** -0.5),
        "wv_T": rnd((C, D), C ** -0.5),
        "q_ln_g": jnp.ones((1, D), jnp.float32),
        "q_ln_b": jnp.zeros((1, D), jnp.float32),
        "wq_T": rnd((D, D), D ** -0.5),
        "qbg_ln_g": jnp.ones((1, D), jnp.float32),
        "qbg_ln_b": jnp.zeros((1, D), jnp.float32),
        "wq_bg_T": rnd((D, D), D ** -0.5),
        # GRU weights, gate-major [r, z, n], pre-transposed.
        "gru_fg_wih": rnd((3, D, D), D ** -0.5),
        "gru_fg_whh": rnd((3, D, D), D ** -0.5),
        "gru_fg_bih": rnd((3, 1, D), D ** -0.5),
        "gru_fg_bhh": rnd((3, 1, D), D ** -0.5),
        "gru_bg_wih": rnd((3, D, D), D ** -0.5),
        "gru_bg_whh": rnd((3, D, D), D ** -0.5),
        "gru_bg_bih": rnd((3, 1, D), D ** -0.5),
        "gru_bg_bhh": rnd((3, 1, D), D ** -0.5),
        # residual MLPs
        "res_fg_ln_g": jnp.ones((1, D), jnp.float32),
        "res_fg_ln_b": jnp.zeros((1, D), jnp.float32),
        "res_fg_w1_T": rnd((D, HID), D ** -0.5),
        "res_fg_b1": jnp.zeros((1, HID), jnp.float32),
        "res_fg_w2_T": rnd((HID, D), HID ** -0.5),
        "res_fg_b2": jnp.zeros((1, D), jnp.float32),
        "res_bg_ln_g": jnp.ones((1, D), jnp.float32),
        "res_bg_ln_b": jnp.zeros((1, D), jnp.float32),
        "res_bg_w1_T": rnd((D, HID), D ** -0.5),
        "res_bg_b1": jnp.zeros((1, HID), jnp.float32),
        "res_bg_w2_T": rnd((HID, D), HID ** -0.5),
        "res_bg_b2": jnp.zeros((1, D), jnp.float32),
        # slot initialization parameters
        "slots_mu": rnd((1, 1, D), 1.0),
        "slots_logsigma": rnd((1, 1, D), 0.1),
        "slots_mu_bg": rnd((1, 1, D), 1.0),
        "slots_logsigma_bg": rnd((1, 1, D), 0.1),
    }

    feat = rnd((B, N, C), 1.0)
    noise_fg = rnd((B, K - 1, D), 1.0)
    noise_bg = rnd((B, 1, D), 1.0)
    slot_fg0 = params["slots_mu"] + jnp.exp(params["slots_logsigma"]) * noise_fg
    slot_bg0 = params["slots_mu_bg"] + jnp.exp(params["slots_logsigma_bg"]) * noise_bg

    slots, attn = slot_attention_forward(params, feat, slot_bg0, slot_fg0,
                                         iters=ITERS, eps=EPS, slot_dim=D)
    slots, attn = jax.block_until_ready((slots, attn))

    slots_ref, attn_ref = slot_attention_reference(params, feat, slot_bg0, slot_fg0,
                                                   iters=ITERS, eps=EPS, slot_dim=D)

    assert slots.shape == (B, K, D), slots.shape
    assert attn.shape == (B, K, N), attn.shape
    assert bool(jnp.allclose(slots, slots_ref, atol=5e-3, rtol=5e-3)), \
        float(jnp.max(jnp.abs(slots - slots_ref)))
    assert bool(jnp.allclose(attn, attn_ref, atol=5e-3, rtol=5e-3)), \
        float(jnp.max(jnp.abs(attn - attn_ref)))

    print("KERNEL_OK")
</pallas_src>

<mosaic_0001>
module attributes {stable_mosaic.version = 11 : i64} {
  func.func @_ln_kv_kernel(%arg0: i32, %arg1: memref<256x128xf32, #tpu.memory_space<vmem>>, %arg2: memref<1x128xf32, #tpu.memory_space<vmem>>, %arg3: memref<1x128xf32, #tpu.memory_space<vmem>>, %arg4: memref<128x64xf32, #tpu.memory_space<vmem>>, %arg5: memref<128x64xf32, #tpu.memory_space<vmem>>, %arg6: memref<256x64xf32, #tpu.memory_space<vmem>>, %arg7: memref<256x64xf32, #tpu.memory_space<vmem>>) attributes {dimension_semantics = [#tpu.dimension_semantics<parallel>], iteration_bounds = array<i64: 2>, scalar_prefetch = 0 : i64, scratch_operands = 0 : i64, tpu.core_type = #tpu.core_type<tc>, window_params = [{transform_indices = @transform_0, window_bounds = array<i64: 256, 128>}, {pipeline_mode = #tpu.pipeline_mode<synchronous>, transform_indices = @transform_1, window_bounds = array<i64: 1, 128>}, {pipeline_mode = #tpu.pipeline_mode<synchronous>, transform_indices = @transform_2, window_bounds = array<i64: 1, 128>}, {pipeline_mode = #tpu.pipeline_mode<synchronous>, transform_indices = @transform_3, window_bounds = array<i64: 128, 64>}, {pipeline_mode = #tpu.pipeline_mode<synchronous>, transform_indices = @transform_4, window_bounds = array<i64: 128, 64>}, {transform_indices = @transform_5, window_bounds = array<i64: 256, 64>}, {transform_indices = @transform_6, window_bounds = array<i64: 256, 64>}]} {
    %c0 = arith.constant 0 : index
    %c0_0 = arith.constant 0 : index
    %0 = vector.load %arg1[%c0, %c0_0] : memref<256x128xf32, #tpu.memory_space<vmem>>, vector<256x128xf32>
    %cst = arith.constant dense<0.000000e+00> : vector<256xf32>
    %1 = vector.multi_reduction <add>, %0, %cst [1] : vector<256x128xf32> to vector<256xf32>
    %2 = vector.shape_cast %1 : vector<256xf32> to vector<256x1xf32>
    %cst_1 = arith.constant 1.280000e+02 : f32
    %3 = vector.broadcast %cst_1 : f32 to vector<256x1xf32>
    %4 = arith.divf %2, %3 : vector<256x1xf32>
    %5 = vector.broadcast %4 : vector<256x1xf32> to vector<256x128xf32>
    %6 = arith.subf %0, %5 : vector<256x128xf32>
    %7 = arith.mulf %6, %6 : vector<256x128xf32>
    %cst_2 = arith.constant dense<0.000000e+00> : vector<256xf32>
    %8 = vector.multi_reduction <add>, %7, %cst_2 [1] : vector<256x128xf32> to vector<256xf32>
    %9 = vector.shape_cast %8 : vector<256xf32> to vector<256x1xf32>
    %cst_3 = arith.constant 1.280000e+02 : f32
    %10 = vector.broadcast %cst_3 : f32 to vector<256x1xf32>
    %11 = arith.divf %9, %10 : vector<256x1xf32>
    %cst_4 = arith.constant 9.99999974E-6 : f32
    %12 = vector.broadcast %cst_4 : f32 to vector<256x1xf32>
    %13 = arith.addf %11, %12 : vector<256x1xf32>
    %14 = math.rsqrt %13 : vector<256x1xf32>
    %15 = vector.broadcast %14 : vector<256x1xf32> to vector<256x128xf32>
    %16 = arith.mulf %6, %15 : vector<256x128xf32>
    %c0_5 = arith.constant 0 : index
    %c0_6 = arith.constant 0 : index
    %17 = vector.load %arg2[%c0_5, %c0_6] : memref<1x128xf32, #tpu.memory_space<vmem>>, vector<1x128xf32>
    %18 = vector.broadcast %17 : vector<1x128xf32> to vector<256x128xf32>
    %19 = arith.mulf %16, %18 : vector<256x128xf32>
    %c0_7 = arith.constant 0 : index
    %c0_8 = arith.constant 0 : index
    %20 = vector.load %arg3[%c0_7, %c0_8] : memref<1x128xf32, #tpu.memory_space<vmem>>, vector<1x128xf32>
    %21 = vector.broadcast %20 : vector<1x128xf32> to vector<256x128xf32>
    %22 = arith.addf %19, %21 : vector<256x128xf32>
    %c0_9 = arith.constant 0 : index
    %c0_10 = arith.constant 0 : index
    %23 = vector.load %arg4[%c0_9, %c0_10] : memref<128x64xf32, #tpu.memory_space<vmem>>, vector<128x64xf32>
    %cst_11 = arith.constant dense<0.000000e+00> : vector<256x64xf32>
    %24 = tpu.matmul %22, %23, %cst_11 {dimension_numbers = #tpu.dot_dimension_numbers<[1], [0], [0], [1], [0, 0, 1, 1], [], []>, precision = #tpu.contract_precision<fp32>} : vector<256x128xf32>, vector<128x64xf32>, vector<256x64xf32> -> vector<256x64xf32>
    %c0_12 = arith.constant 0 : index
    %c0_13 = arith.constant 0 : index
    %25 = vector.load %arg6[%c0_12, %c0_13] : memref<256x64xf32, #tpu.memory_space<vmem>>, vector<256x64xf32>
    tpu.vector_store %arg6[%c0_12, %c0_13], %24 {strides = array<i32>} : memref<256x64xf32, #tpu.memory_space<vmem>>, vector<256x64xf32>,
    %c0_14 = arith.constant 0 : index
    %c0_15 = arith.constant 0 : index
    %26 = vector.load %arg5[%c0_14, %c0_15] : memref<128x64xf32, #tpu.memory_space<vmem>>, vector<128x64xf32>
    %cst_16 = arith.constant dense<0.000000e+00> : vector<256x64xf32>
    %27 = tpu.matmul %22, %26, %cst_16 {dimension_numbers = #tpu.dot_dimension_numbers<[1], [0], [0], [1], [0, 0, 1, 1], [], []>, precision = #tpu.contract_precision<fp32>} : vector<256x128xf32>, vector<128x64xf32>, vector<256x64xf32> -> vector<256x64xf32>
    %c0_17 = arith.constant 0 : index
    %c0_18 = arith.constant 0 : index
    %28 = vector.load %arg7[%c0_17, %c0_18] : memref<256x64xf32, #tpu.memory_space<vmem>>, vector<256x64xf32>
    tpu.vector_store %arg7[%c0_17, %c0_18], %27 {strides = array<i32>} : memref<256x64xf32, #tpu.memory_space<vmem>>, vector<256x64xf32>,
    return
  }
  func.func @transform_0(%arg0: i32) -> (i32, i32) {
    %c0_i32 = arith.constant 0 : i32
    %c0_i32_0 = arith.constant 0 : i32
    return %arg0, %c0_i32 : i32, i32
  }
  func.func @transform_1(%arg0: i32) -> (i32, i32) {
    %c0_i32 = arith.constant 0 : i32
    %c0_i32_0 = arith.constant 0 : i32
    %c0_i32_1 = arith.constant 0 : i32
    return %c0_i32, %c0_i32_0 : i32, i32
  }
  func.func @transform_2(%arg0: i32) -> (i32, i32) {
    %c0_i32 = arith.constant 0 : i32
    %c0_i32_0 = arith.constant 0 : i32
    %c0_i32_1 = arith.constant 0 : i32
    return %c0_i32, %c0_i32_0 : i32, i32
  }
  func.func @transform_3(%arg0: i32) -> (i32, i32) {
    %c0_i32 = arith.constant 0 : i32
    %c0_i32_0 = arith.constant 0 : i32
    %c0_i32_1 = arith.constant 0 : i32
    return %c0_i32, %c0_i32_0 : i32, i32
  }
  func.func @transform_4(%arg0: i32) -> (i32, i32) {
    %c0_i32 = arith.constant 0 : i32
    %c0_i32_0 = arith.constant 0 : i32
    %c0_i32_1 = arith.constant 0 : i32
    return %c0_i32, %c0_i32_0 : i32, i32
  }
  func.func @transform_5(%arg0: i32) -> (i32, i32) {
    %c0_i32 = arith.constant 0 : i32
    %c0_i32_0 = arith.constant 0 : i32
    return %arg0, %c0_i32 : i32, i32
  }
  func.func @transform_6(%arg0: i32) -> (i32, i32) {
    %c0_i32 = arith.constant 0 : i32
    %c0_i32_0 = arith.constant 0 : i32
    return %arg0, %c0_i32 : i32, i32
  }
}

</mosaic_0001>

<llo_original>
// kernel: tpu_custom_call.1
$region0: #{tpu_custom_call.1}
  #allocation0 [shape = 'u32[]', space=smem, size = 0x4, offset = 0x4, fixed_abs, tag = 'smem constant byte address 0x4 - core index']
  #allocation1 [shape = 'u32[144,128]{1,0:T(1,128)}', space=vmem, size = 0x12000, scoped, tag = 'internal scratch']
  %s0 = inlined_call_operand.hbm [shape: f32[512,128], index: 0, kind: input, shape index: {}]
  %s1 = inlined_call_operand.vmem [shape: f32[1,128], index: 1, kind: input, shape index: {}]
  %s2 = inlined_call_operand.vmem [shape: f32[1,128], index: 2, kind: input, shape index: {}]
  %s3 = inlined_call_operand.vmem [shape: f32[128,64], index: 3, kind: input, shape index: {}]
  %s4 = inlined_call_operand.vmem [shape: f32[128,64], index: 4, kind: input, shape index: {}]
  %s5 = inlined_call_operand.vmem [shape: f32[512,64], index: 5, kind: output, shape index: {0}]
  %s6 = inlined_call_operand.vmem [shape: f32[512,64], index: 6, kind: output, shape index: {1}]
  %7 = xla_tuple %s5, %s6
  %s8 = sld [smem:[#allocation0]]
  $region65: #{tpu_custom_call.1} parent=0
    _
  %s10 = ssub.s32 1, %s8
  %s11 = scalar_select 0, %s10, %s8
  $region1: #{tpu_custom_call.1} parent=0
    #allocation2 [shape = 'u8[262144]{0}', space=vmem, size = 0x40000, scoped, tag = 'input window, operand 0']
    #allocation3 [shape = 's32[2]{0}', space=sflag, size = 0x8, scoped, tag = 'scoped memory for tpu_custom_call.1']
    %12 = vsyncpa [#allocation3], 0
    %s13 = scalar_lea.sflag [#allocation3], 1
    %14 = vsyncpa %s13, 0
    loop: start=0, step=1, limit=4
    $region2: #{tpu_custom_call.1} parent=1 // loop_pre_header
      _
    $region3: #{tpu_custom_call.1} parent=1 // loop_header
      %s16 = sphi 0, %s20
      %p17 = scmp.ge.s32.totalorder %s16, 4
      %s26 = sphi 0, %s28
      %s29 = sphi 0, %s26
      %s30 = sphi 0, %s29
      %s46 = sphi 0, %s30
      %s50 = sphi 0, %s50
      %s52 = sphi 0, %s50
      %s53 = sphi 0, %s52
      %s67 = sphi 0, %s53
      %s71 = sphi 0, %s71
      %s73 = sphi 0, %s71
      %s74 = sphi 0, %s73
      %s88 = sphi 0, %s74
      %s92 = sphi 0, %s92
      %s94 = sphi 0, %s92
      %s95 = sphi 0, %s94
      %s109 = sphi 0, %s95
      %s113 = sphi 0, %s113
      %s115 = sphi 0, %s113
      %s116 = sphi 0, %s115
      %s130 = sphi 0, %s116
      %s136 = sphi 0, %s138
      %s139 = sphi 0, %s136
      %s140 = sphi 0, %s139
      %s156 = sphi 0, %s140
      %s162 = sphi 0, %s164
      %s165 = sphi 0, %s162
      %s166 = sphi 0, %s165
      %s182 = sphi 0, %s166
    $region4: #{tpu_custom_call.1} parent=1 // loop_header_branch
      %19 = sbr.rel (%p17) target = $region8
    $region5: #{tpu_custom_call.1} parent=1 // loop_body
      %s21 = ssub.s32 %s16, 1
      %s22 = ssub.s32 %s16, 2
      %s23 = sadd.s32 %s16, 1
      %s24 = ssub.s32 %s16, %s23
      %p25 = scmp.eq.s32.totalorder %s24, 0
      %s27 = sadd.s32 %s26, 1
      %s28 = scalar_select %p25, %s26, %s27
      %p31 = pneg %p25
      %p32 = scmp.eq.s32.totalorder %s16, 1
      %p33 = por %p31, %p32
      %p34 = scmp.ne.s32.totalorder %s26, %s29
      %p35 = scmp.eq.s32.totalorder %s16, 0
      %p36 = por %p34, %p35
      %p37 = scmp.ne.s32.totalorder %s26, %s29
      %p38 = scmp.eq.s32.totalorder %s21, 1
      %p39 = por %p37, %p38
      %p40 = scmp.ne.s32.totalorder %s29, %s30
      %p41 = scmp.eq.s32.totalorder %s21, 0
      %p42 = por %p40, %p41
      %p43 = scmp.ne.s32.totalorder %s29, %s30
      %p44 = scmp.eq.s32.totalorder %s22, 1
      %p45 = por %p43, %p44
      %p47 = scmp.ne.s32.totalorder %s30, %s46
      %p48 = scmp.eq.s32.totalorder %s22, 0
      %p49 = por %p47, %p48
      %s51 = sadd.s32 %s50, 1
      %p54 = scmp.eq.s32.totalorder %s16, 1
      %p55 = scmp.ne.s32.totalorder %s50, %s52
      %p56 = scmp.eq.s32.totalorder %s16, 0
      %p57 = por %p55, %p56
      %p58 = scmp.ne.s32.totalorder %s50, %s52
      %p59 = scmp.eq.s32.totalorder %s21, 1
      %p60 = por %p58, %p59
      %p61 = scmp.ne.s32.totalorder %s52, %s53
      %p62 = scmp.eq.s32.totalorder %s21, 0
      %p63 = por %p61, %p62
      %p64 = scmp.ne.s32.totalorder %s52, %s53
      %p65 = scmp.eq.s32.totalorder %s22, 1
      %p66 = por %p64, %p65
      %p68 = scmp.ne.s32.totalorder %s53, %s67
      %p69 = scmp.eq.s32.totalorder %s22, 0
      %p70 = por %p68, %p69
      %s72 = sadd.s32 %s71, 1
      %p75 = scmp.eq.s32.totalorder %s16, 1
      %p76 = scmp.ne.s32.totalorder %s71, %s73
      %p77 = scmp.eq.s32.totalorder %s16, 0
      %p78 = por %p76, %p77
      %p79 = scmp.ne.s32.totalorder %s71, %s73
      %p80 = scmp.eq.s32.totalorder %s21, 1
      %p81 = por %p79, %p80
      %p82 = scmp.ne.s32.totalorder %s73, %s74
      %p83 = scmp.eq.s32.totalorder %s21, 0
      %p84 = por %p82, %p83
      %p85 = scmp.ne.s32.totalorder %s73, %s74
      %p86 = scmp.eq.s32.totalorder %s22, 1
      %p87 = por %p85, %p86
      %p89 = scmp.ne.s32.totalorder %s74, %s88
      %p90 = scmp.eq.s32.totalorder %s22, 0
      %p91 = por %p89, %p90
      %s93 = sadd.s32 %s92, 1
      %p96 = scmp.eq.s32.totalorder %s16, 1
      %p97 = scmp.ne.s32.totalorder %s92, %s94
      %p98 = scmp.eq.s32.totalorder %s16, 0
      %p99 = por %p97, %p98
      %p100 = scmp.ne.s32.totalorder %s92, %s94
      %p101 = scmp.eq.s32.totalorder %s21, 1
      %p102 = por %p100, %p101
      %p103 = scmp.ne.s32.totalorder %s94, %s95
      %p104 = scmp.eq.s32.totalorder %s21, 0
      %p105 = por %p103, %p104
      %p106 = scmp.ne.s32.totalorder %s94, %s95
      %p107 = scmp.eq.s32.totalorder %s22, 1
      %p108 = por %p106, %p107
      %p110 = scmp.ne.s32.totalorder %s95, %s109
      %p111 = scmp.eq.s32.totalorder %s22, 0
      %p112 = por %p110, %p111
      %s114 = sadd.s32 %s113, 1
      %p117 = scmp.eq.s32.totalorder %s16, 1
      %p118 = scmp.ne.s32.totalorder %s113, %s115
      %p119 = scmp.eq.s32.totalorder %s16, 0
      %p120 = por %p118, %p119
      %p121 = scmp.ne.s32.totalorder %s113, %s115
      %p122 = scmp.eq.s32.totalorder %s21, 1
      %p123 = por %p121, %p122
      %p124 = scmp.ne.s32.totalorder %s115, %s116
      %p125 = scmp.eq.s32.totalorder %s21, 0
      %p126 = por %p124, %p125
      %p127 = scmp.ne.s32.totalorder %s115, %s116
      %p128 = scmp.eq.s32.totalorder %s22, 1
      %p129 = por %p127, %p128
      %p131 = scmp.ne.s32.totalorder %s116, %s130
      %p132 = scmp.eq.s32.totalorder %s22, 0
      %p133 = por %p131, %p132
      %s134 = ssub.s32 %s16, %s23
      %p135 = scmp.eq.s32.totalorder %s134, 0
      %s137 = sadd.s32 %s136, 1
      %s138 = scalar_select %p135, %s136, %s137
      %p141 = pneg %p135
      %p142 = scmp.eq.s32.totalorder %s16, 1
      %p143 = por %p141, %p142
      %p144 = scmp.ne.s32.totalorder %s136, %s139
      %p145 = scmp.eq.s32.totalorder %s16, 0
      %p146 = por %p144, %p145
      %p147 = scmp.ne.s32.totalorder %s136, %s139
      %p148 = scmp.eq.s32.totalorder %s21, 1
      %p149 = por %p147, %p148
      %p150 = scmp.ne.s32.totalorder %s139, %s140
      %p151 = scmp.eq.s32.totalorder %s21, 0
      %p152 = por %p150, %p151
      %p153 = scmp.ne.s32.totalorder %s139, %s140
      %p154 = scmp.eq.s32.totalorder %s22, 1
      %p155 = por %p153, %p154
      %p157 = scmp.ne.s32.totalorder %s140, %s156
      %p158 = scmp.eq.s32.totalorder %s22, 0
      %p159 = por %p157, %p158
      %s160 = ssub.s32 %s16, %s23
      %p161 = scmp.eq.s32.totalorder %s160, 0
      %s163 = sadd.s32 %s162, 1
      %s164 = scalar_select %p161, %s162, %s163
      %p167 = pneg %p161
      %p168 = scmp.eq.s32.totalorder %s16, 1
      %p169 = por %p167, %p168
      %p170 = scmp.ne.s32.totalorder %s162, %s165
      %p171 = scmp.eq.s32.totalorder %s16, 0
      %p172 = por %p170, %p171
      %p173 = scmp.ne.s32.totalorder %s162, %s165
      %p174 = scmp.eq.s32.totalorder %s21, 1
      %p175 = por %p173, %p174
      %p176 = scmp.ne.s32.totalorder %s165, %s166
      %p177 = scmp.eq.s32.totalorder %s21, 0
      %p178 = por %p176, %p177
      %p179 = scmp.ne.s32.totalorder %s165, %s166
      %p180 = scmp.eq.s32.totalorder %s22, 1
      %p181 = por %p179, %p180
      %p183 = scmp.ne.s32.totalorder %s166, %s182
      %p184 = scmp.eq.s32.totalorder %s22, 0
      %p185 = por %p183, %p184
      %p186 = scmp.le.s32.totalorder 1, %s16
      %p187 = scmp.lt.s32.totalorder %s16, 3
      %p188 = pnand %p186, %p187
      %p189 = pneg %p188
      // Predicated region
      $region9: #{tpu_custom_call.1} parent=5 // pred_check
        _
      $region10: #{tpu_custom_call.1} parent=5 // pred_check_branch
        %191 = sbr.rel (%p188) target = $region12
      $region11: #{tpu_custom_call.1} parent=5 // pred_region
        %s192 = ssub.s32 %s16, 1
        // Predicated region
        $region13: #{tpu_custom_call.1} parent=11 // pred_check
          %p193 = pneg %p63
        $region14: #{tpu_custom_call.1} parent=11 // pred_check_branch
          %195 = sbr.rel (%p193) target = $region16
        $region15: #{tpu_custom_call.1} parent=11 // pred_region
          _
        $region16: #{tpu_custom_call.1} parent=11 // pred_fallthru
          _
        // Predicated region
        $region17: #{tpu_custom_call.1} parent=11 // pred_check
          %p196 = pneg %p84
        $region18: #{tpu_custom_call.1} parent=11 // pred_check_branch
          %198 = sbr.rel (%p196) target = $region20
        $region19: #{tpu_custom_call.1} parent=11 // pred_region
          _
        $region20: #{tpu_custom_call.1} parent=11 // pred_fallthru
          _
        // Predicated region
        $region21: #{tpu_custom_call.1} parent=11 // pred_check
          %p199 = pneg %p105
        $region22: #{tpu_custom_call.1} parent=11 // pred_check_branch
          %201 = sbr.rel (%p199) target = $region24
        $region23: #{tpu_custom_call.1} parent=11 // pred_region
          _
        $region24: #{tpu_custom_call.1} parent=11 // pred_fallthru
          _
        // Predicated region
        $region25: #{tpu_custom_call.1} parent=11 // pred_check
          %p202 = pneg %p126
        $region26: #{tpu_custom_call.1} parent=11 // pred_check_branch
          %204 = sbr.rel (%p202) target = $region28
        $region27: #{tpu_custom_call.1} parent=11 // pred_region
          _
        $region28: #{tpu_custom_call.1} parent=11 // pred_fallthru
          _
      $region12: #{tpu_custom_call.1} parent=5 // pred_fallthru
        _
      %p205 = scmp.lt.s32.totalorder %s16, 2
      // Predicated region
      $region29: #{tpu_custom_call.1} parent=5 // pred_check
        %p206 = pneg %p205
      $region30: #{tpu_custom_call.1} parent=5 // pred_check_branch
        %208 = sbr.rel (%p206) target = $region32
      $region31: #{tpu_custom_call.1} parent=5 // pred_region
        // Predicated region
        $region33: #{tpu_custom_call.1} parent=31 // pred_check
          %p209 = pneg %p36
        $region34: #{tpu_custom_call.1} parent=31 // pred_check_branch
          %211 = sbr.rel (%p209) target = $region36
        $region35: #{tpu_custom_call.1} parent=31 // pred_region
          %s212 = sand.u32 %s26, 1
          %s213 = scalar_lea.sflag [#allocation3], %s212
          %s214 = sand.u32 %s26, 1
          %s215 = smul.addr %s214, 256
          %s216 = scalar_lea.vmem [#allocation2], %s215
          %s217 = smul.u32 32, %s16
          %s219 = ssub.s32 4096, 4096
          %220 = vsyncadd %s213, %s219
          %s221 = smul.addr %s217, 128
          %s222 = scalar_lea.hbm %s0, %s221
          %s223 = sshll.u32 %s216, 4
          %s224 = int_to_ptr.vmem [resolvable:$true] %s223
          %229 = dma.hbm_to_vmem [thread:$0]  %s222, 4096, %s224, %s213, 128, 128, 8
        $region36: #{tpu_custom_call.1} parent=31 // pred_fallthru
          _
      $region32: #{tpu_custom_call.1} parent=5 // pred_fallthru
        _
      %p230 = scmp.le.s32.totalorder 1, %s16
      %p231 = scmp.lt.s32.totalorder %s16, 3
      %p232 = pnand %p230, %p231
      %p233 = pneg %p232
      // Predicated region
      $region37: #{tpu_custom_call.1} parent=5 // pred_check
        _
      $region38: #{tpu_custom_call.1} parent=5 // pred_check_branch
        %235 = sbr.rel (%p232) target = $region40
      $region39: #{tpu_custom_call.1} parent=5 // pred_region
        %s236 = ssub.s32 %s16, 1
        %s237 = sand.u32 %s29, 1
        %s238 = scalar_lea.sflag [#allocation3], %s237
        %s239 = sand.u32 %s29, 1
        %s240 = smul.addr %s239, 256
        %s241 = scalar_lea.vmem [#allocation2], %s240
        // Predicated region
        $region41: #{tpu_custom_call.1} parent=39 // pred_check
          %p242 = pneg %p42
        $region42: #{tpu_custom_call.1} parent=39 // pred_check_branch
          %244 = sbr.rel (%p242) target = $region44
        $region43: #{tpu_custom_call.1} parent=39 // pred_region
          %245 = dma.done %s238, 4096
        $region44: #{tpu_custom_call.1} parent=39 // pred_fallthru
          _
        %s246 = sand.u32 %s29, 1
        %s247 = scalar_lea.sflag [#allocation3], %s246
        %s248 = sand.u32 %s29, 1
        %s249 = smul.addr %s248, 256
        %s250 = scalar_lea.vmem [#allocation2], %s249
        %p251 = pneg %p42
        %p252 = pneg %p39
        %p253 = pneg %p63
        %p254 = pneg %p60
        %p255 = pneg %p84
        %p256 = pneg %p81
        %p257 = pneg %p105
        %p258 = pneg %p102
        %p259 = pneg %p126
        %p260 = pneg %p123
        %p261 = pneg %p152
        %p262 = pneg %p149
        %s263 = smul.u32 32, %s21
        %p264 = scmp.lt.s32.totalorder %s263, 63
        %s265 = scalar_select %p264, %s263, 63
        %s266 = smul.addr %s265, 8
        %s267 = scalar_lea.vmem %s5, %s266
        %p268 = pneg %p178
        %p269 = pneg %p175
        %s270 = smul.u32 32, %s21
        %p271 = scmp.lt.s32.totalorder %s270, 63
        %s272 = scalar_select %p271, %s270, 63
        %s273 = smul.addr %s272, 8
        %s274 = scalar_lea.vmem %s6, %s273
        %s275 = smul.u32 32, %s21
        %s276 = smul.u32 32, %s21
        %p277 = scmp.lt.s32.totalorder %s276, 63
        %s278 = scalar_select %p277, %s276, 63
        %s279 = smul.addr %s278, 8
        %s280 = scalar_lea.vmem %s5, %s279
        %s281 = smul.u32 32, %s21
        %s282 = smul.u32 32, %s21
        %p283 = scmp.lt.s32.totalorder %s282, 63
        %s284 = scalar_select %p283, %s282, 63
        %s285 = smul.addr %s284, 8
        %s286 = scalar_lea.vmem %s6, %s285
        %s287 = smul.u32 32, %s21
        %v288 = vld [vmem:[%s241] sm:$0xff]
        %v289 = vld [vmem:[%s241 + $0x8] sm:$0xff]
        %v290 = vld [vmem:[%s241 + $0x10] sm:$0xff]
        %v291 = vld [vmem:[%s241 + $0x18] sm:$0xff]
        %v292 = vld [vmem:[%s241 + $0x20] sm:$0xff]
        %v293 = vld [vmem:[%s241 + $0x28] sm:$0xff]
        %v294 = vld [vmem:[%s241 + $0x30] sm:$0xff]
        %v295 = vld [vmem:[%s241 + $0x38] sm:$0xff]
        %v296 = vld [vmem:[%s241 + $0x40] sm:$0xff]
        %v297 = vld [vmem:[%s241 + $0x48] sm:$0xff]
        %v298 = vld [vmem:[%s241 + $0x50] sm:$0xff]
        %v299 = vld [vmem:[%s241 + $0x58] sm:$0xff]
        %v300 = vld [vmem:[%s241 + $0x60] sm:$0xff]
        %v301 = vld [vmem:[%s241 + $0x68] sm:$0xff]
        %v302 = vld [vmem:[%s241 + $0x70] sm:$0xff]
        %v303 = vld [vmem:[%s241 + $0x78] sm:$0xff]
        %v304 = vld [vmem:[%s241 + $0x80] sm:$0xff]
        %v305 = vld [vmem:[%s241 + $0x88] sm:$0xff]
        %v306 = vld [vmem:[%s241 + $0x90] sm:$0xff]
        %v307 = vld [vmem:[%s241 + $0x98] sm:$0xff]
        %v308 = vld [vmem:[%s241 + $0xa0] sm:$0xff]
        %v309 = vld [vmem:[%s241 + $0xa8] sm:$0xff]
        %v310 = vld [vmem:[%s241 + $0xb0] sm:$0xff]
        %v311 = vld [vmem:[%s241 + $0xb8] sm:$0xff]
        %v312 = vld [vmem:[%s241 + $0xc0] sm:$0xff]
        %v313 = vld [vmem:[%s241 + $0xc8] sm:$0xff]
        %v314 = vld [vmem:[%s241 + $0xd0] sm:$0xff]
        %v315 = vld [vmem:[%s241 + $0xd8] sm:$0xff]
        %v316 = vld [vmem:[%s241 + $0xe0] sm:$0xff]
        %v317 = vld [vmem:[%s241 + $0xe8] sm:$0xff]
        %v318 = vld [vmem:[%s241 + $0xf0] sm:$0xff]
        %v319 = vld [vmem:[%s241 + $0xf8] sm:$0xff]
        %320 = vadd.xlane.f32.xlu0 %v288
        %v321 = vpop.xlane.xlu0 %320
        %322 = vadd.xlane.f32.xlu0 %v289
        %v323 = vpop.xlane.xlu0 %322
        %324 = vadd.xlane.f32.xlu0 %v290
        %v325 = vpop.xlane.xlu0 %324
        %326 = vadd.xlane.f32.xlu0 %v291
        %v327 = vpop.xlane.xlu0 %326
        %328 = vadd.xlane.f32.xlu0 %v292
        %v329 = vpop.xlane.xlu0 %328
        %330 = vadd.xlane.f32.xlu0 %v293
        %v331 = vpop.xlane.xlu0 %330
        %332 = vadd.xlane.f32.xlu0 %v294
        %v333 = vpop.xlane.xlu0 %332
        %334 = vadd.xlane.f32.xlu0 %v295
        %v335 = vpop.xlane.xlu0 %334
        %336 = vadd.xlane.f32.xlu0 %v296
        %v337 = vpop.xlane.xlu0 %336
        %338 = vadd.xlane.f32.xlu0 %v297
        %v339 = vpop.xlane.xlu0 %338
        %340 = vadd.xlane.f32.xlu0 %v298
        %v341 = vpop.xlane.xlu0 %340
        %342 = vadd.xlane.f32.xlu0 %v299
        %v343 = vpop.xlane.xlu0 %342
        %344 = vadd.xlane.f32.xlu0 %v300
        %v345 = vpop.xlane.xlu0 %344
        %346 = vadd.xlane.f32.xlu0 %v301
        %v347 = vpop.xlane.xlu0 %346
        %348 = vadd.xlane.f32.xlu0 %v302
        %v349 = vpop.xlane.xlu0 %348
        %350 = vadd.xlane.f32.xlu0 %v303
        %v351 = vpop.xlane.xlu0 %350
        %352 = vadd.xlane.f32.xlu0 %v304
        %v353 = vpop.xlane.xlu0 %352
        %354 = vadd.xlane.f32.xlu0 %v305
        %v355 = vpop.xlane.xlu0 %354
        %356 = vadd.xlane.f32.xlu0 %v306
        %v357 = vpop.xlane.xlu0 %356
        %358 = vadd.xlane.f32.xlu0 %v307
        %v359 = vpop.xlane.xlu0 %358
        %360 = vadd.xlane.f32.xlu0 %v308
        %v361 = vpop.xlane.xlu0 %360
        %362 = vadd.xlane.f32.xlu0 %v309
        %v363 = vpop.xlane.xlu0 %362
        %364 = vadd.xlane.f32.xlu0 %v310
        %v365 = vpop.xlane.xlu0 %364
        %366 = vadd.xlane.f32.xlu0 %v311
        %v367 = vpop.xlane.xlu0 %366
        %368 = vadd.xlane.f32.xlu0 %v312
        %v369 = vpop.xlane.xlu0 %368
        %370 = vadd.xlane.f32.xlu0 %v313
        %v371 = vpop.xlane.xlu0 %370
        %372 = vadd.xlane.f32.xlu0 %v314
        %v373 = vpop.xlane.xlu0 %372
        %374 = vadd.xlane.f32.xlu0 %v315
        %v375 = vpop.xlane.xlu0 %374
        %376 = vadd.xlane.f32.xlu0 %v316
        %v377 = vpop.xlane.xlu0 %376
        %378 = vadd.xlane.f32.xlu0 %v317
        %v379 = vpop.xlane.xlu0 %378
        %380 = vadd.xlane.f32.xlu0 %v318
        %v381 = vpop.xlane.xlu0 %380
        %382 = vadd.xlane.f32.xlu0 %v319
        %v383 = vpop.xlane.xlu0 %382
        %v384 = vrcp.pop 128.0
        %v385 = vmul.f32 %v321, %v384
        %v386 = vmul.f32 %v323, %v384
        %v387 = vmul.f32 %v325, %v384
        %v388 = vmul.f32 %v327, %v384
        %v389 = vmul.f32 %v329, %v384
        %v390 = vmul.f32 %v331, %v384
        %v391 = vmul.f32 %v333, %v384
        %v392 = vmul.f32 %v335, %v384
        %v393 = vmul.f32 %v337, %v384
        %v394 = vmul.f32 %v339, %v384
        %v395 = vmul.f32 %v341, %v384
        %v396 = vmul.f32 %v343, %v384
        %v397 = vmul.f32 %v345, %v384
        %v398 = vmul.f32 %v347, %v384
        %v399 = vmul.f32 %v349, %v384
        %v400 = vmul.f32 %v351, %v384
        %v401 = vmul.f32 %v353, %v384
        %v402 = vmul.f32 %v355, %v384
        %v403 = vmul.f32 %v357, %v384
        %v404 = vmul.f32 %v359, %v384
        %v405 = vmul.f32 %v361, %v384
        %v406 = vmul.f32 %v363, %v384
        %v407 = vmul.f32 %v365, %v384
        %v408 = vmul.f32 %v367, %v384
        %v409 = vmul.f32 %v369, %v384
        %v410 = vmul.f32 %v371, %v384
        %v411 = vmul.f32 %v373, %v384
        %v412 = vmul.f32 %v375, %v384
        %v413 = vmul.f32 %v377, %v384
        %v414 = vmul.f32 %v379, %v384
        %v415 = vmul.f32 %v381, %v384
        %v416 = vmul.f32 %v383, %v384
        %v417 = vsub.f32 %v288, %v385
        %v418 = vsub.f32 %v289, %v386
        %v419 = vsub.f32 %v290, %v387
        %v420 = vsub.f32 %v291, %v388
        %v421 = vsub.f32 %v292, %v389
        %v422 = vsub.f32 %v293, %v390
        %v423 = vsub.f32 %v294, %v391
        %v424 = vsub.f32 %v295, %v392
        %v425 = vsub.f32 %v296, %v393
        %v426 = vsub.f32 %v297, %v394
        %v427 = vsub.f32 %v298, %v395
        %v428 = vsub.f32 %v299, %v396
        %v429 = vsub.f32 %v300, %v397
        %v430 = vsub.f32 %v301, %v398
        %v431 = vsub.f32 %v302, %v399
        %v432 = vsub.f32 %v303, %v400
        %v433 = vsub.f32 %v304, %v401
        %v434 = vsub.f32 %v305, %v402
        %v435 = vsub.f32 %v306, %v403
        %v436 = vsub.f32 %v307, %v404
        %v437 = vsub.f32 %v308, %v405
        %v438 = vsub.f32 %v309, %v406
        %v439 = vsub.f32 %v310, %v407
        %v440 = vsub.f32 %v311, %v408
        %v441 = vsub.f32 %v312, %v409
        %v442 = vsub.f32 %v313, %v410
        %v443 = vsub.f32 %v314, %v411
        %v444 = vsub.f32 %v315, %v412
        %v445 = vsub.f32 %v316, %v413
        %v446 = vsub.f32 %v317, %v414
        %v447 = vsub.f32 %v318, %v415
        %v448 = vsub.f32 %v319, %v416
        %v449 = vmul.f32 %v417, %v417
        %v450 = vmul.f32 %v418, %v418
        %v451 = vmul.f32 %v419, %v419
        %v452 = vmul.f32 %v420, %v420
        %v453 = vmul.f32 %v421, %v421
        %v454 = vmul.f32 %v422, %v422
        %v455 = vmul.f32 %v423, %v423
        %v456 = vmul.f32 %v424, %v424
        %v457 = vmul.f32 %v425, %v425
        %v458 = vmul.f32 %v426, %v426
        %v459 = vmul.f32 %v427, %v427
        %v460 = vmul.f32 %v428, %v428
        %v461 = vmul.f32 %v429, %v429
        %v462 = vmul.f32 %v430, %v430
        %v463 = vmul.f32 %v431, %v431
        %v464 = vmul.f32 %v432, %v432
        %v465 = vmul.f32 %v433, %v433
        %v466 = vmul.f32 %v434, %v434
        %v467 = vmul.f32 %v435, %v435
        %v468 = vmul.f32 %v436, %v436
        %v469 = vmul.f32 %v437, %v437
        %v470 = vmul.f32 %v438, %v438
        %v471 = vmul.f32 %v439, %v439
        %v472 = vmul.f32 %v440, %v440
        %v473 = vmul.f32 %v441, %v441
        %v474 = vmul.f32 %v442, %v442
        %v475 = vmul.f32 %v443, %v443
        %v476 = vmul.f32 %v444, %v444
        %v477 = vmul.f32 %v445, %v445
        %v478 = vmul.f32 %v446, %v446
        %v479 = vmul.f32 %v447, %v447
        %v480 = vmul.f32 %v448, %v448
        %481 = vadd.xlane.f32.xlu0 %v449
        %v482 = vpop.xlane.xlu0 %481
        %483 = vadd.xlane.f32.xlu0 %v450
        %v484 = vpop.xlane.xlu0 %483
        %485 = vadd.xlane.f32.xlu0 %v451
        %v486 = vpop.xlane.xlu0 %485
        %487 = vadd.xlane.f32.xlu0 %v452
        %v488 = vpop.xlane.xlu0 %487
        %489 = vadd.xlane.f32.xlu0 %v453
        %v490 = vpop.xlane.xlu0 %489
        %491 = vadd.xlane.f32.xlu0 %v454
        %v492 = vpop.xlane.xlu0 %491
        %493 = vadd.xlane.f32.xlu0 %v455
        %v494 = vpop.xlane.xlu0 %493
        %495 = vadd.xlane.f32.xlu0 %v456
        %v496 = vpop.xlane.xlu0 %495
        %497 = vadd.xlane.f32.xlu0 %v457
        %v498 = vpop.xlane.xlu0 %497
        %499 = vadd.xlane.f32.xlu0 %v458
        %v500 = vpop.xlane.xlu0 %499
        %501 = vadd.xlane.f32.xlu0 %v459
        %v502 = vpop.xlane.xlu0 %501
        %503 = vadd.xlane.f32.xlu0 %v460
        %v504 = vpop.xlane.xlu0 %503
        %505 = vadd.xlane.f32.xlu0 %v461
        %v506 = vpop.xlane.xlu0 %505
        %507 = vadd.xlane.f32.xlu0 %v462
        %v508 = vpop.xlane.xlu0 %507
        %509 = vadd.xlane.f32.xlu0 %v463
        %v510 = vpop.xlane.xlu0 %509
        %511 = vadd.xlane.f32.xlu0 %v464
        %v512 = vpop.xlane.xlu0 %511
        %513 = vadd.xlane.f32.xlu0 %v465
        %v514 = vpop.xlane.xlu0 %513
        %515 = vadd.xlane.f32.xlu0 %v466
        %v516 = vpop.xlane.xlu0 %515
        %517 = vadd.xlane.f32.xlu0 %v467
        %v518 = vpop.xlane.xlu0 %517
        %519 = vadd.xlane.f32.xlu0 %v468
        %v520 = vpop.xlane.xlu0 %519
        %521 = vadd.xlane.f32.xlu0 %v469
        %v522 = vpop.xlane.xlu0 %521
        %523 = vadd.xlane.f32.xlu0 %v470
        %v524 = vpop.xlane.xlu0 %523
        %525 = vadd.xlane.f32.xlu0 %v471
        %v526 = vpop.xlane.xlu0 %525
        %527 = vadd.xlane.f32.xlu0 %v472
        %v528 = vpop.xlane.xlu0 %527
        %529 = vadd.xlane.f32.xlu0 %v473
        %v530 = vpop.xlane.xlu0 %529
        %531 = vadd.xlane.f32.xlu0 %v474
        %v532 = vpop.xlane.xlu0 %531
        %533 = vadd.xlane.f32.xlu0 %v475
        %v534 = vpop.xlane.xlu0 %533
        %535 = vadd.xlane.f32.xlu0 %v476
        %v536 = vpop.xlane.xlu0 %535
        %537 = vadd.xlane.f32.xlu0 %v477
        %v538 = vpop.xlane.xlu0 %537
        %539 = vadd.xlane.f32.xlu0 %v478
        %v540 = vpop.xlane.xlu0 %539
        %541 = vadd.xlane.f32.xlu0 %v479
        %v542 = vpop.xlane.xlu0 %541
        %543 = vadd.xlane.f32.xlu0 %v480
        %v544 = vpop.xlane.xlu0 %543
        %v545 = vmul.f32 %v482, %v384
        %v546 = vmul.f32 %v484, %v384
        %v547 = vmul.f32 %v486, %v384
        %v548 = vmul.f32 %v488, %v384
        %v549 = vmul.f32 %v490, %v384
        %v550 = vmul.f32 %v492, %v384
        %v551 = vmul.f32 %v494, %v384
        %v552 = vmul.f32 %v496, %v384
        %v553 = vmul.f32 %v498, %v384
        %v554 = vmul.f32 %v500, %v384
        %v555 = vmul.f32 %v502, %v384
        %v556 = vmul.f32 %v504, %v384
        %v557 = vmul.f32 %v506, %v384
        %v558 = vmul.f32 %v508, %v384
        %v559 = vmul.f32 %v510, %v384
        %v560 = vmul.f32 %v512, %v384
        %v561 = vmul.f32 %v514, %v384
        %v562 = vmul.f32 %v516, %v384
        %v563 = vmul.f32 %v518, %v384
        %v564 = vmul.f32 %v520, %v384
        %v565 = vmul.f32 %v522, %v384
        %v566 = vmul.f32 %v524, %v384
        %v567 = vmul.f32 %v526, %v384
        %v568 = vmul.f32 %v528, %v384
        %v569 = vmul.f32 %v530, %v384
        %v570 = vmul.f32 %v532, %v384
        %v571 = vmul.f32 %v534, %v384
        %v572 = vmul.f32 %v536, %v384
        %v573 = vmul.f32 %v538, %v384
        %v574 = vmul.f32 %v540, %v384
        %v575 = vmul.f32 %v542, %v384
        %v576 = vmul.f32 %v544, %v384
        %v577 = vadd.f32 %v545, 1e-05
        %v578 = vadd.f32 %v546, 1e-05
        %v579 = vadd.f32 %v547, 1e-05
        %v580 = vadd.f32 %v548, 1e-05
        %v581 = vadd.f32 %v549, 1e-05
        %v582 = vadd.f32 %v550, 1e-05
        %v583 = vadd.f32 %v551, 1e-05
        %v584 = vadd.f32 %v552, 1e-05
        %v585 = vadd.f32 %v553, 1e-05
        %v586 = vadd.f32 %v554, 1e-05
        %v587 = vadd.f32 %v555, 1e-05
        %v588 = vadd.f32 %v556, 1e-05
        %v589 = vadd.f32 %v557, 1e-05
        %v590 = vadd.f32 %v558, 1e-05
        %v591 = vadd.f32 %v559, 1e-05
        %v592 = vadd.f32 %v560, 1e-05
        %v593 = vadd.f32 %v561, 1e-05
        %v594 = vadd.f32 %v562, 1e-05
        %v595 = vadd.f32 %v563, 1e-05
        %v596 = vadd.f32 %v564, 1e-05
        %v597 = vadd.f32 %v565, 1e-05
        %v598 = vadd.f32 %v566, 1e-05
        %v599 = vadd.f32 %v567, 1e-05
        %v600 = vadd.f32 %v568, 1e-05
        %v601 = vadd.f32 %v569, 1e-05
        %v602 = vadd.f32 %v570, 1e-05
        %v603 = vadd.f32 %v571, 1e-05
        %v604 = vadd.f32 %v572, 1e-05
        %v605 = vadd.f32 %v573, 1e-05
        %v606 = vadd.f32 %v574, 1e-05
        %v607 = vadd.f32 %v575, 1e-05
        %v608 = vadd.f32 %v576, 1e-05
        %v609 = vrsqrt.pop %v577
        %v610 = vrsqrt.pop %v578
        %v611 = vrsqrt.pop %v579
        %v612 = vrsqrt.pop %v580
        %v613 = vrsqrt.pop %v581
        %v614 = vrsqrt.pop %v582
        %v615 = vrsqrt.pop %v583
        %v616 = vrsqrt.pop %v584
        %v617 = vrsqrt.pop %v585
        %v618 = vrsqrt.pop %v586
        %v619 = vrsqrt.pop %v587
        %v620 = vrsqrt.pop %v588
        %v621 = vrsqrt.pop %v589
        %v622 = vrsqrt.pop %v590
        %v623 = vrsqrt.pop %v591
        %v624 = vrsqrt.pop %v592
        %v625 = vrsqrt.pop %v593
        %v626 = vrsqrt.pop %v594
        %v627 = vrsqrt.pop %v595
        %v628 = vrsqrt.pop %v596
        %v629 = vrsqrt.pop %v597
        %v630 = vrsqrt.pop %v598
        %v631 = vrsqrt.pop %v599
        %v632 = vrsqrt.pop %v600
        %v633 = vrsqrt.pop %v601
        %v634 = vrsqrt.pop %v602
        %v635 = vrsqrt.pop %v603
        %v636 = vrsqrt.pop %v604
        %v637 = vrsqrt.pop %v605
        %v638 = vrsqrt.pop %v606
        %v639 = vrsqrt.pop %v607
        %v640 = vrsqrt.pop %v608
        %v641 = vmul.f32 %v417, %v609
        %v642 = vmul.f32 %v418, %v610
        %v643 = vmul.f32 %v419, %v611
        %v644 = vmul.f32 %v420, %v612
        %v645 = vmul.f32 %v421, %v613
        %v646 = vmul.f32 %v422, %v614
        %v647 = vmul.f32 %v423, %v615
        %v648 = vmul.f32 %v424, %v616
        %v649 = vmul.f32 %v425, %v617
        %v650 = vmul.f32 %v426, %v618
        %v651 = vmul.f32 %v427, %v619
        %v652 = vmul.f32 %v428, %v620
        %v653 = vmul.f32 %v429, %v621
        %v654 = vmul.f32 %v430, %v622
        %v655 = vmul.f32 %v431, %v623
        %v656 = vmul.f32 %v432, %v624
        %v657 = vmul.f32 %v433, %v625
        %v658 = vmul.f32 %v434, %v626
        %v659 = vmul.f32 %v435, %v627
        %v660 = vmul.f32 %v436, %v628
        %v661 = vmul.f32 %v437, %v629
        %v662 = vmul.f32 %v438, %v630
        %v663 = vmul.f32 %v439, %v631
        %v664 = vmul.f32 %v440, %v632
        %v665 = vmul.f32 %v441, %v633
        %v666 = vmul.f32 %v442, %v634
        %v667 = vmul.f32 %v443, %v635
        %v668 = vmul.f32 %v444, %v636
        %v669 = vmul.f32 %v445, %v637
        %v670 = vmul.f32 %v446, %v638
        %v671 = vmul.f32 %v447, %v639
        %v672 = vmul.f32 %v448, %v640
        %v673 = vld [vmem:[%s1] sm:$0x1]
        %v675 = vlaneseq
        %v676 = vshrl.u32 %v675, 7
        %v677 = vsub.s32 0, %v676
        %v678 = vrot.slane %v673, %v677
        %v680 = vmul.f32 %v641, %v678
        %v681 = vmul.f32 %v642, %v678
        %v682 = vmul.f32 %v643, %v678
        %v683 = vmul.f32 %v644, %v678
        %v684 = vmul.f32 %v645, %v678
        %v685 = vmul.f32 %v646, %v678
        %v686 = vmul.f32 %v647, %v678
        %v687 = vmul.f32 %v648, %v678
        %v688 = vmul.f32 %v649, %v678
        %v689 = vmul.f32 %v650, %v678
        %v690 = vmul.f32 %v651, %v678
        %v691 = vmul.f32 %v652, %v678
        %v692 = vmul.f32 %v653, %v678
        %v693 = vmul.f32 %v654, %v678
        %v694 = vmul.f32 %v655, %v678
        %v695 = vmul.f32 %v656, %v678
        %v696 = vmul.f32 %v657, %v678
        %v697 = vmul.f32 %v658, %v678
        %v698 = vmul.f32 %v659, %v678
        %v699 = vmul.f32 %v660, %v678
        %v700 = vmul.f32 %v661, %v678
        %v701 = vmul.f32 %v662, %v678
        %v702 = vmul.f32 %v663, %v678
        %v703 = vmul.f32 %v664, %v678
        %v704 = vmul.f32 %v665, %v678
        %v705 = vmul.f32 %v666, %v678
        %v706 = vmul.f32 %v667, %v678
        %v707 = vmul.f32 %v668, %v678
        %v708 = vmul.f32 %v669, %v678
        %v709 = vmul.f32 %v670, %v678
        %v710 = vmul.f32 %v671, %v678
        %v711 = vmul.f32 %v672, %v678
        %v712 = vld [vmem:[%s2] sm:$0x1]
        %v714 = vlaneseq
        %v715 = vshrl.u32 %v714, 7
        %v716 = vsub.s32 0, %v715
        %v717 = vrot.slane %v712, %v716
        %v719 = vadd.f32 %v680, %v717
        %v720 = vadd.f32 %v681, %v717
        %v721 = vadd.f32 %v682, %v717
        %v722 = vadd.f32 %v683, %v717
        %v723 = vadd.f32 %v684, %v717
        %v724 = vadd.f32 %v685, %v717
        %v725 = vadd.f32 %v686, %v717
        %v726 = vadd.f32 %v687, %v717
        %v727 = vadd.f32 %v688, %v717
        %v728 = vadd.f32 %v689, %v717
        %v729 = vadd.f32 %v690, %v717
        %v730 = vadd.f32 %v691, %v717
        %v731 = vadd.f32 %v692, %v717
        %v732 = vadd.f32 %v693, %v717
        %v733 = vadd.f32 %v694, %v717
        %v734 = vadd.f32 %v695, %v717
        %v735 = vadd.f32 %v696, %v717
        %v736 = vadd.f32 %v697, %v717
        %v737 = vadd.f32 %v698, %v717
        %v738 = vadd.f32 %v699, %v717
        %v739 = vadd.f32 %v700, %v717
        %v740 = vadd.f32 %v701, %v717
        %v741 = vadd.f32 %v702, %v717
        %v742 = vadd.f32 %v703, %v717
        %v743 = vadd.f32 %v704, %v717
        %v744 = vadd.f32 %v705, %v717
        %v745 = vadd.f32 %v706, %v717
        %v746 = vadd.f32 %v707, %v717
        %v747 = vadd.f32 %v708, %v717
        %v748 = vadd.f32 %v709, %v717
        %v749 = vadd.f32 %v710, %v717
        %v750 = vadd.f32 %v711, %v717
        %v751 = vld [vmem:[%s3] sm:$0xff]
        %v752 = vld [vmem:[%s3 + $0x8] sm:$0xff]
        %v753 = vld [vmem:[%s3 + $0x10] sm:$0xff]
        %v754 = vld [vmem:[%s3 + $0x18] sm:$0xff]
        %v755 = vld [vmem:[%s3 + $0x20] sm:$0xff]
        %v756 = vld [vmem:[%s3 + $0x28] sm:$0xff]
        %v757 = vld [vmem:[%s3 + $0x30] sm:$0xff]
        %v758 = vld [vmem:[%s3 + $0x38] sm:$0xff]
        %v759 = vld [vmem:[%s3 + $0x40] sm:$0xff]
        %v760 = vld [vmem:[%s3 + $0x48] sm:$0xff]
        %v761 = vld [vmem:[%s3 + $0x50] sm:$0xff]
        %v762 = vld [vmem:[%s3 + $0x58] sm:$0xff]
        %v763 = vld [vmem:[%s3 + $0x60] sm:$0xff]
        %v764 = vld [vmem:[%s3 + $0x68] sm:$0xff]
        %v765 = vld [vmem:[%s3 + $0x70] sm:$0xff]
        %v766 = vld [vmem:[%s3 + $0x78] sm:$0xff]
        %767 = vmatprep.subr.mxu0 0.0
        %v768 = vand.u32 %v751, 4294901760
        %769 = vmatpush1.msra.mxu0 %v768
        %770 = vmatprep.subr.mxu0 0.0
        %v771 = vand.u32 %v752, 4294901760
        %772 = vmatpush1.msra.mxu0 %v771
        %773 = vmatprep.subr.mxu0 0.0
        %v774 = vand.u32 %v753, 4294901760
        %775 = vmatpush1.msra.mxu0 %v774
        %776 = vmatprep.subr.mxu0 0.0
        %v777 = vand.u32 %v754, 4294901760
        %778 = vmatpush1.msra.mxu0 %v777
        %779 = vmatprep.subr.mxu0 0.0
        %v780 = vand.u32 %v755, 4294901760
        %781 = vmatpush1.msra.mxu0 %v780
        %782 = vmatprep.subr.mxu0 0.0
        %v783 = vand.u32 %v756, 4294901760
        %784 = vmatpush1.msra.mxu0 %v783
        %785 = vmatprep.subr.mxu0 0.0
        %v786 = vand.u32 %v757, 4294901760
        %787 = vmatpush1.msra.mxu0 %v786
        %788 = vmatprep.subr.mxu0 0.0
        %v789 = vand.u32 %v758, 4294901760
        %790 = vmatpush1.msra.mxu0 %v789
        %791 = vmatprep.subr.mxu0 0.0
        %v792 = vand.u32 %v759, 4294901760
        %793 = vmatpush1.msra.mxu0 %v792
        %794 = vmatprep.subr.mxu0 0.0
        %v795 = vand.u32 %v760, 4294901760
        %796 = vmatpush1.msra.mxu0 %v795
        %797 = vmatprep.subr.mxu0 0.0
        %v798 = vand.u32 %v761, 4294901760
        %799 = vmatpush1.msra.mxu0 %v798
        %800 = vmatprep.subr.mxu0 0.0
        %v801 = vand.u32 %v762, 4294901760
        %802 = vmatpush1.msra.mxu0 %v801
        %803 = vmatprep.subr.mxu0 0.0
        %v804 = vand.u32 %v763, 4294901760
        %805 = vmatpush1.msra.mxu0 %v804
        %806 = vmatprep.subr.mxu0 0.0
        %v807 = vand.u32 %v764, 4294901760
        %808 = vmatpush1.msra.mxu0 %v807
        %809 = vmatprep.subr.mxu0 0.0
        %v810 = vand.u32 %v765, 4294901760
        %811 = vmatpush1.msra.mxu0 %v810
        %812 = vmatprep.subr.mxu0 0.0
        %v813 = vand.u32 %v766, 4294901760
        %814 = vmatpush1.msra.mxu0 %v813
        %815 = vmatprep.subr.mxu0 0.0
        %816 = vmatpush1.msra.mxu0 0.0
        %817 = vmatprep.subr.mxu0 0.0
        %818 = vmatpush1.msra.mxu0 0.0
        %819 = vmatprep.subr.mxu0 0.0
        %820 = vmatpush1.msra.mxu0 0.0
        %821 = vmatprep.subr.mxu0 0.0
        %822 = vmatpush1.msra.mxu0 0.0
        %823 = vmatprep.subr.mxu0 0.0
        %824 = vmatpush1.msra.mxu0 0.0
        %825 = vmatprep.subr.mxu0 0.0
        %826 = vmatpush1.msra.mxu0 0.0
        %827 = vmatprep.subr.mxu0 0.0
        %828 = vmatpush1.msra.mxu0 0.0
        %829 = vmatprep.subr.mxu0 0.0
        %830 = vmatpush1.msra.mxu0 0.0
        %831 = vmatprep.subr.mxu0 0.0
        %832 = vmatpush1.msra.mxu0 0.0
        %833 = vmatprep.subr.mxu0 0.0
        %834 = vmatpush1.msra.mxu0 0.0
        %835 = vmatprep.subr.mxu0 0.0
        %836 = vmatpush1.msra.mxu0 0.0
        %837 = vmatprep.subr.mxu0 0.0
        %838 = vmatpush1.msra.mxu0 0.0
        %839 = vmatprep.subr.mxu0 0.0
        %840 = vmatpush1.msra.mxu0 0.0
        %841 = vmatprep.subr.mxu0 0.0
        %842 = vmatpush1.msra.mxu0 0.0
        %843 = vmatprep.subr.mxu0 0.0
        %844 = vmatpush1.msra.mxu0 0.0
        %845 = vmatprep.subr.mxu0 0.0
        %846 = vmatpush1.msra.mxu0 0.0
        %847 = vmatprep.mubr.f32.mxu0 0.0
        %v848 = vand.u32 %v719, 4294901760
        %v849 = vsub.f32 %v719, %v848
        %v850 = vand.u32 %v849, 4294901760
        %v851 = vsub.f32 %v849, %v850
        %v852 = vand.u32 %v851, 4294901760
        %853 = vmatmul.mubr.f32.gmra.mrb[0].mxu0 %v852
        %v854 = vpop.f32.mrb[0].mxu0
        %v855 = vadd.f32 0.0, %v854
        %v856 = vpop.f32.mrb[0].mxu0
        %857 = vmatprep.mubr.f32.mxu0 0.0
        %v858 = vand.u32 %v720, 4294901760
        %v859 = vsub.f32 %v720, %v858
        %v860 = vand.u32 %v859, 4294901760
        %v861 = vsub.f32 %v859, %v860
        %v862 = vand.u32 %v861, 4294901760
        %863 = vmatmul.mubr.f32.gmra.mrb[0].mxu0 %v862
        %v864 = vpop.f32.mrb[0].mxu0
        %v865 = vadd.f32 0.0, %v864
        %v866 = vpop.f32.mrb[0].mxu0
        %867 = vmatprep.mubr.f32.mxu0 0.0
        %v868 = vand.u32 %v721, 4294901760
        %v869 = vsub.f32 %v721, %v868
        %v870 = vand.u32 %v869, 4294901760
        %v871 = vsub.f32 %v869, %v870
        %v872 = vand.u32 %v871, 4294901760
        %873 = vmatmul.mubr.f32.gmra.mrb[0].mxu0 %v872
        %v874 = vpop.f32.mrb[0].mxu0
        %v875 = vadd.f32 0.0, %v874
        %v876 = vpop.f32.mrb[0].mxu0
        %877 = vmatprep.mubr.f32.mxu0 0.0
        %v878 = vand.u32 %v722, 4294901760
        %v879 = vsub.f32 %v722, %v878
        %v880 = vand.u32 %v879, 4294901760
        %v881 = vsub.f32 %v879, %v880
        %v882 = vand.u32 %v881, 4294901760
        %883 = vmatmul.mubr.f32.gmra.mrb[0].mxu0 %v882
        %v884 = vpop.f32.mrb[0].mxu0
        %v885 = vadd.f32 0.0, %v884
        %v886 = vpop.f32.mrb[0].mxu0
        %887 = vmatprep.mubr.f32.mxu0 0.0
        %v888 = vand.u32 %v723, 4294901760
        %v889 = vsub.f32 %v723, %v888
        %v890 = vand.u32 %v889, 4294901760
        %v891 = vsub.f32 %v889, %v890
        %v892 = vand.u32 %v891, 4294901760
        %893 = vmatmul.mubr.f32.gmra.mrb[0].mxu0 %v892
        %v894 = vpop.f32.mrb[0].mxu0
        %v895 = vadd.f32 0.0, %v894
        %v896 = vpop.f32.mrb[0].mxu0
        %897 = vmatprep.mubr.f32.mxu0 0.0
        %v898 = vand.u32 %v724, 4294901760
        %v899 = vsub.f32 %v724, %v898
        %v900 = vand.u32 %v899, 4294901760
        %v901 = vsub.f32 %v899, %v900
        %v902 = vand.u32 %v901, 4294901760
        %903 = vmatmul.mubr.f32.gmra.mrb[0].mxu0 %v902
        %v904 = vpop.f32.mrb[0].mxu0
        %v905 = vadd.f32 0.0, %v904
        %v906 = vpop.f32.mrb[0].mxu0
        %907 = vmatprep.mubr.f32.mxu0 0.0
        %v908 = vand.u32 %v725, 4294901760
        %v909 = vsub.f32 %v725, %v908
        %v910 = vand.u32 %v909, 4294901760
        %v911 = vsub.f32 %v909, %v910
        %v912 = vand.u32 %v911, 4294901760
        %913 = vmatmul.mubr.f32.gmra.mrb[0].mxu0 %v912
        %v914 = vpop.f32.mrb[0].mxu0
        %v915 = vadd.f32 0.0, %v914
        %v916 = vpop.f32.mrb[0].mxu0
        %917 = vmatprep.mubr.f32.mxu0 0.0
        %v918 = vand.u32 %v726, 4294901760
        %v919 = vsub.f32 %v726, %v918
        %v920 = vand.u32 %v919, 4294901760
        %v921 = vsub.f32 %v919, %v920
        %v922 = vand.u32 %v921, 4294901760
        %923 = vmatmul.mubr.f32.gmra.mrb[0].mxu0 %v922
        %v924 = vpop.f32.mrb[0].mxu0
        %v925 = vadd.f32 0.0, %v924
        %v926 = vpop.f32.mrb[0].mxu0
        %927 = vmatprep.mubr.f32.mxu0 0.0
        %v928 = vand.u32 %v727, 4294901760
        %v929 = vsub.f32 %v727, %v928
        %v930 = vand.u32 %v929, 4294901760
        %v931 = vsub.f32 %v929, %v930
        %v932 = vand.u32 %v931, 4294901760
        %933 = vmatmul.mubr.f32.gmra.mrb[0].mxu0 %v932
        %v934 = vpop.f32.mrb[0].mxu0
        %v935 = vadd.f32 0.0, %v934
        %v936 = vpop.f32.mrb[0].mxu0
        %937 = vmatprep.mubr.f32.mxu0 0.0
        %v938 = vand.u32 %v728, 4294901760
        %v939 = vsub.f32 %v728, %v938
        %v940 = vand.u32 %v939, 4294901760
        %v941 = vsub.f32 %v939, %v940
        %v942 = vand.u32 %v941, 4294901760
        %943 = vmatmul.mubr.f32.gmra.mrb[0].mxu0 %v942
        %v944 = vpop.f32.mrb[0].mxu0
        %v945 = vadd.f32 0.0, %v944
        %v946 = vpop.f32.mrb[0].mxu0
        %947 = vmatprep.mubr.f32.mxu0 0.0
        %v948 = vand.u32 %v729, 4294901760
        %v949 = vsub.f32 %v729, %v948
        %v950 = vand.u32 %v949, 4294901760
        %v951 = vsub.f32 %v949, %v950
        %v952 = vand.u32 %v951, 4294901760
        %953 = vmatmul.mubr.f32.gmra.mrb[0].mxu0 %v952
        %v954 = vpop.f32.mrb[0].mxu0
        %v955 = vadd.f32 0.0, %v954
        %v956 = vpop.f32.mrb[0].mxu0
        %957 = vmatprep.mubr.f32.mxu0 0.0
        %v958 = vand.u32 %v730, 4294901760
        %v959 = vsub.f32 %v730, %v958
        %v960 = vand.u32 %v959, 4294901760
        %v961 = vsub.f32 %v959, %v960
        %v962 = vand.u32 %v961, 4294901760
        %963 = vmatmul.mubr.f32.gmra.mrb[0].mxu0 %v962
        %v964 = vpop.f32.mrb[0].mxu0
        %v965 = vadd.f32 0.0, %v964
        %v966 = vpop.f32.mrb[0].mxu0
        %967 = vmatprep.mubr.f32.mxu0 0.0
        %v968 = vand.u32 %v731, 4294901760
        %v969 = vsub.f32 %v731, %v968
        %v970 = vand.u32 %v969, 4294901760
        %v971 = vsub.f32 %v969, %v970
        %v972 = vand.u32 %v971, 4294901760
        %973 = vmatmul.mubr.f32.gmra.mrb[0].mxu0 %v972
        %v974 = vpop.f32.mrb[0].mxu0
        %v975 = vadd.f32 0.0, %v974
        %v976 = vpop.f32.mrb[0].mxu0
        %977 = vmatprep.mubr.f32.mxu0 0.0
        %v978 = vand.u32 %v732, 4294901760
        %v979 = vsub.f32 %v732, %v978
        %v980 = vand.u32 %v979, 4294901760
        %v981 = vsub.f32 %v979, %v980
        %v982 = vand.u32 %v981, 4294901760
        %983 = vmatmul.mubr.f32.gmra.mrb[0].mxu0 %v982
        %v984 = vpop.f32.mrb[0].mxu0
        %v985 = vadd.f32 0.0, %v984
        %v986 = vpop.f32.mrb[0].mxu0
        %987 = vmatprep.mubr.f32.mxu0 0.0
        %v988 = vand.u32 %v733, 4294901760
        %v989 = vsub.f32 %v733, %v988
        %v990 = vand.u32 %v989, 4294901760
        %v991 = vsub.f32 %v989, %v990
        %v992 = vand.u32 %v991, 4294901760
        %993 = vmatmul.mubr.f32.gmra.mrb[0].mxu0 %v992
        %v994 = vpop.f32.mrb[0].mxu0
        %v995 = vadd.f32 0.0, %v994
        %v996 = vpop.f32.mrb[0].mxu0
        %997 = vmatprep.mubr.f32.mxu0 0.0
        %v998 = vand.u32 %v734, 4294901760
        %v999 = vsub.f32 %v734, %v998
        %v1000 = vand.u32 %v999, 4294901760
        %v1001 = vsub.f32 %v999, %v1000
        %v1002 = vand.u32 %v1001, 4294901760
        %1003 = vmatmul.mubr.f32.gmra.mrb[0].mxu0 %v1002
        %v1004 = vpop.f32.mrb[0].mxu0
        %v1005 = vadd.f32 0.0, %v1004
        %v1006 = vpop.f32.mrb[0].mxu0
        %1007 = vmatprep.mubr.f32.mxu0 0.0
        %v1008 = vand.u32 %v735, 4294901760
        %v1009 = vsub.f32 %v735, %v1008
        %v1010 = vand.u32 %v1009, 4294901760
        %v1011 = vsub.f32 %v1009, %v1010
        %v1012 = vand.u32 %v1011, 4294901760
        %1013 = vmatmul.mubr.f32.gmra.mrb[0].mxu0 %v1012
        %v1014 = vpop.f32.mrb[0].mxu0
        %v1015 = vadd.f32 0.0, %v1014
        %v1016 = vpop.f32.mrb[0].mxu0
        %1017 = vmatprep.mubr.f32.mxu0 0.0
        %v1018 = vand.u32 %v736, 4294901760
        %v1019 = vsub.f32 %v736, %v1018
        %v1020 = vand.u32 %v1019, 4294901760
        %v1021 = vsub.f32 %v1019, %v1020
        %v1022 = vand.u32 %v1021, 4294901760
        %1023 = vmatmul.mubr.f32.gmra.mrb[0].mxu0 %v1022
        %v1024 = vpop.f32.mrb[0].mxu0
        %v1025 = vadd.f32 0.0, %v1024
        %v1026 = vpop.f32.mrb[0].mxu0
        %1027 = vmatprep.mubr.f32.mxu0 0.0
        %v1028 = vand.u32 %v737, 4294901760
        %v1029 = vsub.f32 %v737, %v1028
        %v1030 = vand.u32 %v1029, 4294901760
        %v1031 = vsub.f32 %v1029, %v1030
        %v1032 = vand.u32 %v1031, 4294901760
        %1033 = vmatmul.mubr.f32.gmra.mrb[0].mxu0 %v1032
        %v1034 = vpop.f32.mrb[0].mxu0
        %v1035 = vadd.f32 0.0, %v1034
        %v1036 = vpop.f32.mrb[0].mxu0
        %1037 = vmatprep.mubr.f32.mxu0 0.0
        %v1038 = vand.u32 %v738, 4294901760
        %v1039 = vsub.f32 %v738, %v1038
        %v1040 = vand.u32 %v1039, 4294901760
        %v1041 = vsub.f32 %v1039, %v1040
        %v1042 = vand.u32 %v1041, 4294901760
        %1043 = vmatmul.mubr.f32.gmra.mrb[0].mxu0 %v1042
        %v1044 = vpop.f32.mrb[0].mxu0
        %v1045 = vadd.f32 0.0, %v1044
        %v1046 = vpop.f32.mrb[0].mxu0
        %1047 = vmatprep.mubr.f32.mxu0 0.0
        %v1048 = vand.u32 %v739, 4294901760
        %v1049 = vsub.f32 %v739, %v1048
        %v1050 = vand.u32 %v1049, 4294901760
        %v1051 = vsub.f32 %v1049, %v1050
        %v1052 = vand.u32 %v1051, 4294901760
        %1053 = vmatmul.mubr.f32.gmra.mrb[0].mxu0 %v1052
        %v1054 = vpop.f32.mrb[0].mxu0
        %v1055 = vadd.f32 0.0, %v1054
        %v1056 = vpop.f32.mrb[0].mxu0
        %1057 = vmatprep.mubr.f32.mxu0 0.0
        %v1058 = vand.u32 %v740, 4294901760
        %v1059 = vsub.f32 %v740, %v1058
        %v1060 = vand.u32 %v1059, 4294901760
        %v1061 = vsub.f32 %v1059, %v1060
        %v1062 = vand.u32 %v1061, 4294901760
        %1063 = vmatmul.mubr.f32.gmra.mrb[0].mxu0 %v1062
        %v1064 = vpop.f32.mrb[0].mxu0
        %v1065 = vadd.f32 0.0, %v1064
        %v1066 = vpop.f32.mrb[0].mxu0
        %1067 = vmatprep.mubr.f32.mxu0 0.0
        %v1068 = vand.u32 %v741, 4294901760
        %v1069 = vsub.f32 %v741, %v1068
        %v1070 = vand.u32 %v1069, 4294901760
        %v1071 = vsub.f32 %v1069, %v1070
        %v1072 = vand.u32 %v1071, 4294901760
        %1073 = vmatmul.mubr.f32.gmra.mrb[0].mxu0 %v1072
        %v1074 = vpop.f32.mrb[0].mxu0
        %v1075 = vadd.f32 0.0, %v1074
        %v1076 = vpop.f32.mrb[0].mxu0
        %1077 = vmatprep.mubr.f32.mxu0 0.0
        %v1078 = vand.u32 %v742, 4294901760
        %v1079 = vsub.f32 %v742, %v1078
        %v1080 = vand.u32 %v1079, 4294901760
        %v1081 = vsub.f32 %v1079, %v1080
        %v1082 = vand.u32 %v1081, 4294901760
        %1083 = vmatmul.mubr.f32.gmra.mrb[0].mxu0 %v1082
        %v1084 = vpop.f32.mrb[0].mxu0
        %v1085 = vadd.f32 0.0, %v1084
        %v1086 = vpop.f32.mrb[0].mxu0
        %1087 = vmatprep.mubr.f32.mxu0 0.0
        %v1088 = vand.u32 %v743, 4294901760
        %v1089 = vsub.f32 %v743, %v1088
        %v1090 = vand.u32 %v1089, 4294901760
        %v1091 = vsub.f32 %v1089, %v1090
        %v1092 = vand.u32 %v1091, 4294901760
        %1093 = vmatmul.mubr.f32.gmra.mrb[0].mxu0 %v1092
        %v1094 = vpop.f32.mrb[0].mxu0
        %v1095 = vadd.f32 0.0, %v1094
        %v1096 = vpop.f32.mrb[0].mxu0
        %1097 = vmatprep.mubr.f32.mxu0 0.0
        %v1098 = vand.u32 %v744, 4294901760
        %v1099 = vsub.f32 %v744, %v1098
        %v1100 = vand.u32 %v1099, 4294901760
        %v1101 = vsub.f32 %v1099, %v1100
        %v1102 = vand.u32 %v1101, 4294901760
        %1103 = vmatmul.mubr.f32.gmra.mrb[0].mxu0 %v1102
        %v1104 = vpop.f32.mrb[0].mxu0
        %v1105 = vadd.f32 0.0, %v1104
        %v1106 = vpop.f32.mrb[0].mxu0
        %1107 = vmatprep.mubr.f32.mxu0 0.0
        %v1108 = vand.u32 %v745, 4294901760
        %v1109 = vsub.f32 %v745, %v1108
        %v1110 = vand.u32 %v1109, 4294901760
        %v1111 = vsub.f32 %v1109, %v1110
        %v1112 = vand.u32 %v1111, 4294901760
        %1113 = vmatmul.mubr.f32.gmra.mrb[0].mxu0 %v1112
        %v1114 = vpop.f32.mrb[0].mxu0
        %v1115 = vadd.f32 0.0, %v1114
        %v1116 = vpop.f32.mrb[0].mxu0
        %1117 = vmatprep.mubr.f32.mxu0 0.0
        %v1118 = vand.u32 %v746, 4294901760
        %v1119 = vsub.f32 %v746, %v1118
        %v1120 = vand.u32 %v1119, 4294901760
        %v1121 = vsub.f32 %v1119, %v1120
        %v1122 = vand.u32 %v1121, 4294901760
        %1123 = vmatmul.mubr.f32.gmra.mrb[0].mxu0 %v1122
        %v1124 = vpop.f32.mrb[0].mxu0
        %v1125 = vadd.f32 0.0, %v1124
        %v1126 = vpop.f32.mrb[0].mxu0
        %1127 = vmatprep.mubr.f32.mxu0 0.0
        %v1128 = vand.u32 %v747, 4294901760
        %v1129 = vsub.f32 %v747, %v1128
        %v1130 = vand.u32 %v1129, 4294901760
        %v1131 = vsub.f32 %v1129, %v1130
        %v1132 = vand.u32 %v1131, 4294901760
        %1133 = vmatmul.mubr.f32.gmra.mrb[0].mxu0 %v1132
        %v1134 = vpop.f32.mrb[0].mxu0
        %v1135 = vadd.f32 0.0, %v1134
        %v1136 = vpop.f32.mrb[0].mxu0
        %1137 = vmatprep.mubr.f32.mxu0 0.0
        %v1138 = vand.u32 %v748, 4294901760
        %v1139 = vsub.f32 %v748, %v1138
        %v1140 = vand.u32 %v1139, 4294901760
        %v1141 = vsub.f32 %v1139, %v1140
        %v1142 = vand.u32 %v1141, 4294901760
        %1143 = vmatmul.mubr.f32.gmra.mrb[0].mxu0 %v1142
        %v1144 = vpop.f32.mrb[0].mxu0
        %v1145 = vadd.f32 0.0, %v1144
        %v1146 = vpop.f32.mrb[0].mxu0
        %1147 = vmatprep.mubr.f32.mxu0 0.0
        %v1148 = vand.u32 %v749, 4294901760
        %v1149 = vsub.f32 %v749, %v1148
        %v1150 = vand.u32 %v1149, 4294901760
        %v1151 = vsub.f32 %v1149, %v1150
        %v1152 = vand.u32 %v1151, 4294901760
        %1153 = vmatmul.mubr.f32.gmra.mrb[0].mxu0 %v1152
        %v1154 = vpop.f32.mrb[0].mxu0
        %v1155 = vadd.f32 0.0, %v1154
        %v1156 = vpop.f32.mrb[0].mxu0
        %1157 = vmatprep.mubr.f32.mxu0 0.0
        %v1158 = vand.u32 %v750, 4294901760
        %v1159 = vsub.f32 %v750, %v1158
        %v1160 = vand.u32 %v1159, 4294901760
        %v1161 = vsub.f32 %v1159, %v1160
        %v1162 = vand.u32 %v1161, 4294901760
        %1163 = vmatmul.mubr.f32.gmra.mrb[0].mxu0 %v1162
        %v1164 = vpop.f32.mrb[0].mxu0
        %v1165 = vadd.f32 0.0, %v1164
        %v1166 = vpop.f32.mrb[0].mxu0
        %1167 = vdwg.mxu0
        %1168 = vmatprep.subr.mxu0 0.0
        %v1169 = vand.u32 %v751, 4294901760
        %v1170 = vsub.f32 %v751, %v1169
        %v1171 = vand.u32 %v1170, 4294901760
        %v1172 = vsub.f32 %v1170, %v1171
        %v1173 = vand.u32 %v1172, 4294901760
        %1174 = vmatpush1.msra.mxu0 %v1173
        %1175 = vmatprep.subr.mxu0 0.0
        %v1176 = vand.u32 %v752, 4294901760
        %v1177 = vsub.f32 %v752, %v1176
        %v1178 = vand.u32 %v1177, 4294901760
        %v1179 = vsub.f32 %v1177, %v1178
        %v1180 = vand.u32 %v1179, 4294901760
        %1181 = vmatpush1.msra.mxu0 %v1180
        %1182 = vmatprep.subr.mxu0 0.0
        %v1183 = vand.u32 %v753, 4294901760
        %v1184 = vsub.f32 %v753, %v1183
        %v1185 = vand.u32 %v1184, 4294901760
        %v1186 = vsub.f32 %v1184, %v1185
        %v1187 = vand.u32 %v1186, 4294901760
        %1188 = vmatpush1.msra.mxu0 %v1187
        %1189 = vmatprep.subr.mxu0 0.0
        %v1190 = vand.u32 %v754, 4294901760
        %v1191 = vsub.f32 %v754, %v1190
        %v1192 = vand.u32 %v1191, 4294901760
        %v1193 = vsub.f32 %v1191, %v1192
        %v1194 = vand.u32 %v1193, 4294901760
        %1195 = vmatpush1.msra.mxu0 %v1194
        %1196 = vmatprep.subr.mxu0 0.0
        %v1197 = vand.u32 %v755, 4294901760
        %v1198 = vsub.f32 %v755, %v1197
        %v1199 = vand.u32 %v1198, 4294901760
        %v1200 = vsub.f32 %v1198, %v1199
        %v1201 = vand.u32 %v1200, 4294901760
        %1202 = vmatpush1.msra.mxu0 %v1201
        %1203 = vmatprep.subr.mxu0 0.0
        %v1204 = vand.u32 %v756, 4294901760
        %v1205 = vsub.f32 %v756, %v1204
        %v1206 = vand.u32 %v1205, 4294901760
        %v1207 = vsub.f32 %v1205, %v1206
        %v1208 = vand.u32 %v1207, 4294901760
        %1209 = vmatpush1.msra.mxu0 %v1208
        %1210 = vmatprep.subr.mxu0 0.0
        %v1211 = vand.u32 %v757, 4294901760
        %v1212 = vsub.f32 %v757, %v1211
        %v1213 = vand.u32 %v1212, 4294901760
        %v1214 = vsub.f32 %v1212, %v1213
        %v1215 = vand.u32 %v1214, 4294901760
        %1216 = vmatpush1.msra.mxu0 %v1215
        %1217 = vmatprep.subr.mxu0 0.0
        %v1218 = vand.u32 %v758, 4294901760
        %v1219 = vsub.f32 %v758, %v1218
        %v1220 = vand.u32 %v1219, 4294901760
        %v1221 = vsub.f32 %v1219, %v1220
        %v1222 = vand.u32 %v1221, 4294901760
        %1223 = vmatpush1.msra.mxu0 %v1222
        %1224 = vmatprep.subr.mxu0 0.0
        %v1225 = vand.u32 %v759, 4294901760
        %v1226 = vsub.f32 %v759, %v1225
        %v1227 = vand.u32 %v1226, 4294901760
        %v1228 = vsub.f32 %v1226, %v1227
        %v1229 = vand.u32 %v1228, 4294901760
        %1230 = vmatpush1.msra.mxu0 %v1229
        %1231 = vmatprep.subr.mxu0 0.0
        %v1232 = vand.u32 %v760, 4294901760
        %v1233 = vsub.f32 %v760, %v1232
        %v1234 = vand.u32 %v1233, 4294901760
        %v1235 = vsub.f32 %v1233, %v1234
        %v1236 = vand.u32 %v1235, 4294901760
        %1237 = vmatpush1.msra.mxu0 %v1236
        %1238 = vmatprep.subr.mxu0 0.0
        %v1239 = vand.u32 %v761, 4294901760
        %v1240 = vsub.f32 %v761, %v1239
        %v1241 = vand.u32 %v1240, 4294901760
        %v1242 = vsub.f32 %v1240, %v1241
        %v1243 = vand.u32 %v1242, 4294901760
        %1244 = vmatpush1.msra.mxu0 %v1243
        %1245 = vmatprep.subr.mxu0 0.0
        %v1246 = vand.u32 %v762, 4294901760
        %v1247 = vsub.f32 %v762, %v1246
        %v1248 = vand.u32 %v1247, 4294901760
        %v1249 = vsub.f32 %v1247, %v1248
        %v1250 = vand.u32 %v1249, 4294901760
        %1251 = vmatpush1.msra.mxu0 %v1250
        %1252 = vmatprep.subr.mxu0 0.0
        %v1253 = vand.u32 %v763, 4294901760
        %v1254 = vsub.f32 %v763, %v1253
        %v1255 = vand.u32 %v1254, 4294901760
        %v1256 = vsub.f32 %v1254, %v1255
        %v1257 = vand.u32 %v1256, 4294901760
        %1258 = vmatpush1.msra.mxu0 %v1257
        %1259 = vmatprep.subr.mxu0 0.0
        %v1260 = vand.u32 %v764, 4294901760
        %v1261 = vsub.f32 %v764, %v1260
        %v1262 = vand.u32 %v1261, 4294901760
        %v1263 = vsub.f32 %v1261, %v1262
        %v1264 = vand.u32 %v1263, 4294901760
        %1265 = vmatpush1.msra.mxu0 %v1264
        %1266 = vmatprep.subr.mxu0 0.0
        %v1267 = vand.u32 %v765, 4294901760
        %v1268 = vsub.f32 %v765, %v1267
        %v1269 = vand.u32 %v1268, 4294901760
        %v1270 = vsub.f32 %v1268, %v1269
        %v1271 = vand.u32 %v1270, 4294901760
        %1272 = vmatpush1.msra.mxu0 %v1271
        %1273 = vmatprep.subr.mxu0 0.0
        %v1274 = vand.u32 %v766, 4294901760
        %v1275 = vsub.f32 %v766, %v1274
        %v1276 = vand.u32 %v1275, 4294901760
        %v1277 = vsub.f32 %v1275, %v1276
        %v1278 = vand.u32 %v1277, 4294901760
        %1279 = vmatpush1.msra.mxu0 %v1278
        %1280 = vmatprep.subr.mxu0 0.0
        %1281 = vmatpush1.msra.mxu0 0.0
        %1282 = vmatprep.subr.mxu0 0.0
        %1283 = vmatpush1.msra.mxu0 0.0
        %1284 = vmatprep.subr.mxu0 0.0
        %1285 = vmatpush1.msra.mxu0 0.0
        %1286 = vmatprep.subr.mxu0 0.0
        %1287 = vmatpush1.msra.mxu0 0.0
        %1288 = vmatprep.subr.mxu0 0.0
        %1289 = vmatpush1.msra.mxu0 0.0
        %1290 = vmatprep.subr.mxu0 0.0
        %1291 = vmatpush1.msra.mxu0 0.0
        %1292 = vmatprep.subr.mxu0 0.0
        %1293 = vmatpush1.msra.mxu0 0.0
        %1294 = vmatprep.subr.mxu0 0.0
        %1295 = vmatpush1.msra.mxu0 0.0
        %1296 = vmatprep.subr.mxu0 0.0
        %1297 = vmatpush1.msra.mxu0 0.0
        %1298 = vmatprep.subr.mxu0 0.0
        %1299 = vmatpush1.msra.mxu0 0.0
        %1300 = vmatprep.subr.mxu0 0.0
        %1301 = vmatpush1.msra.mxu0 0.0
        %1302 = vmatprep.subr.mxu0 0.0
        %1303 = vmatpush1.msra.mxu0 0.0
        %1304 = vmatprep.subr.mxu0 0.0
        %1305 = vmatpush1.msra.mxu0 0.0
        %1306 = vmatprep.subr.mxu0 0.0
        %1307 = vmatpush1.msra.mxu0 0.0
        %1308 = vmatprep.subr.mxu0 0.0
        %1309 = vmatpush1.msra.mxu0 0.0
        %1310 = vmatprep.subr.mxu0 0.0
        %1311 = vmatpush1.msra.mxu0 0.0
        %1312 = vmatprep.mubr.f32.mxu0 0.0
        %v1313 = vand.u32 %v719, 4294901760
        %1314 = vmatmul.mubr.f32.gmra.mrb[0].mxu0 %v1313
        %v1315 = vpop.f32.mrb[0].mxu0
        %v1316 = vadd.f32 %v855, %v1315
        %v1317 = vpop.f32.mrb[0].mxu0
        %1318 = vmatprep.mubr.f32.mxu0 0.0
        %v1319 = vand.u32 %v720, 4294901760
        %1320 = vmatmul.mubr.f32.gmra.mrb[0].mxu0 %v1319
        %v1321 = vpop.f32.mrb[0].mxu0
        %v1322 = vadd.f32 %v865, %v1321
        %v1323 = vpop.f32.mrb[0].mxu0
        %1324 = vmatprep.mubr.f32.mxu0 0.0
        %v1325 = vand.u32 %v721, 4294901760
        %1326 = vmatmul.mubr.f32.gmra.mrb[0].mxu0 %v1325
        %v1327 = vpop.f32.mrb[0].mxu0
        %v1328 = vadd.f32 %v875, %v1327
        %v1329 = vpop.f32.mrb[0].mxu0
        %1330 = vmatprep.mubr.f32.mxu0 0.0
        %v1331 = vand.u32 %v722, 4294901760
        %1332 = vmatmul.mubr.f32.gmra.mrb[0].mxu0 %v1331
        %v1333 = vpop.f32.mrb[0].mxu0
        %v1334 = vadd.f32 %v885, %v1333
        %v1335 = vpop.f32.mrb[0].mxu0
        %1336 = vmatprep.mubr.f32.mxu0 0.0
        %v1337 = vand.u32 %v723, 4294901760
        %1338 = vmatmul.mubr.f32.gmra.mrb[0].mxu0 %v1337
        %v1339 = vpop.f32.mrb[0].mxu0
        %v1340 = vadd.f32 %v895, %v1339
        %v1341 = vpop.f32.mrb[0].mxu0
        %1342 = vmatprep.mubr.f32.mxu0 0.0
        %v1343 = vand.u32 %v724, 4294901760
        %1344 = vmatmul.mubr.f32.gmra.mrb[0].mxu0 %v1343
        %v1345 = vpop.f32.mrb[0].mxu0
        %v1346 = vadd.f32 %v905, %v1345
        %v1347 = vpop.f32.mrb[0].mxu0
        %1348 = vmatprep.mubr.f32.mxu0 0.0
        %v1349 = vand.u32 %v725, 4294901760
        %1350 = vmatmul.mubr.f32.gmra.mrb[0].mxu0 %v1349
        %v1351 = vpop.f32.mrb[0].mxu0
        %v1352 = vadd.f32 %v915, %v1351
        %v1353 = vpop.f32.mrb[0].mxu0
        %1354 = vmatprep.mubr.f32.mxu0 0.0
        %v1355 = vand.u32 %v726, 4294901760
        %1356 = vmatmul.mubr.f32.gmra.mrb[0].mxu0 %v1355
        %v1357 = vpop.f32.mrb[0].mxu0
        %v1358 = vadd.f32 %v925, %v1357
        %v1359 = vpop.f32.mrb[0].mxu0
        %1360 = vmatprep.mubr.f32.mxu0 0.0
        %v1361 = vand.u32 %v727, 4294901760
        %1362 = vmatmul.mubr.f32.gmra.mrb[0].mxu0 %v1361
        %v1363 = vpop.f32.mrb[0].mxu0
        %v1364 = vadd.f32 %v935, %v1363
        %v1365 = vpop.f32.mrb[0].mxu0
        %1366 = vmatprep.mubr.f32.mxu0 0.0
        %v1367 = vand.u32 %v728, 4294901760
        %1368 = vmatmul.mubr.f32.gmra.mrb[0].mxu0 %v1367
        %v1369 = vpop.f32.mrb[0].mxu0
        %v1370 = vadd.f32 %v945, %v1369
        %v1371 = vpop.f32.mrb[0].mxu0
        %1372 = vmatprep.mubr.f32.mxu0 0.0
        %v1373 = vand.u32 %v729, 4294901760
        %1374 = vmatmul.mubr.f32.gmra.mrb[0].mxu0 %v1373
        %v1375 = vpop.f32.mrb[0].mxu0
        %v1376 = vadd.f32 %v955, %v1375
        %v1377 = vpop.f32.mrb[0].mxu0
        %1378 = vmatprep.mubr.f32.mxu0 0.0
        %v1379 = vand.u32 %v730, 4294901760
        %1380 = vmatmul.mubr.f32.gmra.mrb[0].mxu0 %v1379
        %v1381 = vpop.f32.mrb[0].mxu0
        %v1382 = vadd.f32 %v965, %v1381
        %v1383 = vpop.f32.mrb[0].mxu0
        %1384 = vmatprep.mubr.f32.mxu0 0.0
        %v1385 = vand.u32 %v731, 4294901760
        %1386 = vmatmul.mubr.f32.gmra.mrb[0].mxu0 %v1385
        %v1387 = vpop.f32.mrb[0].mxu0
        %v1388 = vadd.f32 %v975, %v1387
        %v1389 = vpop.f32.mrb[0].mxu0
        %1390 = vmatprep.mubr.f32.mxu0 0.0
        %v1391 = vand.u32 %v732, 4294901760
        %1392 = vmatmul.mubr.f32.gmra.mrb[0].mxu0 %v1391
        %v1393 = vpop.f32.mrb[0].mxu0
        %v1394 = vadd.f32 %v985, %v1393
        %v1395 = vpop.f32.mrb[0].mxu0
        %1396 = vmatprep.mubr.f32.mxu0 0.0
        %v1397 = vand.u32 %v733, 4294901760
        %1398 = vmatmul.mubr.f32.gmra.mrb[0].mxu0 %v1397
        %v1399 = vpop.f32.mrb[0].mxu0
        %v1400 = vadd.f32 %v995, %v1399
        %v1401 = vpop.f32.mrb[0].mxu0
        %1402 = vmatprep.mubr.f32.mxu0 0.0
        %v1403 = vand.u32 %v734, 4294901760
        %1404 = vmatmul.mubr.f32.gmra.mrb[0].mxu0 %v1403
        %v1405 = vpop.f32.mrb[0].mxu0
        %v1406 = vadd.f32 %v1005, %v1405
        %v1407 = vpop.f32.mrb[0].mxu0
        %1408 = vmatprep.mubr.f32.mxu0 0.0
        %v1409 = vand.u32 %v735, 4294901760
        %1410 = vmatmul.mubr.f32.gmra.mrb[0].mxu0 %v1409
        %v1411 = vpop.f32.mrb[0].mxu0
        %v1412 = vadd.f32 %v1015, %v1411
        %v1413 = vpop.f32.mrb[0].mxu0
        %1414 = vmatprep.mubr.f32.mxu0 0.0
        %v1415 = vand.u32 %v736, 4294901760
        %1416 = vmatmul.mubr.f32.gmra.mrb[0].mxu0 %v1415
        %v1417 = vpop.f32.mrb[0].mxu0
        %v1418 = vadd.f32 %v1025, %v1417
        %v1419 = vpop.f32.mrb[0].mxu0
        %1420 = vmatprep.mubr.f32.mxu0 0.0
        %v1421 = vand.u32 %v737, 4294901760
        %1422 = vmatmul.mubr.f32.gmra.mrb[0].mxu0 %v1421
        %v1423 = vpop.f32.mrb[0].mxu0
        %v1424 = vadd.f32 %v1035, %v1423
        %v1425 = vpop.f32.mrb[0].mxu0
        %1426 = vmatprep.mubr.f32.mxu0 0.0
        %v1427 = vand.u32 %v738, 4294901760
        %1428 = vmatmul.mubr.f32.gmra.mrb[0].mxu0 %v1427
        %v1429 = vpop.f32.mrb[0].mxu0
        %v1430 = vadd.f32 %v1045, %v1429
        %v1431 = vpop.f32.mrb[0].mxu0
        %1432 = vmatprep.mubr.f32.mxu0 0.0
        %v1433 = vand.u32 %v739, 4294901760
        %1434 = vmatmul.mubr.f32.gmra.mrb[0].mxu0 %v1433
        %v1435 = vpop.f32.mrb[0].mxu0
        %v1436 = vadd.f32 %v1055, %v1435
        %v1437 = vpop.f32.mrb[0].mxu0
        %1438 = vmatprep.mubr.f32.mxu0 0.0
        %v1439 = vand.u32 %v740, 4294901760
        %1440 = vmatmul.mubr.f32.gmra.mrb[0].mxu0 %v1439
        %v1441 = vpop.f32.mrb[0].mxu0
        %v1442 = vadd.f32 %v1065, %v1441
        %v1443 = vpop.f32.mrb[0].mxu0
        %1444 = vmatprep.mubr.f32.mxu0 0.0
        %v1445 = vand.u32 %v741, 4294901760
        %1446 = vmatmul.mubr.f32.gmra.mrb[0].mxu0 %v1445
        %v1447 = vpop.f32.mrb[0].mxu0
        %v1448 = vadd.f32 %v1075, %v1447
        %v1449 = vpop.f32.mrb[0].mxu0
        %1450 = vmatprep.mubr.f32.mxu0 0.0
        %v1451 = vand.u32 %v742, 4294901760
        %1452 = vmatmul.mubr.f32.gmra.mrb[0].mxu0 %v1451
        %v1453 = vpop.f32.mrb[0].mxu0
        %v1454 = vadd.f32 %v1085, %v1453
        %v1455 = vpop.f32.mrb[0].mxu0
        %1456 = vmatprep.mubr.f32.mxu0 0.0
        %v1457 = vand.u32 %v743, 4294901760
        %1458 = vmatmul.mubr.f32.gmra.mrb[0].mxu0 %v1457
        %v1459 = vpop.f32.mrb[0].mxu0
        %v1460 = vadd.f32 %v1095, %v1459
        %v1461 = vpop.f32.mrb[0].mxu0
        %1462 = vmatprep.mubr.f32.mxu0 0.0
        %v1463 = vand.u32 %v744, 4294901760
        %1464 = vmatmul.mubr.f32.gmra.mrb[0].mxu0 %v1463
        %v1465 = vpop.f32.mrb[0].mxu0
        %v1466 = vadd.f32 %v1105, %v1465
        %v1467 = vpop.f32.mrb[0].mxu0
        %1468 = vmatprep.mubr.f32.mxu0 0.0
        %v1469 = vand.u32 %v745, 4294901760
        %1470 = vmatmul.mubr.f32.gmra.mrb[0].mxu0 %v1469
        %v1471 = vpop.f32.mrb[0].mxu0
        %v1472 = vadd.f32 %v1115, %v1471
        %v1473 = vpop.f32.mrb[0].mxu0
        %1474 = vmatprep.mubr.f32.mxu0 0.0
        %v1475 = vand.u32 %v746, 4294901760
        %1476 = vmatmul.mubr.f32.gmra.mrb[0].mxu0 %v1475
        %v1477 = vpop.f32.mrb[0].mxu0
        %v1478 = vadd.f32 %v1125, %v1477
        %v1479 = vpop.f32.mrb[0].mxu0
        %1480 = vmatprep.mubr.f32.mxu0 0.0
        %v1481 = vand.u32 %v747, 4294901760
        %1482 = vmatmul.mubr.f32.gmra.mrb[0].mxu0 %v1481
        %v1483 = vpop.f32.mrb[0].mxu0
        %v1484 = vadd.f32 %v1135, %v1483
        %v1485 = vpop.f32.mrb[0].mxu0
        %1486 = vmatprep.mubr.f32.mxu0 0.0
        %v1487 = vand.u32 %v748, 4294901760
        %1488 = vmatmul.mubr.f32.gmra.mrb[0].mxu0 %v1487
        %v1489 = vpop.f32.mrb[0].mxu0
        %v1490 = vadd.f32 %v1145, %v1489
        %v1491 = vpop.f32.mrb[0].mxu0
        %1492 = vmatprep.mubr.f32.mxu0 0.0
        %v1493 = vand.u32 %v749, 4294901760
        %1494 = vmatmul.mubr.f32.gmra.mrb[0].mxu0 %v1493
        %v1495 = vpop.f32.mrb[0].mxu0
        %v1496 = vadd.f32 %v1155, %v1495
        %v1497 = vpop.f32.mrb[0].mxu0
        %1498 = vmatprep.mubr.f32.mxu0 0.0
        %v1499 = vand.u32 %v750, 4294901760
        %1500 = vmatmul.mubr.f32.gmra.mrb[0].mxu0 %v1499
        %v1501 = vpop.f32.mrb[0].mxu0
        %v1502 = vadd.f32 %v1165, %v1501
        %v1503 = vpop.f32.mrb[0].mxu0
        %1504 = vdwg.mxu0
        %1505 = vmatprep.subr.mxu0 0.0
        %v1506 = vand.u32 %v751, 4294901760
        %v1507 = vsub.f32 %v751, %v1506
        %1508 = vmatpush1.msra.mxu0 %v1507
        %1509 = vmatprep.subr.mxu0 0.0
        %v1510 = vand.u32 %v752, 4294901760
        %v1511 = vsub.f32 %v752, %v1510
        %1512 = vmatpush1.msra.mxu0 %v1511
        %1513 = vmatprep.subr.mxu0 0.0
        %v1514 = vand.u32 %v753, 4294901760
        %v1515 = vsub.f32 %v753, %v1514
        %1516 = vmatpush1.msra.mxu0 %v1515
        %1517 = vmatprep.subr.mxu0 0.0
        %v1518 = vand.u32 %v754, 4294901760
        %v1519 = vsub.f32 %v754, %v1518
        %1520 = vmatpush1.msra.mxu0 %v1519
        %1521 = vmatprep.subr.mxu0 0.0
        %v1522 = vand.u32 %v755, 4294901760
        %v1523 = vsub.f32 %v755, %v1522
        %1524 = vmatpush1.msra.mxu0 %v1523
        %1525 = vmatprep.subr.mxu0 0.0
        %v1526 = vand.u32 %v756, 4294901760
        %v1527 = vsub.f32 %v756, %v1526
        %1528 = vmatpush1.msra.mxu0 %v1527
        %1529 = vmatprep.subr.mxu0 0.0
        %v1530 = vand.u32 %v757, 4294901760
        %v1531 = vsub.f32 %v757, %v1530
        %1532 = vmatpush1.msra.mxu0 %v1531
        %1533 = vmatprep.subr.mxu0 0.0
        %v1534 = vand.u32 %v758, 4294901760
        %v1535 = vsub.f32 %v758, %v1534
        %1536 = vmatpush1.msra.mxu0 %v1535
        %1537 = vmatprep.subr.mxu0 0.0
        %v1538 = vand.u32 %v759, 4294901760
        %v1539 = vsub.f32 %v759, %v1538
        %1540 = vmatpush1.msra.mxu0 %v1539
        %1541 = vmatprep.subr.mxu0 0.0
        %v1542 = vand.u32 %v760, 4294901760
        %v1543 = vsub.f32 %v760, %v1542
        %1544 = vmatpush1.msra.mxu0 %v1543
        %1545 = vmatprep.subr.mxu0 0.0
        %v1546 = vand.u32 %v761, 4294901760
        %v1547 = vsub.f32 %v761, %v1546
        %1548 = vmatpush1.msra.mxu0 %v1547
        %1549 = vmatprep.subr.mxu0 0.0
        %v1550 = vand.u32 %v762, 4294901760
        %v1551 = vsub.f32 %v762, %v1550
        %1552 = vmatpush1.msra.mxu0 %v1551
        %1553 = vmatprep.subr.mxu0 0.0
        %v1554 = vand.u32 %v763, 4294901760
        %v1555 = vsub.f32 %v763, %v1554
        %1556 = vmatpush1.msra.mxu0 %v1555
        %1557 = vmatprep.subr.mxu0 0.0
        %v1558 = vand.u32 %v764, 4294901760
        %v1559 = vsub.f32 %v764, %v1558
        %1560 = vmatpush1.msra.mxu0 %v1559
        %1561 = vmatprep.subr.mxu0 0.0
        %v1562 = vand.u32 %v765, 4294901760
        %v1563 = vsub.f32 %v765, %v1562
        %1564 = vmatpush1.msra.mxu0 %v1563
        %1565 = vmatprep.subr.mxu0 0.0
        %v1566 = vand.u32 %v766, 4294901760
        %v1567 = vsub.f32 %v766, %v1566
        %1568 = vmatpush1.msra.mxu0 %v1567
        %1569 = vmatprep.subr.mxu0 0.0
        %1570 = vmatpush1.msra.mxu0 0.0
        %1571 = vmatprep.subr.mxu0 0.0
        %1572 = vmatpush1.msra.mxu0 0.0
        %1573 = vmatprep.subr.mxu0 0.0
        %1574 = vmatpush1.msra.mxu0 0.0
        %1575 = vmatprep.subr.mxu0 0.0
        %1576 = vmatpush1.msra.mxu0 0.0
        %1577 = vmatprep.subr.mxu0 0.0
        %1578 = vmatpush1.msra.mxu0 0.0
        %1579 = vmatprep.subr.mxu0 0.0
        %1580 = vmatpush1.msra.mxu0 0.0
        %1581 = vmatprep.subr.mxu0 0.0
        %1582 = vmatpush1.msra.mxu0 0.0
        %1583 = vmatprep.subr.mxu0 0.0
        %1584 = vmatpush1.msra.mxu0 0.0
        %1585 = vmatprep.subr.mxu0 0.0
        %1586 = vmatpush1.msra.mxu0 0.0
        %1587 = vmatprep.subr.mxu0 0.0
        %1588 = vmatpush1.msra.mxu0 0.0
        %1589 = vmatprep.subr.mxu0 0.0
        %1590 = vmatpush1.msra.mxu0 0.0
        %1591 = vmatprep.subr.mxu0 0.0
        %1592 = vmatpush1.msra.mxu0 0.0
        %1593 = vmatprep.subr.mxu0 0.0
        %1594 = vmatpush1.msra.mxu0 0.0
        %1595 = vmatprep.subr.mxu0 0.0
        %1596 = vmatpush1.msra.mxu0 0.0
        %1597 = vmatprep.subr.mxu0 0.0
        %1598 = vmatpush1.msra.mxu0 0.0
        %1599 = vmatprep.subr.mxu0 0.0
        %1600 = vmatpush1.msra.mxu0 0.0
        %1601 = vmatprep.mubr.f32.mxu0 0.0
        %v1602 = vand.u32 %v719, 4294901760
        %v1603 = vsub.f32 %v719, %v1602
        %1604 = vmatmul.mubr.f32.gmra.mrb[0].mxu0 %v1603
        %v1605 = vpop.f32.mrb[0].mxu0
        %v1606 = vadd.f32 %v1316, %v1605
        %v1607 = vpop.f32.mrb[0].mxu0
        %1608 = vmatprep.mubr.f32.mxu0 0.0
        %v1609 = vand.u32 %v720, 4294901760
        %v1610 = vsub.f32 %v720, %v1609
        %1611 = vmatmul.mubr.f32.gmra.mrb[0].mxu0 %v1610
        %v1612 = vpop.f32.mrb[0].mxu0
        %v1613 = vadd.f32 %v1322, %v1612
        %v1614 = vpop.f32.mrb[0].mxu0
        %1615 = vmatprep.mubr.f32.mxu0 0.0
        %v1616 = vand.u32 %v721, 4294901760
        %v1617 = vsub.f32 %v721, %v1616
        %1618 = vmatmul.mubr.f32.gmra.mrb[0].mxu0 %v1617
        %v1619 = vpop.f32.mrb[0].mxu0
        %v1620 = vadd.f32 %v1328, %v1619
        %v1621 = vpop.f32.mrb[0].mxu0
        %1622 = vmatprep.mubr.f32.mxu0 0.0
        %v1623 = vand.u32 %v722, 4294901760
        %v1624 = vsub.f32 %v722, %v1623
        %1625 = vmatmul.mubr.f32.gmra.mrb[0].mxu0 %v1624
        %v1626 = vpop.f32.mrb[0].mxu0
        %v1627 = vadd.f32 %v1334, %v1626
        %v1628 = vpop.f32.mrb[0].mxu0
        %1629 = vmatprep.mubr.f32.mxu0 0.0
        %v1630 = vand.u32 %v723, 4294901760
        %v1631 = vsub.f32 %v723, %v1630
        %1632 = vmatmul.mubr.f32.gmra.mrb[0].mxu0 %v1631
        %v1633 = vpop.f32.mrb[0].mxu0
        %v1634 = vadd.f32 %v1340, %v1633
        %v1635 = vpop.f32.mrb[0].mxu0
        %1636 = vmatprep.mubr.f32.mxu0 0.0
        %v1637 = vand.u32 %v724, 4294901760
        %v1638 = vsub.f32 %v724, %v1637
        %1639 = vmatmul.mubr.f32.gmra.mrb[0].mxu0 %v1638
        %v1640 = vpop.f32.mrb[0].mxu0
        %v1641 = vadd.f32 %v1346, %v1640
        %v1642 = vpop.f32.mrb[0].mxu0
        %1643 = vmatprep.mubr.f32.mxu0 0.0
        %v1644 = vand.u32 %v725, 4294901760
        %v1645 = vsub.f32 %v725, %v1644
        %1646 = vmatmul.mubr.f32.gmra.mrb[0].mxu0 %v1645
        %v1647 = vpop.f32.mrb[0].mxu0
        %v1648 = vadd.f32 %v1352, %v1647
        %v1649 = vpop.f32.mrb[0].mxu0
        %1650 = vmatprep.mubr.f32.mxu0 0.0
        %v1651 = vand.u32 %v726, 4294901760
        %v1652 = vsub.f32 %v726, %v1651
        %1653 = vmatmul.mubr.f32.gmra.mrb[0].mxu0 %v1652
        %v1654 = vpop.f32.mrb[0].mxu0
        %v1655 = vadd.f32 %v1358, %v1654
        %v1656 = vpop.f32.mrb[0].mxu0
        %1657 = vmatprep.mubr.f32.mxu0 0.0
        %v1658 = vand.u32 %v727, 4294901760
        %v1659 = vsub.f32 %v727, %v1658
        %1660 = vmatmul.mubr.f32.gmra.mrb[0].mxu0 %v1659
        %v1661 = vpop.f32.mrb[0].mxu0
        %v1662 = vadd.f32 %v1364, %v1661
        %v1663 = vpop.f32.mrb[0].mxu0
        %1664 = vmatprep.mubr.f32.mxu0 0.0
        %v1665 = vand.u32 %v728, 4294901760
        %v1666 = vsub.f32 %v728, %v1665
        %1667 = vmatmul.mubr.f32.gmra.mrb[0].mxu0 %v1666
        %v1668 = vpop.f32.mrb[0].mxu0
        %v1669 = vadd.f32 %v1370, %v1668
        %v1670 = vpop.f32.mrb[0].mxu0
        %1671 = vmatprep.mubr.f32.mxu0 0.0
        %v1672 = vand.u32 %v729, 4294901760
        %v1673 = vsub.f32 %v729, %v1672
        %1674 = vmatmul.mubr.f32.gmra.mrb[0].mxu0 %v1673
        %v1675 = vpop.f32.mrb[0].mxu0
        %v1676 = vadd.f32 %v1376, %v1675
        %v1677 = vpop.f32.mrb[0].mxu0
        %1678 = vmatprep.mubr.f32.mxu0 0.0
        %v1679 = vand.u32 %v730, 4294901760
        %v1680 = vsub.f32 %v730, %v1679
        %1681 = vmatmul.mubr.f32.gmra.mrb[0].mxu0 %v1680
        %v1682 = vpop.f32.mrb[0].mxu0
        %v1683 = vadd.f32 %v1382, %v1682
        %v1684 = vpop.f32.mrb[0].mxu0
        %1685 = vmatprep.mubr.f32.mxu0 0.0
        %v1686 = vand.u32 %v731, 4294901760
        %v1687 = vsub.f32 %v731, %v1686
        %1688 = vmatmul.mubr.f32.gmra.mrb[0].mxu0 %v1687
        %v1689 = vpop.f32.mrb[0].mxu0
        %v1690 = vadd.f32 %v1388, %v1689
        %v1691 = vpop.f32.mrb[0].mxu0
        %1692 = vmatprep.mubr.f32.mxu0 0.0
        %v1693 = vand.u32 %v732, 4294901760
        %v1694 = vsub.f32 %v732, %v1693
        %1695 = vmatmul.mubr.f32.gmra.mrb[0].mxu0 %v1694
        %v1696 = vpop.f32.mrb[0].mxu0
        %v1697 = vadd.f32 %v1394, %v1696
        %v1698 = vpop.f32.mrb[0].mxu0
        %1699 = vmatprep.mubr.f32.mxu0 0.0
        %v1700 = vand.u32 %v733, 4294901760
        %v1701 = vsub.f32 %v733, %v1700
        %1702 = vmatmul.mubr.f32.gmra.mrb[0].mxu0 %v1701
        %v1703 = vpop.f32.mrb[0].mxu0
        %v1704 = vadd.f32 %v1400, %v1703
        %v1705 = vpop.f32.mrb[0].mxu0
        %1706 = vmatprep.mubr.f32.mxu0 0.0
        %v1707 = vand.u32 %v734, 4294901760
        %v1708 = vsub.f32 %v734, %v1707
        %1709 = vmatmul.mubr.f32.gmra.mrb[0].mxu0 %v1708
        %v1710 = vpop.f32.mrb[0].mxu0
        %v1711 = vadd.f32 %v1406, %v1710
        %v1712 = vpop.f32.mrb[0].mxu0
        %1713 = vmatprep.mubr.f32.mxu0 0.0
        %v1714 = vand.u32 %v735, 4294901760
        %v1715 = vsub.f32 %v735, %v1714
        %1716 = vmatmul.mubr.f32.gmra.mrb[0].mxu0 %v1715
        %v1717 = vpop.f32.mrb[0].mxu0
        %v1718 = vadd.f32 %v1412, %v1717
        %v1719 = vpop.f32.mrb[0].mxu0
        %1720 = vmatprep.mubr.f32.mxu0 0.0
        %v1721 = vand.u32 %v736, 4294901760
        %v1722 = vsub.f32 %v736, %v1721
        %1723 = vmatmul.mubr.f32.gmra.mrb[0].mxu0 %v1722
        %v1724 = vpop.f32.mrb[0].mxu0
        %v1725 = vadd.f32 %v1418, %v1724
        %v1726 = vpop.f32.mrb[0].mxu0
        %1727 = vmatprep.mubr.f32.mxu0 0.0
        %v1728 = vand.u32 %v737, 4294901760
        %v1729 = vsub.f32 %v737, %v1728
        %1730 = vmatmul.mubr.f32.gmra.mrb[0].mxu0 %v1729
        %v1731 = vpop.f32.mrb[0].mxu0
        %v1732 = vadd.f32 %v1424, %v1731
        %v1733 = vpop.f32.mrb[0].mxu0
        %1734 = vmatprep.mubr.f32.mxu0 0.0
        %v1735 = vand.u32 %v738, 4294901760
        %v1736 = vsub.f32 %v738, %v1735
        %1737 = vmatmul.mubr.f32.gmra.mrb[0].mxu0 %v1736
        %v1738 = vpop.f32.mrb[0].mxu0
        %v1739 = vadd.f32 %v1430, %v1738
        %v1740 = vpop.f32.mrb[0].mxu0
        %1741 = vmatprep.mubr.f32.mxu0 0.0
        %v1742 = vand.u32 %v739, 4294901760
        %v1743 = vsub.f32 %v739, %v1742
        %1744 = vmatmul.mubr.f32.gmra.mrb[0].mxu0 %v1743
        %v1745 = vpop.f32.mrb[0].mxu0
        %v1746 = vadd.f32 %v1436, %v1745
        %v1747 = vpop.f32.mrb[0].mxu0
        %1748 = vmatprep.mubr.f32.mxu0 0.0
        %v1749 = vand.u32 %v740, 4294901760
        %v1750 = vsub.f32 %v740, %v1749
        %1751 = vmatmul.mubr.f32.gmra.mrb[0].mxu0 %v1750
        %v1752 = vpop.f32.mrb[0].mxu0
        %v1753 = vadd.f32 %v1442, %v1752
        %v1754 = vpop.f32.mrb[0].mxu0
        %1755 = vmatprep.mubr.f32.mxu0 0.0
        %v1756 = vand.u32 %v741, 4294901760
        %v1757 = vsub.f32 %v741, %v1756
        %1758 = vmatmul.mubr.f32.gmra.mrb[0].mxu0 %v1757
        %v1759 = vpop.f32.mrb[0].mxu0
        %v1760 = vadd.f32 %v1448, %v1759
        %v1761 = vpop.f32.mrb[0].mxu0
        %1762 = vmatprep.mubr.f32.mxu0 0.0
        %v1763 = vand.u32 %v742, 4294901760
        %v1764 = vsub.f32 %v742, %v1763
        %1765 = vmatmul.mubr.f32.gmra.mrb[0].mxu0 %v1764
        %v1766 = vpop.f32.mrb[0].mxu0
        %v1767 = vadd.f32 %v1454, %v1766
        %v1768 = vpop.f32.mrb[0].mxu0
        %1769 = vmatprep.mubr.f32.mxu0 0.0
        %v1770 = vand.u32 %v743, 4294901760
        %v1771 = vsub.f32 %v743, %v1770
        %1772 = vmatmul.mubr.f32.gmra.mrb[0].mxu0 %v1771
        %v1773 = vpop.f32.mrb[0].mxu0
        %v1774 = vadd.f32 %v1460, %v1773
        %v1775 = vpop.f32.mrb[0].mxu0
        %1776 = vmatprep.mubr.f32.mxu0 0.0
        %v1777 = vand.u32 %v744, 4294901760
        %v1778 = vsub.f32 %v744, %v1777
        %1779 = vmatmul.mubr.f32.gmra.mrb[0].mxu0 %v1778
        %v1780 = vpop.f32.mrb[0].mxu0
        %v1781 = vadd.f32 %v1466, %v1780
        %v1782 = vpop.f32.mrb[0].mxu0
        %1783 = vmatprep.mubr.f32.mxu0 0.0
        %v1784 = vand.u32 %v745, 4294901760
        %v1785 = vsub.f32 %v745, %v1784
        %1786 = vmatmul.mubr.f32.gmra.mrb[0].mxu0 %v1785
        %v1787 = vpop.f32.mrb[0].mxu0
        %v1788 = vadd.f32 %v1472, %v1787
        %v1789 = vpop.f32.mrb[0].mxu0
        %1790 = vmatprep.mubr.f32.mxu0 0.0
        %v1791 = vand.u32 %v746, 4294901760
        %v1792 = vsub.f32 %v746, %v1791
        %1793 = vmatmul.mubr.f32.gmra.mrb[0].mxu0 %v1792
        %v1794 = vpop.f32.mrb[0].mxu0
        %v1795 = vadd.f32 %v1478, %v1794
        %v1796 = vpop.f32.mrb[0].mxu0
        %1797 = vmatprep.mubr.f32.mxu0 0.0
        %v1798 = vand.u32 %v747, 4294901760
        %v1799 = vsub.f32 %v747, %v1798
        %1800 = vmatmul.mubr.f32.gmra.mrb[0].mxu0 %v1799
        %v1801 = vpop.f32.mrb[0].mxu0
        %v1802 = vadd.f32 %v1484, %v1801
        %v1803 = vpop.f32.mrb[0].mxu0
        %1804 = vmatprep.mubr.f32.mxu0 0.0
        %v1805 = vand.u32 %v748, 4294901760
        %v1806 = vsub.f32 %v748, %v1805
        %1807 = vmatmul.mubr.f32.gmra.mrb[0].mxu0 %v1806
        %v1808 = vpop.f32.mrb[0].mxu0
        %v1809 = vadd.f32 %v1490, %v1808
        %v1810 = vpop.f32.mrb[0].mxu0
        %1811 = vmatprep.mubr.f32.mxu0 0.0
        %v1812 = vand.u32 %v749, 4294901760
        %v1813 = vsub.f32 %v749, %v1812
        %1814 = vmatmul.mubr.f32.gmra.mrb[0].mxu0 %v1813
        %v1815 = vpop.f32.mrb[0].mxu0
        %v1816 = vadd.f32 %v1496, %v1815
        %v1817 = vpop.f32.mrb[0].mxu0
        %1818 = vmatprep.mubr.f32.mxu0 0.0
        %v1819 = vand.u32 %v750, 4294901760
        %v1820 = vsub.f32 %v750, %v1819
        %1821 = vmatmul.mubr.f32.gmra.mrb[0].mxu0 %v1820
        %v1822 = vpop.f32.mrb[0].mxu0
        %v1823 = vadd.f32 %v1502, %v1822
        %v1824 = vpop.f32.mrb[0].mxu0
        %1825 = vdwg.mxu0
        %1826 = vmatprep.subr.mxu0 0.0
        %v1827 = vand.u32 %v751, 4294901760
        %1828 = vmatpush1.msra.mxu0 %v1827
        %1829 = vmatprep.subr.mxu0 0.0
        %v1830 = vand.u32 %v752, 4294901760
        %1831 = vmatpush1.msra.mxu0 %v1830
        %1832 = vmatprep.subr.mxu0 0.0
        %v1833 = vand.u32 %v753, 4294901760
        %1834 = vmatpush1.msra.mxu0 %v1833
        %1835 = vmatprep.subr.mxu0 0.0
        %v1836 = vand.u32 %v754, 4294901760
        %1837 = vmatpush1.msra.mxu0 %v1836
        %1838 = vmatprep.subr.mxu0 0.0
        %v1839 = vand.u32 %v755, 4294901760
        %1840 = vmatpush1.msra.mxu0 %v1839
        %1841 = vmatprep.subr.mxu0 0.0
        %v1842 = vand.u32 %v756, 4294901760
        %1843 = vmatpush1.msra.mxu0 %v1842
        %1844 = vmatprep.subr.mxu0 0.0
        %v1845 = vand.u32 %v757, 4294901760
        %1846 = vmatpush1.msra.mxu0 %v1845
        %1847 = vmatprep.subr.mxu0 0.0
        %v1848 = vand.u32 %v758, 4294901760
        %1849 = vmatpush1.msra.mxu0 %v1848
        %1850 = vmatprep.subr.mxu0 0.0
        %v1851 = vand.u32 %v759, 4294901760
        %1852 = vmatpush1.msra.mxu0 %v1851
        %1853 = vmatprep.subr.mxu0 0.0
        %v1854 = vand.u32 %v760, 4294901760
        %1855 = vmatpush1.msra.mxu0 %v1854
        %1856 = vmatprep.subr.mxu0 0.0
        %v1857 = vand.u32 %v761, 4294901760
        %1858 = vmatpush1.msra.mxu0 %v1857
        %1859 = vmatprep.subr.mxu0 0.0
        %v1860 = vand.u32 %v762, 4294901760
        %1861 = vmatpush1.msra.mxu0 %v1860
        %1862 = vmatprep.subr.mxu0 0.0
        %v1863 = vand.u32 %v763, 4294901760
        %1864 = vmatpush1.msra.mxu0 %v1863
        %1865 = vmatprep.subr.mxu0 0.0
        %v1866 = vand.u32 %v764, 4294901760
        %1867 = vmatpush1.msra.mxu0 %v1866
        %1868 = vmatprep.subr.mxu0 0.0
        %v1869 = vand.u32 %v765, 4294901760
        %1870 = vmatpush1.msra.mxu0 %v1869
        %1871 = vmatprep.subr.mxu0 0.0
        %v1872 = vand.u32 %v766, 4294901760
        %1873 = vmatpush1.msra.mxu0 %v1872
        %1874 = vmatprep.subr.mxu0 0.0
        %1875 = vmatpush1.msra.mxu0 0.0
        %1876 = vmatprep.subr.mxu0 0.0
        %1877 = vmatpush1.msra.mxu0 0.0
        %1878 = vmatprep.subr.mxu0 0.0
        %1879 = vmatpush1.msra.mxu0 0.0
        %1880 = vmatprep.subr.mxu0 0.0
        %1881 = vmatpush1.msra.mxu0 0.0
        %1882 = vmatprep.subr.mxu0 0.0
        %1883 = vmatpush1.msra.mxu0 0.0
        %1884 = vmatprep.subr.mxu0 0.0
        %1885 = vmatpush1.msra.mxu0 0.0
        %1886 = vmatprep.subr.mxu0 0.0
        %1887 = vmatpush1.msra.mxu0 0.0
        %1888 = vmatprep.subr.mxu0 0.0
        %1889 = vmatpush1.msra.mxu0 0.0
        %1890 = vmatprep.subr.mxu0 0.0
        %1891 = vmatpush1.msra.mxu0 0.0
        %1892 = vmatprep.subr.mxu0 0.0
        %1893 = vmatpush1.msra.mxu0 0.0
        %1894 = vmatprep.subr.mxu0 0.0
        %1895 = vmatpush1.msra.mxu0 0.0
        %1896 = vmatprep.subr.mxu0 0.0
        %1897 = vmatpush1.msra.mxu0 0.0
        %1898 = vmatprep.subr.mxu0 0.0
        %1899 = vmatpush1.msra.mxu0 0.0
        %1900 = vmatprep.subr.mxu0 0.0
        %1901 = vmatpush1.msra.mxu0 0.0
        %1902 = vmatprep.subr.mxu0 0.0
        %1903 = vmatpush1.msra.mxu0 0.0
        %1904 = vmatprep.subr.mxu0 0.0
        %1905 = vmatpush1.msra.mxu0 0.0
        %1906 = vmatprep.mubr.f32.mxu0 0.0
        %v1907 = vand.u32 %v719, 4294901760
        %v1908 = vsub.f32 %v719, %v1907
        %v1909 = vand.u32 %v1908, 4294901760
        %1910 = vmatmul.mubr.f32.gmra.mrb[0].mxu0 %v1909
        %v1911 = vpop.f32.mrb[0].mxu0
        %v1912 = vadd.f32 %v1606, %v1911
        %v1913 = vpop.f32.mrb[0].mxu0
        %1914 = vmatprep.mubr.f32.mxu0 0.0
        %v1915 = vand.u32 %v720, 4294901760
        %v1916 = vsub.f32 %v720, %v1915
        %v1917 = vand.u32 %v1916, 4294901760
        %1918 = vmatmul.mubr.f32.gmra.mrb[0].mxu0 %v1917
        %v1919 = vpop.f32.mrb[0].mxu0
        %v1920 = vadd.f32 %v1613, %v1919
        %v1921 = vpop.f32.mrb[0].mxu0
        %1922 = vmatprep.mubr.f32.mxu0 0.0
        %v1923 = vand.u32 %v721, 4294901760
        %v1924 = vsub.f32 %v721, %v1923
        %v1925 = vand.u32 %v1924, 4294901760
        %1926 = vmatmul.mubr.f32.gmra.mrb[0].mxu0 %v1925
        %v1927 = vpop.f32.mrb[0].mxu0
        %v1928 = vadd.f32 %v1620, %v1927
        %v1929 = vpop.f32.mrb[0].mxu0
        %1930 = vmatprep.mubr.f32.mxu0 0.0
        %v1931 = vand.u32 %v722, 4294901760
        %v1932 = vsub.f32 %v722, %v1931
        %v1933 = vand.u32 %v1932, 4294901760
        %1934 = vmatmul.mubr.f32.gmra.mrb[0].mxu0 %v1933
        %v1935 = vpop.f32.mrb[0].mxu0
        %v1936 = vadd.f32 %v1627, %v1935
        %v1937 = vpop.f32.mrb[0].mxu0
        %1938 = vmatprep.mubr.f32.mxu0 0.0
        %v1939 = vand.u32 %v723, 4294901760
        %v1940 = vsub.f32 %v723, %v1939
        %v1941 = vand.u32 %v1940, 4294901760
        %1942 = vmatmul.mubr.f32.gmra.mrb[0].mxu0 %v1941
        %v1943 = vpop.f32.mrb[0].mxu0
        %v1944 = vadd.f32 %v1634, %v1943
        %v1945 = vpop.f32.mrb[0].mxu0
        %1946 = vmatprep.mubr.f32.mxu0 0.0
        %v1947 = vand.u32 %v724, 4294901760
        %v1948 = vsub.f32 %v724, %v1947
        %v1949 = vand.u32 %v1948, 4294901760
        %1950 = vmatmul.mubr.f32.gmra.mrb[0].mxu0 %v1949
        %v1951 = vpop.f32.mrb[0].mxu0
        %v1952 = vadd.f32 %v1641, %v1951
        %v1953 = vpop.f32.mrb[0].mxu0
        %1954 = vmatprep.mubr.f32.mxu0 0.0
        %v1955 = vand.u32 %v725, 4294901760
        %v1956 = vsub.f32 %v725, %v1955
        %v1957 = vand.u32 %v1956, 4294901760
        %1958 = vmatmul.mubr.f32.gmra.mrb[0].mxu0 %v1957
        %v1959 = vpop.f32.mrb[0].mxu0
        %v1960 = vadd.f32 %v1648, %v1959
        %v1961 = vpop.f32.mrb[0].mxu0
        %1962 = vmatprep.mubr.f32.mxu0 0.0
        %v1963 = vand.u32 %v726, 4294901760
        %v1964 = vsub.f32 %v726, %v1963
        %v1965 = vand.u32 %v1964, 4294901760
        %1966 = vmatmul.mubr.f32.gmra.mrb[0].mxu0 %v1965
        %v1967 = vpop.f32.mrb[0].mxu0
        %v1968 = vadd.f32 %v1655, %v1967
        %v1969 = vpop.f32.mrb[0].mxu0
        %1970 = vmatprep.mubr.f32.mxu0 0.0
        %v1971 = vand.u32 %v727, 4294901760
        %v1972 = vsub.f32 %v727, %v1971
        %v1973 = vand.u32 %v1972, 4294901760
        %1974 = vmatmul.mubr.f32.gmra.mrb[0].mxu0 %v1973
        %v1975 = vpop.f32.mrb[0].mxu0
        %v1976 = vadd.f32 %v1662, %v1975
        %v1977 = vpop.f32.mrb[0].mxu0
        %1978 = vmatprep.mubr.f32.mxu0 0.0
        %v1979 = vand.u32 %v728, 4294901760
        %v1980 = vsub.f32 %v728, %v1979
        %v1981 = vand.u32 %v1980, 4294901760
        %1982 = vmatmul.mubr.f32.gmra.mrb[0].mxu0 %v1981
        %v1983 = vpop.f32.mrb[0].mxu0
        %v1984 = vadd.f32 %v1669, %v1983
        %v1985 = vpop.f32.mrb[0].mxu0
        %1986 = vmatprep.mubr.f32.mxu0 0.0
        %v1987 = vand.u32 %v729, 4294901760
        %v1988 = vsub.f32 %v729, %v1987
        %v1989 = vand.u32 %v1988, 4294901760
        %1990 = vmatmul.mubr.f32.gmra.mrb[0].mxu0 %v1989
        %v1991 = vpop.f32.mrb[0].mxu0
        %v1992 = vadd.f32 %v1676, %v1991
        %v1993 = vpop.f32.mrb[0].mxu0
        %1994 = vmatprep.mubr.f32.mxu0 0.0
        %v1995 = vand.u32 %v730, 4294901760
        %v1996 = vsub.f32 %v730, %v1995
        %v1997 = vand.u32 %v1996, 4294901760
        %1998 = vmatmul.mubr.f32.gmra.mrb[0].mxu0 %v1997
        %v1999 = vpop.f32.mrb[0].mxu0
        %v2000 = vadd.f32 %v1683, %v1999
        %v2001 = vpop.f32.mrb[0].mxu0
        %2002 = vmatprep.mubr.f32.mxu0 0.0
        %v2003 = vand.u32 %v731, 4294901760
        %v2004 = vsub.f32 %v731, %v2003
        %v2005 = vand.u32 %v2004, 4294901760
        %2006 = vmatmul.mubr.f32.gmra.mrb[0].mxu0 %v2005
        %v2007 = vpop.f32.mrb[0].mxu0
        %v2008 = vadd.f32 %v1690, %v2007
        %v2009 = vpop.f32.mrb[0].mxu0
        %2010 = vmatprep.mubr.f32.mxu0 0.0
        %v2011 = vand.u32 %v732, 4294901760
        %v2012 = vsub.f32 %v732, %v2011
        %v2013 = vand.u32 %v2012, 4294901760
        %2014 = vmatmul.mubr.f32.gmra.mrb[0].mxu0 %v2013
        %v2015 = vpop.f32.mrb[0].mxu0
        %v2016 = vadd.f32 %v1697, %v2015
        %v2017 = vpop.f32.mrb[0].mxu0
        %2018 = vmatprep.mubr.f32.mxu0 0.0
        %v2019 = vand.u32 %v733, 4294901760
        %v2020 = vsub.f32 %v733, %v2019
        %v2021 = vand.u32 %v2020, 4294901760
        %2022 = vmatmul.mubr.f32.gmra.mrb[0].mxu0 %v2021
        %v2023 = vpop.f32.mrb[0].mxu0
        %v2024 = vadd.f32 %v1704, %v2023
        %v2025 = vpop.f32.mrb[0].mxu0
        %2026 = vmatprep.mubr.f32.mxu0 0.0
        %v2027 = vand.u32 %v734, 4294901760
        %v2028 = vsub.f32 %v734, %v2027
        %v2029 = vand.u32 %v2028, 4294901760
        %2030 = vmatmul.mubr.f32.gmra.mrb[0].mxu0 %v2029
        %v2031 = vpop.f32.mrb[0].mxu0
        %v2032 = vadd.f32 %v1711, %v2031
        %v2033 = vpop.f32.mrb[0].mxu0
        %2034 = vmatprep.mubr.f32.mxu0 0.0
        %v2035 = vand.u32 %v735, 4294901760
        %v2036 = vsub.f32 %v735, %v2035
        %v2037 = vand.u32 %v2036, 4294901760
        %2038 = vmatmul.mubr.f32.gmra.mrb[0].mxu0 %v2037
        %v2039 = vpop.f32.mrb[0].mxu0
        %v2040 = vadd.f32 %v1718, %v2039
        %v2041 = vpop.f32.mrb[0].mxu0
        %2042 = vmatprep.mubr.f32.mxu0 0.0
        %v2043 = vand.u32 %v736, 4294901760
        %v2044 = vsub.f32 %v736, %v2043
        %v2045 = vand.u32 %v2044, 4294901760
        %2046 = vmatmul.mubr.f32.gmra.mrb[0].mxu0 %v2045
        %v2047 = vpop.f32.mrb[0].mxu0
        %v2048 = vadd.f32 %v1725, %v2047
        %v2049 = vpop.f32.mrb[0].mxu0
        %2050 = vmatprep.mubr.f32.mxu0 0.0
        %v2051 = vand.u32 %v737, 4294901760
        %v2052 = vsub.f32 %v737, %v2051
        %v2053 = vand.u32 %v2052, 4294901760
        %2054 = vmatmul.mubr.f32.gmra.mrb[0].mxu0 %v2053
        %v2055 = vpop.f32.mrb[0].mxu0
        %v2056 = vadd.f32 %v1732, %v2055
        %v2057 = vpop.f32.mrb[0].mxu0
        %2058 = vmatprep.mubr.f32.mxu0 0.0
        %v2059 = vand.u32 %v738, 4294901760
        %v2060 = vsub.f32 %v738, %v2059
        %v2061 = vand.u32 %v2060, 4294901760
        %2062 = vmatmul.mubr.f32.gmra.mrb[0].mxu0 %v2061
        %v2063 = vpop.f32.mrb[0].mxu0
        %v2064 = vadd.f32 %v1739, %v2063
        %v2065 = vpop.f32.mrb[0].mxu0
        %2066 = vmatprep.mubr.f32.mxu0 0.0
        %v2067 = vand.u32 %v739, 4294901760
        %v2068 = vsub.f32 %v739, %v2067
        %v2069 = vand.u32 %v2068, 4294901760
        %2070 = vmatmul.mubr.f32.gmra.mrb[0].mxu0 %v2069
        %v2071 = vpop.f32.mrb[0].mxu0
        %v2072 = vadd.f32 %v1746, %v2071
        %v2073 = vpop.f32.mrb[0].mxu0
        %2074 = vmatprep.mubr.f32.mxu0 0.0
        %v2075 = vand.u32 %v740, 4294901760
        %v2076 = vsub.f32 %v740, %v2075
        %v2077 = vand.u32 %v2076, 4294901760
        %2078 = vmatmul.mubr.f32.gmra.mrb[0].mxu0 %v2077
        %v2079 = vpop.f32.mrb[0].mxu0
        %v2080 = vadd.f32 %v1753, %v2079
        %v2081 = vpop.f32.mrb[0].mxu0
        %2082 = vmatprep.mubr.f32.mxu0 0.0
        %v2083 = vand.u32 %v741, 4294901760
        %v2084 = vsub.f32 %v741, %v2083
        %v2085 = vand.u32 %v2084, 4294901760
        %2086 = vmatmul.mubr.f32.gmra.mrb[0].mxu0 %v2085
        %v2087 = vpop.f32.mrb[0].mxu0
        %v2088 = vadd.f32 %v1760, %v2087
        %v2089 = vpop.f32.mrb[0].mxu0
        %2090 = vmatprep.mubr.f32.mxu0 0.0
        %v2091 = vand.u32 %v742, 4294901760
        %v2092 = vsub.f32 %v742, %v2091
        %v2093 = vand.u32 %v2092, 4294901760
        %2094 = vmatmul.mubr.f32.gmra.mrb[0].mxu0 %v2093
        %v2095 = vpop.f32.mrb[0].mxu0
        %v2096 = vadd.f32 %v1767, %v2095
        %v2097 = vpop.f32.mrb[0].mxu0
        %2098 = vmatprep.mubr.f32.mxu0 0.0
        %v2099 = vand.u32 %v743, 4294901760
        %v2100 = vsub.f32 %v743, %v2099
        %v2101 = vand.u32 %v2100, 4294901760
        %2102 = vmatmul.mubr.f32.gmra.mrb[0].mxu0 %v2101
        %v2103 = vpop.f32.mrb[0].mxu0
        %v2104 = vadd.f32 %v1774, %v2103
        %v2105 = vpop.f32.mrb[0].mxu0
        %2106 = vmatprep.mubr.f32.mxu0 0.0
        %v2107 = vand.u32 %v744, 4294901760
        %v2108 = vsub.f32 %v744, %v2107
        %v2109 = vand.u32 %v2108, 4294901760
        %2110 = vmatmul.mubr.f32.gmra.mrb[0].mxu0 %v2109
        %v2111 = vpop.f32.mrb[0].mxu0
        %v2112 = vadd.f32 %v1781, %v2111
        %v2113 = vpop.f32.mrb[0].mxu0
        %2114 = vmatprep.mubr.f32.mxu0 0.0
        %v2115 = vand.u32 %v745, 4294901760
        %v2116 = vsub.f32 %v745, %v2115
        %v2117 = vand.u32 %v2116, 4294901760
        %2118 = vmatmul.mubr.f32.gmra.mrb[0].mxu0 %v2117
        %v2119 = vpop.f32.mrb[0].mxu0
        %v2120 = vadd.f32 %v1788, %v2119
        %v2121 = vpop.f32.mrb[0].mxu0
        %2122 = vmatprep.mubr.f32.mxu0 0.0
        %v2123 = vand.u32 %v746, 4294901760
        %v2124 = vsub.f32 %v746, %v2123
        %v2125 = vand.u32 %v2124, 4294901760
        %2126 = vmatmul.mubr.f32.gmra.mrb[0].mxu0 %v2125
        %v2127 = vpop.f32.mrb[0].mxu0
        %v2128 = vadd.f32 %v1795, %v2127
        %v2129 = vpop.f32.mrb[0].mxu0
        %2130 = vmatprep.mubr.f32.mxu0 0.0
        %v2131 = vand.u32 %v747, 4294901760
        %v2132 = vsub.f32 %v747, %v2131
        %v2133 = vand.u32 %v2132, 4294901760
        %2134 = vmatmul.mubr.f32.gmra.mrb[0].mxu0 %v2133
        %v2135 = vpop.f32.mrb[0].mxu0
        %v2136 = vadd.f32 %v1802, %v2135
        %v2137 = vpop.f32.mrb[0].mxu0
        %2138 = vmatprep.mubr.f32.mxu0 0.0
        %v2139 = vand.u32 %v748, 4294901760
        %v2140 = vsub.f32 %v748, %v2139
        %v2141 = vand.u32 %v2140, 4294901760
        %2142 = vmatmul.mubr.f32.gmra.mrb[0].mxu0 %v2141
        %v2143 = vpop.f32.mrb[0].mxu0
        %v2144 = vadd.f32 %v1809, %v2143
        %v2145 = vpop.f32.mrb[0].mxu0
        %2146 = vmatprep.mubr.f32.mxu0 0.0
        %v2147 = vand.u32 %v749, 4294901760
        %v2148 = vsub.f32 %v749, %v2147
        %v2149 = vand.u32 %v2148, 4294901760
        %2150 = vmatmul.mubr.f32.gmra.mrb[0].mxu0 %v2149
        %v2151 = vpop.f32.mrb[0].mxu0
        %v2152 = vadd.f32 %v1816, %v2151
        %v2153 = vpop.f32.mrb[0].mxu0
        %2154 = vmatprep.mubr.f32.mxu0 0.0
        %v2155 = vand.u32 %v750, 4294901760
        %v2156 = vsub.f32 %v750, %v2155
        %v2157 = vand.u32 %v2156, 4294901760
        %2158 = vmatmul.mubr.f32.gmra.mrb[0].mxu0 %v2157
        %v2159 = vpop.f32.mrb[0].mxu0
        %v2160 = vadd.f32 %v1823, %v2159
        %v2161 = vpop.f32.mrb[0].mxu0
        %2162 = vdwg.mxu0
        %2163 = vmatprep.subr.mxu0 0.0
        %v2164 = vand.u32 %v751, 4294901760
        %v2165 = vsub.f32 %v751, %v2164
        %v2166 = vand.u32 %v2165, 4294901760
        %2167 = vmatpush1.msra.mxu0 %v2166
        %2168 = vmatprep.subr.mxu0 0.0
        %v2169 = vand.u32 %v752, 4294901760
        %v2170 = vsub.f32 %v752, %v2169
        %v2171 = vand.u32 %v2170, 4294901760
        %2172 = vmatpush1.msra.mxu0 %v2171
        %2173 = vmatprep.subr.mxu0 0.0
        %v2174 = vand.u32 %v753, 4294901760
        %v2175 = vsub.f32 %v753, %v2174
        %v2176 = vand.u32 %v2175, 4294901760
        %2177 = vmatpush1.msra.mxu0 %v2176
        %2178 = vmatprep.subr.mxu0 0.0
        %v2179 = vand.u32 %v754, 4294901760
        %v2180 = vsub.f32 %v754, %v2179
        %v2181 = vand.u32 %v2180, 4294901760
        %2182 = vmatpush1.msra.mxu0 %v2181
        %2183 = vmatprep.subr.mxu0 0.0
        %v2184 = vand.u32 %v755, 4294901760
        %v2185 = vsub.f32 %v755, %v2184
        %v2186 = vand.u32 %v2185, 4294901760
        %2187 = vmatpush1.msra.mxu0 %v2186
        %2188 = vmatprep.subr.mxu0 0.0
        %v2189 = vand.u32 %v756, 4294901760
        %v2190 = vsub.f32 %v756, %v2189
        %v2191 = vand.u32 %v2190, 4294901760
        %2192 = vmatpush1.msra.mxu0 %v2191
        %2193 = vmatprep.subr.mxu0 0.0
        %v2194 = vand.u32 %v757, 4294901760
        %v2195 = vsub.f32 %v757, %v2194
        %v2196 = vand.u32 %v2195, 4294901760
        %2197 = vmatpush1.msra.mxu0 %v2196
        %2198 = vmatprep.subr.mxu0 0.0
        %v2199 = vand.u32 %v758, 4294901760
        %v2200 = vsub.f32 %v758, %v2199
        %v2201 = vand.u32 %v2200, 4294901760
        %2202 = vmatpush1.msra.mxu0 %v2201
        %2203 = vmatprep.subr.mxu0 0.0
        %v2204 = vand.u32 %v759, 4294901760
        %v2205 = vsub.f32 %v759, %v2204
        %v2206 = vand.u32 %v2205, 4294901760
        %2207 = vmatpush1.msra.mxu0 %v2206
        %2208 = vmatprep.subr.mxu0 0.0
        %v2209 = vand.u32 %v760, 4294901760
        %v2210 = vsub.f32 %v760, %v2209
        %v2211 = vand.u32 %v2210, 4294901760
        %2212 = vmatpush1.msra.mxu0 %v2211
        %2213 = vmatprep.subr.mxu0 0.0
        %v2214 = vand.u32 %v761, 4294901760
        %v2215 = vsub.f32 %v761, %v2214
        %v2216 = vand.u32 %v2215, 4294901760
        %2217 = vmatpush1.msra.mxu0 %v2216
        %2218 = vmatprep.subr.mxu0 0.0
        %v2219 = vand.u32 %v762, 4294901760
        %v2220 = vsub.f32 %v762, %v2219
        %v2221 = vand.u32 %v2220, 4294901760
        %2222 = vmatpush1.msra.mxu0 %v2221
        %2223 = vmatprep.subr.mxu0 0.0
        %v2224 = vand.u32 %v763, 4294901760
        %v2225 = vsub.f32 %v763, %v2224
        %v2226 = vand.u32 %v2225, 4294901760
        %2227 = vmatpush1.msra.mxu0 %v2226
        %2228 = vmatprep.subr.mxu0 0.0
        %v2229 = vand.u32 %v764, 4294901760
        %v2230 = vsub.f32 %v764, %v2229
        %v2231 = vand.u32 %v2230, 4294901760
        %2232 = vmatpush1.msra.mxu0 %v2231
        %2233 = vmatprep.subr.mxu0 0.0
        %v2234 = vand.u32 %v765, 4294901760
        %v2235 = vsub.f32 %v765, %v2234
        %v2236 = vand.u32 %v2235, 4294901760
        %2237 = vmatpush1.msra.mxu0 %v2236
        %2238 = vmatprep.subr.mxu0 0.0
        %v2239 = vand.u32 %v766, 4294901760
        %v2240 = vsub.f32 %v766, %v2239
        %v2241 = vand.u32 %v2240, 4294901760
        %2242 = vmatpush1.msra.mxu0 %v2241
        %2243 = vmatprep.subr.mxu0 0.0
        %2244 = vmatpush1.msra.mxu0 0.0
        %2245 = vmatprep.subr.mxu0 0.0
        %2246 = vmatpush1.msra.mxu0 0.0
        %2247 = vmatprep.subr.mxu0 0.0
        %2248 = vmatpush1.msra.mxu0 0.0
        %2249 = vmatprep.subr.mxu0 0.0
        %2250 = vmatpush1.msra.mxu0 0.0
        %2251 = vmatprep.subr.mxu0 0.0
        %2252 = vmatpush1.msra.mxu0 0.0
        %2253 = vmatprep.subr.mxu0 0.0
        %2254 = vmatpush1.msra.mxu0 0.0
        %2255 = vmatprep.subr.mxu0 0.0
        %2256 = vmatpush1.msra.mxu0 0.0
        %2257 = vmatprep.subr.mxu0 0.0
        %2258 = vmatpush1.msra.mxu0 0.0
        %2259 = vmatprep.subr.mxu0 0.0
        %2260 = vmatpush1.msra.mxu0 0.0
        %2261 = vmatprep.subr.mxu0 0.0
        %2262 = vmatpush1.msra.mxu0 0.0
        %2263 = vmatprep.subr.mxu0 0.0
        %2264 = vmatpush1.msra.mxu0 0.0
        %2265 = vmatprep.subr.mxu0 0.0
        %2266 = vmatpush1.msra.mxu0 0.0
        %2267 = vmatprep.subr.mxu0 0.0
        %2268 = vmatpush1.msra.mxu0 0.0
        %2269 = vmatprep.subr.mxu0 0.0
        %2270 = vmatpush1.msra.mxu0 0.0
        %2271 = vmatprep.subr.mxu0 0.0
        %2272 = vmatpush1.msra.mxu0 0.0
        %2273 = vmatprep.subr.mxu0 0.0
        %2274 = vmatpush1.msra.mxu0 0.0
        %2275 = vmatprep.mubr.f32.mxu0 0.0
        %v2276 = vand.u32 %v719, 4294901760
        %2277 = vmatmul.mubr.f32.gmra.mrb[0].mxu0 %v2276
        %v2278 = vpop.f32.mrb[0].mxu0
        %v2279 = vadd.f32 %v1912, %v2278
        %v2280 = vpop.f32.mrb[0].mxu0
        %2281 = vmatprep.mubr.f32.mxu0 0.0
        %v2282 = vand.u32 %v720, 4294901760
        %2283 = vmatmul.mubr.f32.gmra.mrb[0].mxu0 %v2282
        %v2284 = vpop.f32.mrb[0].mxu0
        %v2285 = vadd.f32 %v1920, %v2284
        %v2286 = vpop.f32.mrb[0].mxu0
        %2287 = vmatprep.mubr.f32.mxu0 0.0
        %v2288 = vand.u32 %v721, 4294901760
        %2289 = vmatmul.mubr.f32.gmra.mrb[0].mxu0 %v2288
        %v2290 = vpop.f32.mrb[0].mxu0
        %v2291 = vadd.f32 %v1928, %v2290
        %v2292 = vpop.f32.mrb[0].mxu0
        %2293 = vmatprep.mubr.f32.mxu0 0.0
        %v2294 = vand.u32 %v722, 4294901760
        %2295 = vmatmul.mubr.f32.gmra.mrb[0].mxu0 %v2294
        %v2296 = vpop.f32.mrb[0].mxu0
        %v2297 = vadd.f32 %v1936, %v2296
        %v2298 = vpop.f32.mrb[0].mxu0
        %2299 = vmatprep.mubr.f32.mxu0 0.0
        %v2300 = vand.u32 %v723, 4294901760
        %2301 = vmatmul.mubr.f32.gmra.mrb[0].mxu0 %v2300
        %v2302 = vpop.f32.mrb[0].mxu0
        %v2303 = vadd.f32 %v1944, %v2302
        %v2304 = vpop.f32.mrb[0].mxu0
        %2305 = vmatprep.mubr.f32.mxu0 0.0
        %v2306 = vand.u32 %v724, 4294901760
        %2307 = vmatmul.mubr.f32.gmra.mrb[0].mxu0 %v2306
        %v2308 = vpop.f32.mrb[0].mxu0
        %v2309 = vadd.f32 %v1952, %v2308
        %v2310 = vpop.f32.mrb[0].mxu0
        %2311 = vmatprep.mubr.f32.mxu0 0.0
        %v2312 = vand.u32 %v725, 4294901760
        %2313 = vmatmul.mubr.f32.gmra.mrb[0].mxu0 %v2312
        %v2314 = vpop.f32.mrb[0].mxu0
        %v2315 = vadd.f32 %v1960, %v2314
        %v2316 = vpop.f32.mrb[0].mxu0
        %2317 = vmatprep.mubr.f32.mxu0 0.0
        %v2318 = vand.u32 %v726, 4294901760
        %2319 = vmatmul.mubr.f32.gmra.mrb[0].mxu0 %v2318
        %v2320 = vpop.f32.mrb[0].mxu0
        %v2321 = vadd.f32 %v1968, %v2320
        %v2322 = vpop.f32.mrb[0].mxu0
        %2323 = vmatprep.mubr.f32.mxu0 0.0
        %v2324 = vand.u32 %v727, 4294901760
        %2325 = vmatmul.mubr.f32.gmra.mrb[0].mxu0 %v2324
        %v2326 = vpop.f32.mrb[0].mxu0
        %v2327 = vadd.f32 %v1976, %v2326
        %v2328 = vpop.f32.mrb[0].mxu0
        %2329 = vmatprep.mubr.f32.mxu0 0.0
        %v2330 = vand.u32 %v728, 4294901760
        %2331 = vmatmul.mubr.f32.gmra.mrb[0].mxu0 %v2330
        %v2332 = vpop.f32.mrb[0].mxu0
        %v2333 = vadd.f32 %v1984, %v2332
        %v2334 = vpop.f32.mrb[0].mxu0
        %2335 = vmatprep.mubr.f32.mxu0 0.0
        %v2336 = vand.u32 %v729, 4294901760
        %2337 = vmatmul.mubr.f32.gmra.mrb[0].mxu0 %v2336
        %v2338 = vpop.f32.mrb[0].mxu0
        %v2339 = vadd.f32 %v1992, %v2338
        %v2340 = vpop.f32.mrb[0].mxu0
        %2341 = vmatprep.mubr.f32.mxu0 0.0
        %v2342 = vand.u32 %v730, 4294901760
        %2343 = vmatmul.mubr.f32.gmra.mrb[0].mxu0 %v2342
        %v2344 = vpop.f32.mrb[0].mxu0
        %v2345 = vadd.f32 %v2000, %v2344
        %v2346 = vpop.f32.mrb[0].mxu0
        %2347 = vmatprep.mubr.f32.mxu0 0.0
        %v2348 = vand.u32 %v731, 4294901760
        %2349 = vmatmul.mubr.f32.gmra.mrb[0].mxu0 %v2348
        %v2350 = vpop.f32.mrb[0].mxu0
        %v2351 = vadd.f32 %v2008, %v2350
        %v2352 = vpop.f32.mrb[0].mxu0
        %2353 = vmatprep.mubr.f32.mxu0 0.0
        %v2354 = vand.u32 %v732, 4294901760
        %2355 = vmatmul.mubr.f32.gmra.mrb[0].mxu0 %v2354
        %v2356 = vpop.f32.mrb[0].mxu0
        %v2357 = vadd.f32 %v2016, %v2356
        %v2358 = vpop.f32.mrb[0].mxu0
        %2359 = vmatprep.mubr.f32.mxu0 0.0
        %v2360 = vand.u32 %v733, 4294901760
        %2361 = vmatmul.mubr.f32.gmra.mrb[0].mxu0 %v2360
        %v2362 = vpop.f32.mrb[0].mxu0
        %v2363 = vadd.f32 %v2024, %v2362
        %v2364 = vpop.f32.mrb[0].mxu0
        %2365 = vmatprep.mubr.f32.mxu0 0.0
        %v2366 = vand.u32 %v734, 4294901760
        %2367 = vmatmul.mubr.f32.gmra.mrb[0].mxu0 %v2366
        %v2368 = vpop.f32.mrb[0].mxu0
        %v2369 = vadd.f32 %v2032, %v2368
        %v2370 = vpop.f32.mrb[0].mxu0
        %2371 = vmatprep.mubr.f32.mxu0 0.0
        %v2372 = vand.u32 %v735, 4294901760
        %2373 = vmatmul.mubr.f32.gmra.mrb[0].mxu0 %v2372
        %v2374 = vpop.f32.mrb[0].mxu0
        %v2375 = vadd.f32 %v2040, %v2374
        %v2376 = vpop.f32.mrb[0].mxu0
        %2377 = vmatprep.mubr.f32.mxu0 0.0
        %v2378 = vand.u32 %v736, 4294901760
        %2379 = vmatmul.mubr.f32.gmra.mrb[0].mxu0 %v2378
        %v2380 = vpop.f32.mrb[0].mxu0
        %v2381 = vadd.f32 %v2048, %v2380
        %v2382 = vpop.f32.mrb[0].mxu0
        %2383 = vmatprep.mubr.f32.mxu0 0.0
        %v2384 = vand.u32 %v737, 4294901760
        %2385 = vmatmul.mubr.f32.gmra.mrb[0].mxu0 %v2384
        %v2386 = vpop.f32.mrb[0].mxu0
        %v2387 = vadd.f32 %v2056, %v2386
        %v2388 = vpop.f32.mrb[0].mxu0
        %2389 = vmatprep.mubr.f32.mxu0 0.0
        %v2390 = vand.u32 %v738, 4294901760
        %2391 = vmatmul.mubr.f32.gmra.mrb[0].mxu0 %v2390
        %v2392 = vpop.f32.mrb[0].mxu0
        %v2393 = vadd.f32 %v2064, %v2392
        %v2394 = vpop.f32.mrb[0].mxu0
        %2395 = vmatprep.mubr.f32.mxu0 0.0
        %v2396 = vand.u32 %v739, 4294901760
        %2397 = vmatmul.mubr.f32.gmra.mrb[0].mxu0 %v2396
        %v2398 = vpop.f32.mrb[0].mxu0
        %v2399 = vadd.f32 %v2072, %v2398
        %v2400 = vpop.f32.mrb[0].mxu0
        %2401 = vmatprep.mubr.f32.mxu0 0.0
        %v2402 = vand.u32 %v740, 4294901760
        %2403 = vmatmul.mubr.f32.gmra.mrb[0].mxu0 %v2402
        %v2404 = vpop.f32.mrb[0].mxu0
        %v2405 = vadd.f32 %v2080, %v2404
        %v2406 = vpop.f32.mrb[0].mxu0
        %2407 = vmatprep.mubr.f32.mxu0 0.0
        %v2408 = vand.u32 %v741, 4294901760
        %2409 = vmatmul.mubr.f32.gmra.mrb[0].mxu0 %v2408
        %v2410 = vpop.f32.mrb[0].mxu0
        %v2411 = vadd.f32 %v2088, %v2410
        %v2412 = vpop.f32.mrb[0].mxu0
        %2413 = vmatprep.mubr.f32.mxu0 0.0
        %v2414 = vand.u32 %v742, 4294901760
        %2415 = vmatmul.mubr.f32.gmra.mrb[0].mxu0 %v2414
        %v2416 = vpop.f32.mrb[0].mxu0
        %v2417 = vadd.f32 %v2096, %v2416
        %v2418 = vpop.f32.mrb[0].mxu0
        %2419 = vmatprep.mubr.f32.mxu0 0.0
        %v2420 = vand.u32 %v743, 4294901760
        %2421 = vmatmul.mubr.f32.gmra.mrb[0].mxu0 %v2420
        %v2422 = vpop.f32.mrb[0].mxu0
        %v2423 = vadd.f32 %v2104, %v2422
        %v2424 = vpop.f32.mrb[0].mxu0
        %2425 = vmatprep.mubr.f32.mxu0 0.0
        %v2426 = vand.u32 %v744, 4294901760
        %2427 = vmatmul.mubr.f32.gmra.mrb[0].mxu0 %v2426
        %v2428 = vpop.f32.mrb[0].mxu0
        %v2429 = vadd.f32 %v2112, %v2428
        %v2430 = vpop.f32.mrb[0].mxu0
        %2431 = vmatprep.mubr.f32.mxu0 0.0
        %v2432 = vand.u32 %v745, 4294901760
        %2433 = vmatmul.mubr.f32.gmra.mrb[0].mxu0 %v2432
        %v2434 = vpop.f32.mrb[0].mxu0
        %v2435 = vadd.f32 %v2120, %v2434
        %v2436 = vpop.f32.mrb[0].mxu0
        %2437 = vmatprep.mubr.f32.mxu0 0.0
        %v2438 = vand.u32 %v746, 4294901760
        %2439 = vmatmul.mubr.f32.gmra.mrb[0].mxu0 %v2438
        %v2440 = vpop.f32.mrb[0].mxu0
        %v2441 = vadd.f32 %v2128, %v2440
        %v2442 = vpop.f32.mrb[0].mxu0
        %2443 = vmatprep.mubr.f32.mxu0 0.0
        %v2444 = vand.u32 %v747, 4294901760
        %2445 = vmatmul.mubr.f32.gmra.mrb[0].mxu0 %v2444
        %v2446 = vpop.f32.mrb[0].mxu0
        %v2447 = vadd.f32 %v2136, %v2446
        %v2448 = vpop.f32.mrb[0].mxu0
        %2449 = vmatprep.mubr.f32.mxu0 0.0
        %v2450 = vand.u32 %v748, 4294901760
        %2451 = vmatmul.mubr.f32.gmra.mrb[0].mxu0 %v2450
        %v2452 = vpop.f32.mrb[0].mxu0
        %v2453 = vadd.f32 %v2144, %v2452
        %v2454 = vpop.f32.mrb[0].mxu0
        %2455 = vmatprep.mubr.f32.mxu0 0.0
        %v2456 = vand.u32 %v749, 4294901760
        %2457 = vmatmul.mubr.f32.gmra.mrb[0].mxu0 %v2456
        %v2458 = vpop.f32.mrb[0].mxu0
        %v2459 = vadd.f32 %v2152, %v2458
        %v2460 = vpop.f32.mrb[0].mxu0
        %2461 = vmatprep.mubr.f32.mxu0 0.0
        %v2462 = vand.u32 %v750, 4294901760
        %2463 = vmatmul.mubr.f32.gmra.mrb[0].mxu0 %v2462
        %v2464 = vpop.f32.mrb[0].mxu0
        %v2465 = vadd.f32 %v2160, %v2464
        %v2466 = vpop.f32.mrb[0].mxu0
        %2467 = vdwg.mxu0
        %2468 = vmatprep.subr.mxu0 0.0
        %v2469 = vand.u32 %v751, 4294901760
        %2470 = vmatpush1.msra.mxu0 %v2469
        %2471 = vmatprep.subr.mxu0 0.0
        %v2472 = vand.u32 %v752, 4294901760
        %2473 = vmatpush1.msra.mxu0 %v2472
        %2474 = vmatprep.subr.mxu0 0.0
        %v2475 = vand.u32 %v753, 4294901760
        %2476 = vmatpush1.msra.mxu0 %v2475
        %2477 = vmatprep.subr.mxu0 0.0
        %v2478 = vand.u32 %v754, 4294901760
        %2479 = vmatpush1.msra.mxu0 %v2478
        %2480 = vmatprep.subr.mxu0 0.0
        %v2481 = vand.u32 %v755, 4294901760
        %2482 = vmatpush1.msra.mxu0 %v2481
        %2483 = vmatprep.subr.mxu0 0.0
        %v2484 = vand.u32 %v756, 4294901760
        %2485 = vmatpush1.msra.mxu0 %v2484
        %2486 = vmatprep.subr.mxu0 0.0
        %v2487 = vand.u32 %v757, 4294901760
        %2488 = vmatpush1.msra.mxu0 %v2487
        %2489 = vmatprep.subr.mxu0 0.0
        %v2490 = vand.u32 %v758, 4294901760
        %2491 = vmatpush1.msra.mxu0 %v2490
        %2492 = vmatprep.subr.mxu0 0.0
        %v2493 = vand.u32 %v759, 4294901760
        %2494 = vmatpush1.msra.mxu0 %v2493
        %2495 = vmatprep.subr.mxu0 0.0
        %v2496 = vand.u32 %v760, 4294901760
        %2497 = vmatpush1.msra.mxu0 %v2496
        %2498 = vmatprep.subr.mxu0 0.0
        %v2499 = vand.u32 %v761, 4294901760
        %2500 = vmatpush1.msra.mxu0 %v2499
        %2501 = vmatprep.subr.mxu0 0.0
        %v2502 = vand.u32 %v762, 4294901760
        %2503 = vmatpush1.msra.mxu0 %v2502
        %2504 = vmatprep.subr.mxu0 0.0
        %v2505 = vand.u32 %v763, 4294901760
        %2506 = vmatpush1.msra.mxu0 %v2505
        %2507 = vmatprep.subr.mxu0 0.0
        %v2508 = vand.u32 %v764, 4294901760
        %2509 = vmatpush1.msra.mxu0 %v2508
        %2510 = vmatprep.subr.mxu0 0.0
        %v2511 = vand.u32 %v765, 4294901760
        %2512 = vmatpush1.msra.mxu0 %v2511
        %2513 = vmatprep.subr.mxu0 0.0
        %v2514 = vand.u32 %v766, 4294901760
        %2515 = vmatpush1.msra.mxu0 %v2514
        %2516 = vmatprep.subr.mxu0 0.0
        %2517 = vmatpush1.msra.mxu0 0.0
        %2518 = vmatprep.subr.mxu0 0.0
        %2519 = vmatpush1.msra.mxu0 0.0
        %2520 = vmatprep.subr.mxu0 0.0
        %2521 = vmatpush1.msra.mxu0 0.0
        %2522 = vmatprep.subr.mxu0 0.0
        %2523 = vmatpush1.msra.mxu0 0.0
        %2524 = vmatprep.subr.mxu0 0.0
        %2525 = vmatpush1.msra.mxu0 0.0
        %2526 = vmatprep.subr.mxu0 0.0
        %2527 = vmatpush1.msra.mxu0 0.0
        %2528 = vmatprep.subr.mxu0 0.0
        %2529 = vmatpush1.msra.mxu0 0.0
        %2530 = vmatprep.subr.mxu0 0.0
        %2531 = vmatpush1.msra.mxu0 0.0
        %2532 = vmatprep.subr.mxu0 0.0
        %2533 = vmatpush1.msra.mxu0 0.0
        %2534 = vmatprep.subr.mxu0 0.0
        %2535 = vmatpush1.msra.mxu0 0.0
        %2536 = vmatprep.subr.mxu0 0.0
        %2537 = vmatpush1.msra.mxu0 0.0
        %2538 = vmatprep.subr.mxu0 0.0
        %2539 = vmatpush1.msra.mxu0 0.0
        %2540 = vmatprep.subr.mxu0 0.0
        %2541 = vmatpush1.msra.mxu0 0.0
        %2542 = vmatprep.subr.mxu0 0.0
        %2543 = vmatpush1.msra.mxu0 0.0
        %2544 = vmatprep.subr.mxu0 0.0
        %2545 = vmatpush1.msra.mxu0 0.0
        %2546 = vmatprep.subr.mxu0 0.0
        %2547 = vmatpush1.msra.mxu0 0.0
        %2548 = vmatprep.mubr.f32.mxu0 0.0
        %v2549 = vand.u32 %v719, 4294901760
        %2550 = vmatmul.mubr.f32.gmra.mrb[0].mxu0 %v2549
        %v2551 = vpop.f32.mrb[0].mxu0
        %v2552 = vadd.f32 %v2279, %v2551
        %v2553 = vpop.f32.mrb[0].mxu0
        %2554 = vmatprep.mubr.f32.mxu0 0.0
        %v2555 = vand.u32 %v720, 4294901760
        %2556 = vmatmul.mubr.f32.gmra.mrb[0].mxu0 %v2555
        %v2557 = vpop.f32.mrb[0].mxu0
        %v2558 = vadd.f32 %v2285, %v2557
        %v2559 = vpop.f32.mrb[0].mxu0
        %2560 = vmatprep.mubr.f32.mxu0 0.0
        %v2561 = vand.u32 %v721, 4294901760
        %2562 = vmatmul.mubr.f32.gmra.mrb[0].mxu0 %v2561
        %v2563 = vpop.f32.mrb[0].mxu0
        %v2564 = vadd.f32 %v2291, %v2563
        %v2565 = vpop.f32.mrb[0].mxu0
        %2566 = vmatprep.mubr.f32.mxu0 0.0
        %v2567 = vand.u32 %v722, 4294901760
        %2568 = vmatmul.mubr.f32.gmra.mrb[0].mxu0 %v2567
        %v2569 = vpop.f32.mrb[0].mxu0
        %v2570 = vadd.f32 %v2297, %v2569
        %v2571 = vpop.f32.mrb[0].mxu0
        %2572 = vmatprep.mubr.f32.mxu0 0.0
        %v2573 = vand.u32 %v723, 4294901760
        %2574 = vmatmul.mubr.f32.gmra.mrb[0].mxu0 %v2573
        %v2575 = vpop.f32.mrb[0].mxu0
        %v2576 = vadd.f32 %v2303, %v2575
        %v2577 = vpop.f32.mrb[0].mxu0
        %2578 = vmatprep.mubr.f32.mxu0 0.0
        %v2579 = vand.u32 %v724, 4294901760
        %2580 = vmatmul.mubr.f32.gmra.mrb[0].mxu0 %v2579
        %v2581 = vpop.f32.mrb[0].mxu0
        %v2582 = vadd.f32 %v2309, %v2581
        %v2583 = vpop.f32.mrb[0].mxu0
        %2584 = vmatprep.mubr.f32.mxu0 0.0
        %v2585 = vand.u32 %v725, 4294901760
        %2586 = vmatmul.mubr.f32.gmra.mrb[0].mxu0 %v2585
        %v2587 = vpop.f32.mrb[0].mxu0
        %v2588 = vadd.f32 %v2315, %v2587
        %v2589 = vpop.f32.mrb[0].mxu0
        %2590 = vmatprep.mubr.f32.mxu0 0.0
        %v2591 = vand.u32 %v726, 4294901760
        %2592 = vmatmul.mubr.f32.gmra.mrb[0].mxu0 %v2591
        %v2593 = vpop.f32.mrb[0].mxu0
        %v2594 = vadd.f32 %v2321, %v2593
        %v2595 = vpop.f32.mrb[0].mxu0
        %2596 = vmatprep.mubr.f32.mxu0 0.0
        %v2597 = vand.u32 %v727, 4294901760
        %2598 = vmatmul.mubr.f32.gmra.mrb[0].mxu0 %v2597
        %v2599 = vpop.f32.mrb[0].mxu0
        %v2600 = vadd.f32 %v2327, %v2599
        %v2601 = vpop.f32.mrb[0].mxu0
        %2602 = vmatprep.mubr.f32.mxu0 0.0
        %v2603 = vand.u32 %v728, 4294901760
        %2604 = vmatmul.mubr.f32.gmra.mrb[0].mxu0 %v2603
        %v2605 = vpop.f32.mrb[0].mxu0
        %v2606 = vadd.f32 %v2333, %v2605
        %v2607 = vpop.f32.mrb[0].mxu0
        %2608 = vmatprep.mubr.f32.mxu0 0.0
        %v2609 = vand.u32 %v729, 4294901760
        %2610 = vmatmul.mubr.f32.gmra.mrb[0].mxu0 %v2609
        %v2611 = vpop.f32.mrb[0].mxu0
        %v2612 = vadd.f32 %v2339, %v2611
        %v2613 = vpop.f32.mrb[0].mxu0
        %2614 = vmatprep.mubr.f32.mxu0 0.0
        %v2615 = vand.u32 %v730, 4294901760
        %2616 = vmatmul.mubr.f32.gmra.mrb[0].mxu0 %v2615
        %v2617 = vpop.f32.mrb[0].mxu0
        %v2618 = vadd.f32 %v2345, %v2617
        %v2619 = vpop.f32.mrb[0].mxu0
        %2620 = vmatprep.mubr.f32.mxu0 0.0
        %v2621 = vand.u32 %v731, 4294901760
        %2622 = vmatmul.mubr.f32.gmra.mrb[0].mxu0 %v2621
        %v2623 = vpop.f32.mrb[0].mxu0
        %v2624 = vadd.f32 %v2351, %v2623
        %v2625 = vpop.f32.mrb[0].mxu0
        %2626 = vmatprep.mubr.f32.mxu0 0.0
        %v2627 = vand.u32 %v732, 4294901760
        %2628 = vmatmul.mubr.f32.gmra.mrb[0].mxu0 %v2627
        %v2629 = vpop.f32.mrb[0].mxu0
        %v2630 = vadd.f32 %v2357, %v2629
        %v2631 = vpop.f32.mrb[0].mxu0
        %2632 = vmatprep.mubr.f32.mxu0 0.0
        %v2633 = vand.u32 %v733, 4294901760
        %2634 = vmatmul.mubr.f32.gmra.mrb[0].mxu0 %v2633
        %v2635 = vpop.f32.mrb[0].mxu0
        %v2636 = vadd.f32 %v2363, %v2635
        %v2637 = vpop.f32.mrb[0].mxu0
        %2638 = vmatprep.mubr.f32.mxu0 0.0
        %v2639 = vand.u32 %v734, 4294901760
        %2640 = vmatmul.mubr.f32.gmra.mrb[0].mxu0 %v2639
        %v2641 = vpop.f32.mrb[0].mxu0
        %v2642 = vadd.f32 %v2369, %v2641
        %v2643 = vpop.f32.mrb[0].mxu0
        %2644 = vmatprep.mubr.f32.mxu0 0.0
        %v2645 = vand.u32 %v735, 4294901760
        %2646 = vmatmul.mubr.f32.gmra.mrb[0].mxu0 %v2645
        %v2647 = vpop.f32.mrb[0].mxu0
        %v2648 = vadd.f32 %v2375, %v2647
        %v2649 = vpop.f32.mrb[0].mxu0
        %2650 = vmatprep.mubr.f32.mxu0 0.0
        %v2651 = vand.u32 %v736, 4294901760
        %2652 = vmatmul.mubr.f32.gmra.mrb[0].mxu0 %v2651
        %v2653 = vpop.f32.mrb[0].mxu0
        %v2654 = vadd.f32 %v2381, %v2653
        %v2655 = vpop.f32.mrb[0].mxu0
        %2656 = vmatprep.mubr.f32.mxu0 0.0
        %v2657 = vand.u32 %v737, 4294901760
        %2658 = vmatmul.mubr.f32.gmra.mrb[0].mxu0 %v2657
        %v2659 = vpop.f32.mrb[0].mxu0
        %v2660 = vadd.f32 %v2387, %v2659
        %v2661 = vpop.f32.mrb[0].mxu0
        %2662 = vmatprep.mubr.f32.mxu0 0.0
        %v2663 = vand.u32 %v738, 4294901760
        %2664 = vmatmul.mubr.f32.gmra.mrb[0].mxu0 %v2663
        %v2665 = vpop.f32.mrb[0].mxu0
        %v2666 = vadd.f32 %v2393, %v2665
        %v2667 = vpop.f32.mrb[0].mxu0
        %2668 = vmatprep.mubr.f32.mxu0 0.0
        %v2669 = vand.u32 %v739, 4294901760
        %2670 = vmatmul.mubr.f32.gmra.mrb[0].mxu0 %v2669
        %v2671 = vpop.f32.mrb[0].mxu0
        %v2672 = vadd.f32 %v2399, %v2671
        %v2673 = vpop.f32.mrb[0].mxu0
        %2674 = vmatprep.mubr.f32.mxu0 0.0
        %v2675 = vand.u32 %v740, 4294901760
        %2676 = vmatmul.mubr.f32.gmra.mrb[0].mxu0 %v2675
        %v2677 = vpop.f32.mrb[0].mxu0
        %v2678 = vadd.f32 %v2405, %v2677
        %v2679 = vpop.f32.mrb[0].mxu0
        %2680 = vmatprep.mubr.f32.mxu0 0.0
        %v2681 = vand.u32 %v741, 4294901760
        %2682 = vmatmul.mubr.f32.gmra.mrb[0].mxu0 %v2681
        %v2683 = vpop.f32.mrb[0].mxu0
        %v2684 = vadd.f32 %v2411, %v2683
        %v2685 = vpop.f32.mrb[0].mxu0
        %2686 = vmatprep.mubr.f32.mxu0 0.0
        %v2687 = vand.u32 %v742, 4294901760
        %2688 = vmatmul.mubr.f32.gmra.mrb[0].mxu0 %v2687
        %v2689 = vpop.f32.mrb[0].mxu0
        %v2690 = vadd.f32 %v2417, %v2689
        %v2691 = vpop.f32.mrb[0].mxu0
        %2692 = vmatprep.mubr.f32.mxu0 0.0
        %v2693 = vand.u32 %v743, 4294901760
        %2694 = vmatmul.mubr.f32.gmra.mrb[0].mxu0 %v2693
        %v2695 = vpop.f32.mrb[0].mxu0
        %v2696 = vadd.f32 %v2423, %v2695
        %v2697 = vpop.f32.mrb[0].mxu0
        %2698 = vmatprep.mubr.f32.mxu0 0.0
        %v2699 = vand.u32 %v744, 4294901760
        %2700 = vmatmul.mubr.f32.gmra.mrb[0].mxu0 %v2699
        %v2701 = vpop.f32.mrb[0].mxu0
        %v2702 = vadd.f32 %v2429, %v2701
        %v2703 = vpop.f32.mrb[0].mxu0
        %2704 = vmatprep.mubr.f32.mxu0 0.0
        %v2705 = vand.u32 %v745, 4294901760
        %2706 = vmatmul.mubr.f32.gmra.mrb[0].mxu0 %v2705
        %v2707 = vpop.f32.mrb[0].mxu0
        %v2708 = vadd.f32 %v2435, %v2707
        %v2709 = vpop.f32.mrb[0].mxu0
        %2710 = vmatprep.mubr.f32.mxu0 0.0
        %v2711 = vand.u32 %v746, 4294901760
        %2712 = vmatmul.mubr.f32.gmra.mrb[0].mxu0 %v2711
        %v2713 = vpop.f32.mrb[0].mxu0
        %v2714 = vadd.f32 %v2441, %v2713
        %v2715 = vpop.f32.mrb[0].mxu0
        %2716 = vmatprep.mubr.f32.mxu0 0.0
        %v2717 = vand.u32 %v747, 4294901760
        %2718 = vmatmul.mubr.f32.gmra.mrb[0].mxu0 %v2717
        %v2719 = vpop.f32.mrb[0].mxu0
        %v2720 = vadd.f32 %v2447, %v2719
        %v2721 = vpop.f32.mrb[0].mxu0
        %2722 = vmatprep.mubr.f32.mxu0 0.0
        %v2723 = vand.u32 %v748, 4294901760
        %2724 = vmatmul.mubr.f32.gmra.mrb[0].mxu0 %v2723
        %v2725 = vpop.f32.mrb[0].mxu0
        %v2726 = vadd.f32 %v2453, %v2725
        %v2727 = vpop.f32.mrb[0].mxu0
        %2728 = vmatprep.mubr.f32.mxu0 0.0
        %v2729 = vand.u32 %v749, 4294901760
        %2730 = vmatmul.mubr.f32.gmra.mrb[0].mxu0 %v2729
        %v2731 = vpop.f32.mrb[0].mxu0
        %v2732 = vadd.f32 %v2459, %v2731
        %v2733 = vpop.f32.mrb[0].mxu0
        %2734 = vmatprep.mubr.f32.mxu0 0.0
        %v2735 = vand.u32 %v750, 4294901760
        %2736 = vmatmul.mubr.f32.gmra.mrb[0].mxu0 %v2735
        %v2737 = vpop.f32.mrb[0].mxu0
        %v2738 = vadd.f32 %v2465, %v2737
        %v2739 = vpop.f32.mrb[0].mxu0
        %2740 = vdwg.mxu0
        %vm2741 = vcmask 523264
        %2742 = vst.msk [vmem:[%s280] sm:$0xff] %vm2741, %v2552
        %2743 = vst.msk [vmem:[%s280 + $0x8] sm:$0xff] %vm2741, %v2558
        %2744 = vst.msk [vmem:[%s280 + $0x10] sm:$0xff] %vm2741, %v2564
        %2745 = vst.msk [vmem:[%s280 + $0x18] sm:$0xff] %vm2741, %v2570
        %2746 = vst.msk [vmem:[%s280 + $0x20] sm:$0xff] %vm2741, %v2576
        %2747 = vst.msk [vmem:[%s280 + $0x28] sm:$0xff] %vm2741, %v2582
        %2748 = vst.msk [vmem:[%s280 + $0x30] sm:$0xff] %vm2741, %v2588
        %2749 = vst.msk [vmem:[%s280 + $0x38] sm:$0xff] %vm2741, %v2594
        %2750 = vst.msk [vmem:[%s280 + $0x40] sm:$0xff] %vm2741, %v2600
        %2751 = vst.msk [vmem:[%s280 + $0x48] sm:$0xff] %vm2741, %v2606
        %2752 = vst.msk [vmem:[%s280 + $0x50] sm:$0xff] %vm2741, %v2612
        %2753 = vst.msk [vmem:[%s280 + $0x58] sm:$0xff] %vm2741, %v2618
        %2754 = vst.msk [vmem:[%s280 + $0x60] sm:$0xff] %vm2741, %v2624
        %2755 = vst.msk [vmem:[%s280 + $0x68] sm:$0xff] %vm2741, %v2630
        %2756 = vst.msk [vmem:[%s280 + $0x70] sm:$0xff] %vm2741, %v2636
        %2757 = vst.msk [vmem:[%s280 + $0x78] sm:$0xff] %vm2741, %v2642
        %2758 = vst.msk [vmem:[%s280 + $0x80] sm:$0xff] %vm2741, %v2648
        %2759 = vst.msk [vmem:[%s280 + $0x88] sm:$0xff] %vm2741, %v2654
        %2760 = vst.msk [vmem:[%s280 + $0x90] sm:$0xff] %vm2741, %v2660
        %2761 = vst.msk [vmem:[%s280 + $0x98] sm:$0xff] %vm2741, %v2666
        %2762 = vst.msk [vmem:[%s280 + $0xa0] sm:$0xff] %vm2741, %v2672
        %2763 = vst.msk [vmem:[%s280 + $0xa8] sm:$0xff] %vm2741, %v2678
        %2764 = vst.msk [vmem:[%s280 + $0xb0] sm:$0xff] %vm2741, %v2684
        %2765 = vst.msk [vmem:[%s280 + $0xb8] sm:$0xff] %vm2741, %v2690
        %2766 = vst.msk [vmem:[%s280 + $0xc0] sm:$0xff] %vm2741, %v2696
        %2767 = vst.msk [vmem:[%s280 + $0xc8] sm:$0xff] %vm2741, %v2702
        %2768 = vst.msk [vmem:[%s280 + $0xd0] sm:$0xff] %vm2741, %v2708
        %2769 = vst.msk [vmem:[%s280 + $0xd8] sm:$0xff] %vm2741, %v2714
        %2770 = vst.msk [vmem:[%s280 + $0xe0] sm:$0xff] %vm2741, %v2720
        %2771 = vst.msk [vmem:[%s280 + $0xe8] sm:$0xff] %vm2741, %v2726
        %2772 = vst.msk [vmem:[%s280 + $0xf0] sm:$0xff] %vm2741, %v2732
        %2773 = vst.msk [vmem:[%s280 + $0xf8] sm:$0xff] %vm2741, %v2738
        %v2774 = vld [vmem:[%s4] sm:$0xff]
        %v2775 = vld [vmem:[%s4 + $0x8] sm:$0xff]
        %v2776 = vld [vmem:[%s4 + $0x10] sm:$0xff]
        %v2777 = vld [vmem:[%s4 + $0x18] sm:$0xff]
        %v2778 = vld [vmem:[%s4 + $0x20] sm:$0xff]
        %v2779 = vld [vmem:[%s4 + $0x28] sm:$0xff]
        %v2780 = vld [vmem:[%s4 + $0x30] sm:$0xff]
        %v2781 = vld [vmem:[%s4 + $0x38] sm:$0xff]
        %v2782 = vld [vmem:[%s4 + $0x40] sm:$0xff]
        %v2783 = vld [vmem:[%s4 + $0x48] sm:$0xff]
        %v2784 = vld [vmem:[%s4 + $0x50] sm:$0xff]
        %v2785 = vld [vmem:[%s4 + $0x58] sm:$0xff]
        %v2786 = vld [vmem:[%s4 + $0x60] sm:$0xff]
        %v2787 = vld [vmem:[%s4 + $0x68] sm:$0xff]
        %v2788 = vld [vmem:[%s4 + $0x70] sm:$0xff]
        %v2789 = vld [vmem:[%s4 + $0x78] sm:$0xff]
        %2790 = vmatprep.subr.mxu0 0.0
        %v2791 = vand.u32 %v2774, 4294901760
        %2792 = vmatpush1.msra.mxu0 %v2791
        %2793 = vmatprep.subr.mxu0 0.0
        %v2794 = vand.u32 %v2775, 4294901760
        %2795 = vmatpush1.msra.mxu0 %v2794
        %2796 = vmatprep.subr.mxu0 0.0
        %v2797 = vand.u32 %v2776, 4294901760
        %2798 = vmatpush1.msra.mxu0 %v2797
        %2799 = vmatprep.subr.mxu0 0.0
        %v2800 = vand.u32 %v2777, 4294901760
        %2801 = vmatpush1.msra.mxu0 %v2800
        %2802 = vmatprep.subr.mxu0 0.0
        %v2803 = vand.u32 %v2778, 4294901760
        %2804 = vmatpush1.msra.mxu0 %v2803
        %2805 = vmatprep.subr.mxu0 0.0
        %v2806 = vand.u32 %v2779, 4294901760
        %2807 = vmatpush1.msra.mxu0 %v2806
        %2808 = vmatprep.subr.mxu0 0.0
        %v2809 = vand.u32 %v2780, 4294901760
        %2810 = vmatpush1.msra.mxu0 %v2809
        %2811 = vmatprep.subr.mxu0 0.0
        %v2812 = vand.u32 %v2781, 4294901760
        %2813 = vmatpush1.msra.mxu0 %v2812
        %2814 = vmatprep.subr.mxu0 0.0
        %v2815 = vand.u32 %v2782, 4294901760
        %2816 = vmatpush1.msra.mxu0 %v2815
        %2817 = vmatprep.subr.mxu0 0.0
        %v2818 = vand.u32 %v2783, 4294901760
        %2819 = vmatpush1.msra.mxu0 %v2818
        %2820 = vmatprep.subr.mxu0 0.0
        %v2821 = vand.u32 %v2784, 4294901760
        %2822 = vmatpush1.msra.mxu0 %v2821
        %2823 = vmatprep.subr.mxu0 0.0
        %v2824 = vand.u32 %v2785, 4294901760
        %2825 = vmatpush1.msra.mxu0 %v2824
        %2826 = vmatprep.subr.mxu0 0.0
        %v2827 = vand.u32 %v2786, 4294901760
        %2828 = vmatpush1.msra.mxu0 %v2827
        %2829 = vmatprep.subr.mxu0 0.0
        %v2830 = vand.u32 %v2787, 4294901760
        %2831 = vmatpush1.msra.mxu0 %v2830
        %2832 = vmatprep.subr.mxu0 0.0
        %v2833 = vand.u32 %v2788, 4294901760
        %2834 = vmatpush1.msra.mxu0 %v2833
        %2835 = vmatprep.subr.mxu0 0.0
        %v2836 = vand.u32 %v2789, 4294901760
        %2837 = vmatpush1.msra.mxu0 %v2836
        %2838 = vmatprep.subr.mxu0 0.0
        %2839 = vmatpush1.msra.mxu0 0.0
        %2840 = vmatprep.subr.mxu0 0.0
        %2841 = vmatpush1.msra.mxu0 0.0
        %2842 = vmatprep.subr.mxu0 0.0
        %2843 = vmatpush1.msra.mxu0 0.0
        %2844 = vmatprep.subr.mxu0 0.0
        %2845 = vmatpush1.msra.mxu0 0.0
        %2846 = vmatprep.subr.mxu0 0.0
        %2847 = vmatpush1.msra.mxu0 0.0
        %2848 = vmatprep.subr.mxu0 0.0
        %2849 = vmatpush1.msra.mxu0 0.0
        %2850 = vmatprep.subr.mxu0 0.0
        %2851 = vmatpush1.msra.mxu0 0.0
        %2852 = vmatprep.subr.mxu0 0.0
        %2853 = vmatpush1.msra.mxu0 0.0
        %2854 = vmatprep.subr.mxu0 0.0
        %2855 = vmatpush1.msra.mxu0 0.0
        %2856 = vmatprep.subr.mxu0 0.0
        %2857 = vmatpush1.msra.mxu0 0.0
        %2858 = vmatprep.subr.mxu0 0.0
        %2859 = vmatpush1.msra.mxu0 0.0
        %2860 = vmatprep.subr.mxu0 0.0
        %2861 = vmatpush1.msra.mxu0 0.0
        %2862 = vmatprep.subr.mxu0 0.0
        %2863 = vmatpush1.msra.mxu0 0.0
        %2864 = vmatprep.subr.mxu0 0.0
        %2865 = vmatpush1.msra.mxu0 0.0
        %2866 = vmatprep.subr.mxu0 0.0
        %2867 = vmatpush1.msra.mxu0 0.0
        %2868 = vmatprep.subr.mxu0 0.0
        %2869 = vmatpush1.msra.mxu0 0.0
        %2870 = vmatprep.mubr.f32.mxu0 0.0
        %v2871 = vand.u32 %v719, 4294901760
        %v2872 = vsub.f32 %v719, %v2871
        %v2873 = vand.u32 %v2872, 4294901760
        %v2874 = vsub.f32 %v2872, %v2873
        %v2875 = vand.u32 %v2874, 4294901760
        %2876 = vmatmul.mubr.f32.gmra.mrb[0].mxu0 %v2875
        %v2877 = vpop.f32.mrb[0].mxu0
        %v2878 = vadd.f32 0.0, %v2877
        %v2879 = vpop.f32.mrb[0].mxu0
        %2880 = vmatprep.mubr.f32.mxu0 0.0
        %v2881 = vand.u32 %v720, 4294901760
        %v2882 = vsub.f32 %v720, %v2881
        %v2883 = vand.u32 %v2882, 4294901760
        %v2884 = vsub.f32 %v2882, %v2883
        %v2885 = vand.u32 %v2884, 4294901760
        %2886 = vmatmul.mubr.f32.gmra.mrb[0].mxu0 %v2885
        %v2887 = vpop.f32.mrb[0].mxu0
        %v2888 = vadd.f32 0.0, %v2887
        %v2889 = vpop.f32.mrb[0].mxu0
        %2890 = vmatprep.mubr.f32.mxu0 0.0
        %v2891 = vand.u32 %v721, 4294901760
        %v2892 = vsub.f32 %v721, %v2891
        %v2893 = vand.u32 %v2892, 4294901760
        %v2894 = vsub.f32 %v2892, %v2893
        %v2895 = vand.u32 %v2894, 4294901760
        %2896 = vmatmul.mubr.f32.gmra.mrb[0].mxu0 %v2895
        %v2897 = vpop.f32.mrb[0].mxu0
        %v2898 = vadd.f32 0.0, %v2897
        %v2899 = vpop.f32.mrb[0].mxu0
        %2900 = vmatprep.mubr.f32.mxu0 0.0
        %v2901 = vand.u32 %v722, 4294901760
        %v2902 = vsub.f32 %v722, %v2901
        %v2903 = vand.u32 %v2902, 4294901760
        %v2904 = vsub.f32 %v2902, %v2903
        %v2905 = vand.u32 %v2904, 4294901760
        %2906 = vmatmul.mubr.f32.gmra.mrb[0].mxu0 %v2905
        %v2907 = vpop.f32.mrb[0].mxu0
        %v2908 = vadd.f32 0.0, %v2907
        %v2909 = vpop.f32.mrb[0].mxu0
        %2910 = vmatprep.mubr.f32.mxu0 0.0
        %v2911 = vand.u32 %v723, 4294901760
        %v2912 = vsub.f32 %v723, %v2911
        %v2913 = vand.u32 %v2912, 4294901760
        %v2914 = vsub.f32 %v2912, %v2913
        %v2915 = vand.u32 %v2914, 4294901760
        %2916 = vmatmul.mubr.f32.gmra.mrb[0].mxu0 %v2915
        %v2917 = vpop.f32.mrb[0].mxu0
        %v2918 = vadd.f32 0.0, %v2917
        %v2919 = vpop.f32.mrb[0].mxu0
        %2920 = vmatprep.mubr.f32.mxu0 0.0
        %v2921 = vand.u32 %v724, 4294901760
        %v2922 = vsub.f32 %v724, %v2921
        %v2923 = vand.u32 %v2922, 4294901760
        %v2924 = vsub.f32 %v2922, %v2923
        %v2925 = vand.u32 %v2924, 4294901760
        %2926 = vmatmul.mubr.f32.gmra.mrb[0].mxu0 %v2925
        %v2927 = vpop.f32.mrb[0].mxu0
        %v2928 = vadd.f32 0.0, %v2927
        %v2929 = vpop.f32.mrb[0].mxu0
        %2930 = vmatprep.mubr.f32.mxu0 0.0
        %v2931 = vand.u32 %v725, 4294901760
        %v2932 = vsub.f32 %v725, %v2931
        %v2933 = vand.u32 %v2932, 4294901760
        %v2934 = vsub.f32 %v2932, %v2933
        %v2935 = vand.u32 %v2934, 4294901760
        %2936 = vmatmul.mubr.f32.gmra.mrb[0].mxu0 %v2935
        %v2937 = vpop.f32.mrb[0].mxu0
        %v2938 = vadd.f32 0.0, %v2937
        %v2939 = vpop.f32.mrb[0].mxu0
        %2940 = vmatprep.mubr.f32.mxu0 0.0
        %v2941 = vand.u32 %v726, 4294901760
        %v2942 = vsub.f32 %v726, %v2941
        %v2943 = vand.u32 %v2942, 4294901760
        %v2944 = vsub.f32 %v2942, %v2943
        %v2945 = vand.u32 %v2944, 4294901760
        %2946 = vmatmul.mubr.f32.gmra.mrb[0].mxu0 %v2945
        %v2947 = vpop.f32.mrb[0].mxu0
        %v2948 = vadd.f32 0.0, %v2947
        %v2949 = vpop.f32.mrb[0].mxu0
        %2950 = vmatprep.mubr.f32.mxu0 0.0
        %v2951 = vand.u32 %v727, 4294901760
        %v2952 = vsub.f32 %v727, %v2951
        %v2953 = vand.u32 %v2952, 4294901760
        %v2954 = vsub.f32 %v2952, %v2953
        %v2955 = vand.u32 %v2954, 4294901760
        %2956 = vmatmul.mubr.f32.gmra.mrb[0].mxu0 %v2955
        %v2957 = vpop.f32.mrb[0].mxu0
        %v2958 = vadd.f32 0.0, %v2957
        %v2959 = vpop.f32.mrb[0].mxu0
        %2960 = vmatprep.mubr.f32.mxu0 0.0
        %v2961 = vand.u32 %v728, 4294901760
        %v2962 = vsub.f32 %v728, %v2961
        %v2963 = vand.u32 %v2962, 4294901760
        %v2964 = vsub.f32 %v2962, %v2963
        %v2965 = vand.u32 %v2964, 4294901760
        %2966 = vmatmul.mubr.f32.gmra.mrb[0].mxu0 %v2965
        %v2967 = vpop.f32.mrb[0].mxu0
        %v2968 = vadd.f32 0.0, %v2967
        %v2969 = vpop.f32.mrb[0].mxu0
        %2970 = vmatprep.mubr.f32.mxu0 0.0
        %v2971 = vand.u32 %v729, 4294901760
        %v2972 = vsub.f32 %v729, %v2971
        %v2973 = vand.u32 %v2972, 4294901760
        %v2974 = vsub.f32 %v2972, %v2973
        %v2975 = vand.u32 %v2974, 4294901760
        %2976 = vmatmul.mubr.f32.gmra.mrb[0].mxu0 %v2975
        %v2977 = vpop.f32.mrb[0].mxu0
        %v2978 = vadd.f32 0.0, %v2977
        %v2979 = vpop.f32.mrb[0].mxu0
        %2980 = vmatprep.mubr.f32.mxu0 0.0
        %v2981 = vand.u32 %v730, 4294901760
        %v2982 = vsub.f32 %v730, %v2981
        %v2983 = vand.u32 %v2982, 4294901760
        %v2984 = vsub.f32 %v2982, %v2983
        %v2985 = vand.u32 %v2984, 4294901760
        %2986 = vmatmul.mubr.f32.gmra.mrb[0].mxu0 %v2985
        %v2987 = vpop.f32.mrb[0].mxu0
        %v2988 = vadd.f32 0.0, %v2987
        %v2989 = vpop.f32.mrb[0].mxu0
        %2990 = vmatprep.mubr.f32.mxu0 0.0
        %v2991 = vand.u32 %v731, 4294901760
        %v2992 = vsub.f32 %v731, %v2991
        %v2993 = vand.u32 %v2992, 4294901760
        %v2994 = vsub.f32 %v2992, %v2993
        %v2995 = vand.u32 %v2994, 4294901760
        %2996 = vmatmul.mubr.f32.gmra.mrb[0].mxu0 %v2995
        %v2997 = vpop.f32.mrb[0].mxu0
        %v2998 = vadd.f32 0.0, %v2997
        %v2999 = vpop.f32.mrb[0].mxu0
        %3000 = vmatprep.mubr.f32.mxu0 0.0
        %v3001 = vand.u32 %v732, 4294901760
        %v3002 = vsub.f32 %v732, %v3001
        %v3003 = vand.u32 %v3002, 4294901760
        %v3004 = vsub.f32 %v3002, %v3003
        %v3005 = vand.u32 %v3004, 4294901760
        %3006 = vmatmul.mubr.f32.gmra.mrb[0].mxu0 %v3005
        %v3007 = vpop.f32.mrb[0].mxu0
        %v3008 = vadd.f32 0.0, %v3007
        %v3009 = vpop.f32.mrb[0].mxu0
        %3010 = vmatprep.mubr.f32.mxu0 0.0
        %v3011 = vand.u32 %v733, 4294901760
        %v3012 = vsub.f32 %v733, %v3011
        %v3013 = vand.u32 %v3012, 4294901760
        %v3014 = vsub.f32 %v3012, %v3013
        %v3015 = vand.u32 %v3014, 4294901760
        %3016 = vmatmul.mubr.f32.gmra.mrb[0].mxu0 %v3015
        %v3017 = vpop.f32.mrb[0].mxu0
        %v3018 = vadd.f32 0.0, %v3017
        %v3019 = vpop.f32.mrb[0].mxu0
        %3020 = vmatprep.mubr.f32.mxu0 0.0
        %v3021 = vand.u32 %v734, 4294901760
        %v3022 = vsub.f32 %v734, %v3021
        %v3023 = vand.u32 %v3022, 4294901760
        %v3024 = vsub.f32 %v3022, %v3023
        %v3025 = vand.u32 %v3024, 4294901760
        %3026 = vmatmul.mubr.f32.gmra.mrb[0].mxu0 %v3025
        %v3027 = vpop.f32.mrb[0].mxu0
        %v3028 = vadd.f32 0.0, %v3027
        %v3029 = vpop.f32.mrb[0].mxu0
        %3030 = vmatprep.mubr.f32.mxu0 0.0
        %v3031 = vand.u32 %v735, 4294901760
        %v3032 = vsub.f32 %v735, %v3031
        %v3033 = vand.u32 %v3032, 4294901760
        %v3034 = vsub.f32 %v3032, %v3033
        %v3035 = vand.u32 %v3034, 4294901760
        %3036 = vmatmul.mubr.f32.gmra.mrb[0].mxu0 %v3035
        %v3037 = vpop.f32.mrb[0].mxu0
        %v3038 = vadd.f32 0.0, %v3037
        %v3039 = vpop.f32.mrb[0].mxu0
        %3040 = vmatprep.mubr.f32.mxu0 0.0
        %v3041 = vand.u32 %v736, 4294901760
        %v3042 = vsub.f32 %v736, %v3041
        %v3043 = vand.u32 %v3042, 4294901760
        %v3044 = vsub.f32 %v3042, %v3043
        %v3045 = vand.u32 %v3044, 4294901760
        %3046 = vmatmul.mubr.f32.gmra.mrb[0].mxu0 %v3045
        %v3047 = vpop.f32.mrb[0].mxu0
        %v3048 = vadd.f32 0.0, %v3047
        %v3049 = vpop.f32.mrb[0].mxu0
        %3050 = vmatprep.mubr.f32.mxu0 0.0
        %v3051 = vand.u32 %v737, 4294901760
        %v3052 = vsub.f32 %v737, %v3051
        %v3053 = vand.u32 %v3052, 4294901760
        %v3054 = vsub.f32 %v3052, %v3053
        %v3055 = vand.u32 %v3054, 4294901760
        %3056 = vmatmul.mubr.f32.gmra.mrb[0].mxu0 %v3055
        %v3057 = vpop.f32.mrb[0].mxu0
        %v3058 = vadd.f32 0.0, %v3057
        %v3059 = vpop.f32.mrb[0].mxu0
        %3060 = vmatprep.mubr.f32.mxu0 0.0
        %v3061 = vand.u32 %v738, 4294901760
        %v3062 = vsub.f32 %v738, %v3061
        %v3063 = vand.u32 %v3062, 4294901760
        %v3064 = vsub.f32 %v3062, %v3063
        %v3065 = vand.u32 %v3064, 4294901760
        %3066 = vmatmul.mubr.f32.gmra.mrb[0].mxu0 %v3065
        %v3067 = vpop.f32.mrb[0].mxu0
        %v3068 = vadd.f32 0.0, %v3067
        %v3069 = vpop.f32.mrb[0].mxu0
        %3070 = vmatprep.mubr.f32.mxu0 0.0
        %v3071 = vand.u32 %v739, 4294901760
        %v3072 = vsub.f32 %v739, %v3071
        %v3073 = vand.u32 %v3072, 4294901760
        %v3074 = vsub.f32 %v3072, %v3073
        %v3075 = vand.u32 %v3074, 4294901760
        %3076 = vmatmul.mubr.f32.gmra.mrb[0].mxu0 %v3075
        %v3077 = vpop.f32.mrb[0].mxu0
        %v3078 = vadd.f32 0.0, %v3077
        %v3079 = vpop.f32.mrb[0].mxu0
        %3080 = vmatprep.mubr.f32.mxu0 0.0
        %v3081 = vand.u32 %v740, 4294901760
        %v3082 = vsub.f32 %v740, %v3081
        %v3083 = vand.u32 %v3082, 4294901760
        %v3084 = vsub.f32 %v3082, %v3083
        %v3085 = vand.u32 %v3084, 4294901760
        %3086 = vmatmul.mubr.f32.gmra.mrb[0].mxu0 %v3085
        %v3087 = vpop.f32.mrb[0].mxu0
        %v3088 = vadd.f32 0.0, %v3087
        %v3089 = vpop.f32.mrb[0].mxu0
        %3090 = vmatprep.mubr.f32.mxu0 0.0
        %v3091 = vand.u32 %v741, 4294901760
        %v3092 = vsub.f32 %v741, %v3091
        %v3093 = vand.u32 %v3092, 4294901760
        %v3094 = vsub.f32 %v3092, %v3093
        %v3095 = vand.u32 %v3094, 4294901760
        %3096 = vmatmul.mubr.f32.gmra.mrb[0].mxu0 %v3095
        %v3097 = vpop.f32.mrb[0].mxu0
        %v3098 = vadd.f32 0.0, %v3097
        %v3099 = vpop.f32.mrb[0].mxu0
        %3100 = vmatprep.mubr.f32.mxu0 0.0
        %v3101 = vand.u32 %v742, 4294901760
        %v3102 = vsub.f32 %v742, %v3101
        %v3103 = vand.u32 %v3102, 4294901760
        %v3104 = vsub.f32 %v3102, %v3103
        %v3105 = vand.u32 %v3104, 4294901760
        %3106 = vmatmul.mubr.f32.gmra.mrb[0].mxu0 %v3105
        %v3107 = vpop.f32.mrb[0].mxu0
        %v3108 = vadd.f32 0.0, %v3107
        %v3109 = vpop.f32.mrb[0].mxu0
        %3110 = vmatprep.mubr.f32.mxu0 0.0
        %v3111 = vand.u32 %v743, 4294901760
        %v3112 = vsub.f32 %v743, %v3111
        %v3113 = vand.u32 %v3112, 4294901760
        %v3114 = vsub.f32 %v3112, %v3113
        %v3115 = vand.u32 %v3114, 4294901760
        %3116 = vmatmul.mubr.f32.gmra.mrb[0].mxu0 %v3115
        %v3117 = vpop.f32.mrb[0].mxu0
        %v3118 = vadd.f32 0.0, %v3117
        %v3119 = vpop.f32.mrb[0].mxu0
        %3120 = vmatprep.mubr.f32.mxu0 0.0
        %v3121 = vand.u32 %v744, 4294901760
        %v3122 = vsub.f32 %v744, %v3121
        %v3123 = vand.u32 %v3122, 4294901760
        %v3124 = vsub.f32 %v3122, %v3123
        %v3125 = vand.u32 %v3124, 4294901760
        %3126 = vmatmul.mubr.f32.gmra.mrb[0].mxu0 %v3125
        %v3127 = vpop.f32.mrb[0].mxu0
        %v3128 = vadd.f32 0.0, %v3127
        %v3129 = vpop.f32.mrb[0].mxu0
        %3130 = vmatprep.mubr.f32.mxu0 0.0
        %v3131 = vand.u32 %v745, 4294901760
        %v3132 = vsub.f32 %v745, %v3131
        %v3133 = vand.u32 %v3132, 4294901760
        %v3134 = vsub.f32 %v3132, %v3133
        %v3135 = vand.u32 %v3134, 4294901760
        %3136 = vmatmul.mubr.f32.gmra.mrb[0].mxu0 %v3135
        %v3137 = vpop.f32.mrb[0].mxu0
        %v3138 = vadd.f32 0.0, %v3137
        %v3139 = vpop.f32.mrb[0].mxu0
        %3140 = vmatprep.mubr.f32.mxu0 0.0
        %v3141 = vand.u32 %v746, 4294901760
        %v3142 = vsub.f32 %v746, %v3141
        %v3143 = vand.u32 %v3142, 4294901760
        %v3144 = vsub.f32 %v3142, %v3143
        %v3145 = vand.u32 %v3144, 4294901760
        %3146 = vmatmul.mubr.f32.gmra.mrb[0].mxu0 %v3145
        %v3147 = vpop.f32.mrb[0].mxu0
        %v3148 = vadd.f32 0.0, %v3147
        %v3149 = vpop.f32.mrb[0].mxu0
        %3150 = vmatprep.mubr.f32.mxu0 0.0
        %v3151 = vand.u32 %v747, 4294901760
        %v3152 = vsub.f32 %v747, %v3151
        %v3153 = vand.u32 %v3152, 4294901760
        %v3154 = vsub.f32 %v3152, %v3153
        %v3155 = vand.u32 %v3154, 4294901760
        %3156 = vmatmul.mubr.f32.gmra.mrb[0].mxu0 %v3155
        %v3157 = vpop.f32.mrb[0].mxu0
        %v3158 = vadd.f32 0.0, %v3157
        %v3159 = vpop.f32.mrb[0].mxu0
        %3160 = vmatprep.mubr.f32.mxu0 0.0
        %v3161 = vand.u32 %v748, 4294901760
        %v3162 = vsub.f32 %v748, %v3161
        %v3163 = vand.u32 %v3162, 4294901760
        %v3164 = vsub.f32 %v3162, %v3163
        %v3165 = vand.u32 %v3164, 4294901760
        %3166 = vmatmul.mubr.f32.gmra.mrb[0].mxu0 %v3165
        %v3167 = vpop.f32.mrb[0].mxu0
        %v3168 = vadd.f32 0.0, %v3167
        %v3169 = vpop.f32.mrb[0].mxu0
        %3170 = vmatprep.mubr.f32.mxu0 0.0
        %v3171 = vand.u32 %v749, 4294901760
        %v3172 = vsub.f32 %v749, %v3171
        %v3173 = vand.u32 %v3172, 4294901760
        %v3174 = vsub.f32 %v3172, %v3173
        %v3175 = vand.u32 %v3174, 4294901760
        %3176 = vmatmul.mubr.f32.gmra.mrb[0].mxu0 %v3175
        %v3177 = vpop.f32.mrb[0].mxu0
        %v3178 = vadd.f32 0.0, %v3177
        %v3179 = vpop.f32.mrb[0].mxu0
        %3180 = vmatprep.mubr.f32.mxu0 0.0
        %v3181 = vand.u32 %v750, 4294901760
        %v3182 = vsub.f32 %v750, %v3181
        %v3183 = vand.u32 %v3182, 4294901760
        %v3184 = vsub.f32 %v3182, %v3183
        %v3185 = vand.u32 %v3184, 4294901760
        %3186 = vmatmul.mubr.f32.gmra.mrb[0].mxu0 %v3185
        %v3187 = vpop.f32.mrb[0].mxu0
        %v3188 = vadd.f32 0.0, %v3187
        %v3189 = vpop.f32.mrb[0].mxu0
        %3190 = vdwg.mxu0
        %3191 = vmatprep.subr.mxu0 0.0
        %v3192 = vand.u32 %v2774, 4294901760
        %v3193 = vsub.f32 %v2774, %v3192
        %v3194 = vand.u32 %v3193, 4294901760
        %v3195 = vsub.f32 %v3193, %v3194
        %v3196 = vand.u32 %v3195, 4294901760
        %3197 = vmatpush1.msra.mxu0 %v3196
        %3198 = vmatprep.subr.mxu0 0.0
        %v3199 = vand.u32 %v2775, 4294901760
        %v3200 = vsub.f32 %v2775, %v3199
        %v3201 = vand.u32 %v3200, 4294901760
        %v3202 = vsub.f32 %v3200, %v3201
        %v3203 = vand.u32 %v3202, 4294901760
        %3204 = vmatpush1.msra.mxu0 %v3203
        %3205 = vmatprep.subr.mxu0 0.0
        %v3206 = vand.u32 %v2776, 4294901760
        %v3207 = vsub.f32 %v2776, %v3206
        %v3208 = vand.u32 %v3207, 4294901760
        %v3209 = vsub.f32 %v3207, %v3208
        %v3210 = vand.u32 %v3209, 4294901760
        %3211 = vmatpush1.msra.mxu0 %v3210
        %3212 = vmatprep.subr.mxu0 0.0
        %v3213 = vand.u32 %v2777, 4294901760
        %v3214 = vsub.f32 %v2777, %v3213
        %v3215 = vand.u32 %v3214, 4294901760
        %v3216 = vsub.f32 %v3214, %v3215
        %v3217 = vand.u32 %v3216, 4294901760
        %3218 = vmatpush1.msra.mxu0 %v3217
        %3219 = vmatprep.subr.mxu0 0.0
        %v3220 = vand.u32 %v2778, 4294901760
        %v3221 = vsub.f32 %v2778, %v3220
        %v3222 = vand.u32 %v3221, 4294901760
        %v3223 = vsub.f32 %v3221, %v3222
        %v3224 = vand.u32 %v3223, 4294901760
        %3225 = vmatpush1.msra.mxu0 %v3224
        %3226 = vmatprep.subr.mxu0 0.0
        %v3227 = vand.u32 %v2779, 4294901760
        %v3228 = vsub.f32 %v2779, %v3227
        %v3229 = vand.u32 %v3228, 4294901760
        %v3230 = vsub.f32 %v3228, %v3229
        %v3231 = vand.u32 %v3230, 4294901760
        %3232 = vmatpush1.msra.mxu0 %v3231
        %3233 = vmatprep.subr.mxu0 0.0
        %v3234 = vand.u32 %v2780, 4294901760
        %v3235 = vsub.f32 %v2780, %v3234
        %v3236 = vand.u32 %v3235, 4294901760
        %v3237 = vsub.f32 %v3235, %v3236
        %v3238 = vand.u32 %v3237, 4294901760
        %3239 = vmatpush1.msra.mxu0 %v3238
        %3240 = vmatprep.subr.mxu0 0.0
        %v3241 = vand.u32 %v2781, 4294901760
        %v3242 = vsub.f32 %v2781, %v3241
        %v3243 = vand.u32 %v3242, 4294901760
        %v3244 = vsub.f32 %v3242, %v3243
        %v3245 = vand.u32 %v3244, 4294901760
        %3246 = vmatpush1.msra.mxu0 %v3245
        %3247 = vmatprep.subr.mxu0 0.0
        %v3248 = vand.u32 %v2782, 4294901760
        %v3249 = vsub.f32 %v2782, %v3248
        %v3250 = vand.u32 %v3249, 4294901760
        %v3251 = vsub.f32 %v3249, %v3250
        %v3252 = vand.u32 %v3251, 4294901760
        %3253 = vmatpush1.msra.mxu0 %v3252
        %3254 = vmatprep.subr.mxu0 0.0
        %v3255 = vand.u32 %v2783, 4294901760
        %v3256 = vsub.f32 %v2783, %v3255
        %v3257 = vand.u32 %v3256, 4294901760
        %v3258 = vsub.f32 %v3256, %v3257
        %v3259 = vand.u32 %v3258, 4294901760
        %3260 = vmatpush1.msra.mxu0 %v3259
        %3261 = vmatprep.subr.mxu0 0.0
        %v3262 = vand.u32 %v2784, 4294901760
        %v3263 = vsub.f32 %v2784, %v3262
        %v3264 = vand.u32 %v3263, 4294901760
        %v3265 = vsub.f32 %v3263, %v3264
        %v3266 = vand.u32 %v3265, 4294901760
        %3267 = vmatpush1.msra.mxu0 %v3266
        %3268 = vmatprep.subr.mxu0 0.0
        %v3269 = vand.u32 %v2785, 4294901760
        %v3270 = vsub.f32 %v2785, %v3269
        %v3271 = vand.u32 %v3270, 4294901760
        %v3272 = vsub.f32 %v3270, %v3271
        %v3273 = vand.u32 %v3272, 4294901760
        %3274 = vmatpush1.msra.mxu0 %v3273
        %3275 = vmatprep.subr.mxu0 0.0
        %v3276 = vand.u32 %v2786, 4294901760
        %v3277 = vsub.f32 %v2786, %v3276
        %v3278 = vand.u32 %v3277, 4294901760
        %v3279 = vsub.f32 %v3277, %v3278
        %v3280 = vand.u32 %v3279, 4294901760
        %3281 = vmatpush1.msra.mxu0 %v3280
        %3282 = vmatprep.subr.mxu0 0.0
        %v3283 = vand.u32 %v2787, 4294901760
        %v3284 = vsub.f32 %v2787, %v3283
        %v3285 = vand.u32 %v3284, 4294901760
        %v3286 = vsub.f32 %v3284, %v3285
        %v3287 = vand.u32 %v3286, 4294901760
        %3288 = vmatpush1.msra.mxu0 %v3287
        %3289 = vmatprep.subr.mxu0 0.0
        %v3290 = vand.u32 %v2788, 4294901760
        %v3291 = vsub.f32 %v2788, %v3290
        %v3292 = vand.u32 %v3291, 4294901760
        %v3293 = vsub.f32 %v3291, %v3292
        %v3294 = vand.u32 %v3293, 4294901760
        %3295 = vmatpush1.msra.mxu0 %v3294
        %3296 = vmatprep.subr.mxu0 0.0
        %v3297 = vand.u32 %v2789, 4294901760
        %v3298 = vsub.f32 %v2789, %v3297
        %v3299 = vand.u32 %v3298, 4294901760
        %v3300 = vsub.f32 %v3298, %v3299
        %v3301 = vand.u32 %v3300, 4294901760
        %3302 = vmatpush1.msra.mxu0 %v3301
        %3303 = vmatprep.subr.mxu0 0.0
        %3304 = vmatpush1.msra.mxu0 0.0
        %3305 = vmatprep.subr.mxu0 0.0
        %3306 = vmatpush1.msra.mxu0 0.0
        %3307 = vmatprep.subr.mxu0 0.0
        %3308 = vmatpush1.msra.mxu0 0.0
        %3309 = vmatprep.subr.mxu0 0.0
        %3310 = vmatpush1.msra.mxu0 0.0
        %3311 = vmatprep.subr.mxu0 0.0
        %3312 = vmatpush1.msra.mxu0 0.0
        %3313 = vmatprep.subr.mxu0 0.0
        %3314 = vmatpush1.msra.mxu0 0.0
        %3315 = vmatprep.subr.mxu0 0.0
        %3316 = vmatpush1.msra.mxu0 0.0
        %3317 = vmatprep.subr.mxu0 0.0
        %3318 = vmatpush1.msra.mxu0 0.0
        %3319 = vmatprep.subr.mxu0 0.0
        %3320 = vmatpush1.msra.mxu0 0.0
        %3321 = vmatprep.subr.mxu0 0.0
        %3322 = vmatpush1.msra.mxu0 0.0
        %3323 = vmatprep.subr.mxu0 0.0
        %3324 = vmatpush1.msra.mxu0 0.0
        %3325 = vmatprep.subr.mxu0 0.0
        %3326 = vmatpush1.msra.mxu0 0.0
        %3327 = vmatprep.subr.mxu0 0.0
        %3328 = vmatpush1.msra.mxu0 0.0
        %3329 = vmatprep.subr.mxu0 0.0
        %3330 = vmatpush1.msra.mxu0 0.0
        %3331 = vmatprep.subr.mxu0 0.0
        %3332 = vmatpush1.msra.mxu0 0.0
        %3333 = vmatprep.subr.mxu0 0.0
        %3334 = vmatpush1.msra.mxu0 0.0
        %3335 = vmatprep.mubr.f32.mxu0 0.0
        %v3336 = vand.u32 %v719, 4294901760
        %3337 = vmatmul.mubr.f32.gmra.mrb[0].mxu0 %v3336
        %v3338 = vpop.f32.mrb[0].mxu0
        %v3339 = vadd.f32 %v2878, %v3338
        %v3340 = vpop.f32.mrb[0].mxu0
        %3341 = vmatprep.mubr.f32.mxu0 0.0
        %v3342 = vand.u32 %v720, 4294901760
        %3343 = vmatmul.mubr.f32.gmra.mrb[0].mxu0 %v3342
        %v3344 = vpop.f32.mrb[0].mxu0
        %v3345 = vadd.f32 %v2888, %v3344
        %v3346 = vpop.f32.mrb[0].mxu0
        %3347 = vmatprep.mubr.f32.mxu0 0.0
        %v3348 = vand.u32 %v721, 4294901760
        %3349 = vmatmul.mubr.f32.gmra.mrb[0].mxu0 %v3348
        %v3350 = vpop.f32.mrb[0].mxu0
        %v3351 = vadd.f32 %v2898, %v3350
        %v3352 = vpop.f32.mrb[0].mxu0
        %3353 = vmatprep.mubr.f32.mxu0 0.0
        %v3354 = vand.u32 %v722, 4294901760
        %3355 = vmatmul.mubr.f32.gmra.mrb[0].mxu0 %v3354
        %v3356 = vpop.f32.mrb[0].mxu0
        %v3357 = vadd.f32 %v2908, %v3356
        %v3358 = vpop.f32.mrb[0].mxu0
        %3359 = vmatprep.mubr.f32.mxu0 0.0
        %v3360 = vand.u32 %v723, 4294901760
        %3361 = vmatmul.mubr.f32.gmra.mrb[0].mxu0 %v3360
        %v3362 = vpop.f32.mrb[0].mxu0
        %v3363 = vadd.f32 %v2918, %v3362
        %v3364 = vpop.f32.mrb[0].mxu0
        %3365 = vmatprep.mubr.f32.mxu0 0.0
        %v3366 = vand.u32 %v724, 4294901760
        %3367 = vmatmul.mubr.f32.gmra.mrb[0].mxu0 %v3366
        %v3368 = vpop.f32.mrb[0].mxu0
        %v3369 = vadd.f32 %v2928, %v3368
        %v3370 = vpop.f32.mrb[0].mxu0
        %3371 = vmatprep.mubr.f32.mxu0 0.0
        %v3372 = vand.u32 %v725, 4294901760
        %3373 = vmatmul.mubr.f32.gmra.mrb[0].mxu0 %v3372
        %v3374 = vpop.f32.mrb[0].mxu0
        %v3375 = vadd.f32 %v2938, %v3374
        %v3376 = vpop.f32.mrb[0].mxu0
        %3377 = vmatprep.mubr.f32.mxu0 0.0
        %v3378 = vand.u32 %v726, 4294901760
        %3379 = vmatmul.mubr.f32.gmra.mrb[0].mxu0 %v3378
        %v3380 = vpop.f32.mrb[0].mxu0
        %v3381 = vadd.f32 %v2948, %v3380
        %v3382 = vpop.f32.mrb[0].mxu0
        %3383 = vmatprep.mubr.f32.mxu0 0.0
        %v3384 = vand.u32 %v727, 4294901760
        %3385 = vmatmul.mubr.f32.gmra.mrb[0].mxu0 %v3384
        %v3386 = vpop.f32.mrb[0].mxu0
        %v3387 = vadd.f32 %v2958, %v3386
        %v3388 = vpop.f32.mrb[0].mxu0
        %3389 = vmatprep.mubr.f32.mxu0 0.0
        %v3390 = vand.u32 %v728, 4294901760
        %3391 = vmatmul.mubr.f32.gmra.mrb[0].mxu0 %v3390
        %v3392 = vpop.f32.mrb[0].mxu0
        %v3393 = vadd.f32 %v2968, %v3392
        %v3394 = vpop.f32.mrb[0].mxu0
        %3395 = vmatprep.mubr.f32.mxu0 0.0
        %v3396 = vand.u32 %v729, 4294901760
        %3397 = vmatmul.mubr.f32.gmra.mrb[0].mxu0 %v3396
        %v3398 = vpop.f32.mrb[0].mxu0
        %v3399 = vadd.f32 %v2978, %v3398
        %v3400 = vpop.f32.mrb[0].mxu0
        %3401 = vmatprep.mubr.f32.mxu0 0.0
        %v3402 = vand.u32 %v730, 4294901760
        %3403 = vmatmul.mubr.f32.gmra.mrb[0].mxu0 %v3402
        %v3404 = vpop.f32.mrb[0].mxu0
        %v3405 = vadd.f32 %v2988, %v3404
        %v3406 = vpop.f32.mrb[0].mxu0
        %3407 = vmatprep.mubr.f32.mxu0 0.0
        %v3408 = vand.u32 %v731, 4294901760
        %3409 = vmatmul.mubr.f32.gmra.mrb[0].mxu0 %v3408
        %v3410 = vpop.f32.mrb[0].mxu0
        %v3411 = vadd.f32 %v2998, %v3410
        %v3412 = vpop.f32.mrb[0].mxu0
        %3413 = vmatprep.mubr.f32.mxu0 0.0
        %v3414 = vand.u32 %v732, 4294901760
        %3415 = vmatmul.mubr.f32.gmra.mrb[0].mxu0 %v3414
        %v3416 = vpop.f32.mrb[0].mxu0
        %v3417 = vadd.f32 %v3008, %v3416
        %v3418 = vpop.f32.mrb[0].mxu0
        %3419 = vmatprep.mubr.f32.mxu0 0.0
        %v3420 = vand.u32 %v733, 4294901760
        %3421 = vmatmul.mubr.f32.gmra.mrb[0].mxu0 %v3420
        %v3422 = vpop.f32.mrb[0].mxu0
        %v3423 = vadd.f32 %v3018, %v3422
        %v3424 = vpop.f32.mrb[0].mxu0
        %3425 = vmatprep.mubr.f32.mxu0 0.0
        %v3426 = vand.u32 %v734, 4294901760
        %3427 = vmatmul.mubr.f32.gmra.mrb[0].mxu0 %v3426
        %v3428 = vpop.f32.mrb[0].mxu0
        %v3429 = vadd.f32 %v3028, %v3428
        %v3430 = vpop.f32.mrb[0].mxu0
        %3431 = vmatprep.mubr.f32.mxu0 0.0
        %v3432 = vand.u32 %v735, 4294901760
        %3433 = vmatmul.mubr.f32.gmra.mrb[0].mxu0 %v3432
        %v3434 = vpop.f32.mrb[0].mxu0
        %v3435 = vadd.f32 %v3038, %v3434
        %v3436 = vpop.f32.mrb[0].mxu0
        %3437 = vmatprep.mubr.f32.mxu0 0.0
        %v3438 = vand.u32 %v736, 4294901760
        %3439 = vmatmul.mubr.f32.gmra.mrb[0].mxu0 %v3438
        %v3440 = vpop.f32.mrb[0].mxu0
        %v3441 = vadd.f32 %v3048, %v3440
        %v3442 = vpop.f32.mrb[0].mxu0
        %3443 = vmatprep.mubr.f32.mxu0 0.0
        %v3444 = vand.u32 %v737, 4294901760
        %3445 = vmatmul.mubr.f32.gmra.mrb[0].mxu0 %v3444
        %v3446 = vpop.f32.mrb[0].mxu0
        %v3447 = vadd.f32 %v3058, %v3446
        %v3448 = vpop.f32.mrb[0].mxu0
        %3449 = vmatprep.mubr.f32.mxu0 0.0
        %v3450 = vand.u32 %v738, 4294901760
        %3451 = vmatmul.mubr.f32.gmra.mrb[0].mxu0 %v3450
        %v3452 = vpop.f32.mrb[0].mxu0
        %v3453 = vadd.f32 %v3068, %v3452
        %v3454 = vpop.f32.mrb[0].mxu0
        %3455 = vmatprep.mubr.f32.mxu0 0.0
        %v3456 = vand.u32 %v739, 4294901760
        %3457 = vmatmul.mubr.f32.gmra.mrb[0].mxu0 %v3456
        %v3458 = vpop.f32.mrb[0].mxu0
        %v3459 = vadd.f32 %v3078, %v3458
        %v3460 = vpop.f32.mrb[0].mxu0
        %3461 = vmatprep.mubr.f32.mxu0 0.0
        %v3462 = vand.u32 %v740, 4294901760
        %3463 = vmatmul.mubr.f32.gmra.mrb[0].mxu0 %v3462
        %v3464 = vpop.f32.mrb[0].mxu0
        %v3465 = vadd.f32 %v3088, %v3464
        %v3466 = vpop.f32.mrb[0].mxu0
        %3467 = vmatprep.mubr.f32.mxu0 0.0
        %v3468 = vand.u32 %v741, 4294901760
        %3469 = vmatmul.mubr.f32.gmra.mrb[0].mxu0 %v3468
        %v3470 = vpop.f32.mrb[0].mxu0
        %v3471 = vadd.f32 %v3098, %v3470
        %v3472 = vpop.f32.mrb[0].mxu0
        %3473 = vmatprep.mubr.f32.mxu0 0.0
        %v3474 = vand.u32 %v742, 4294901760
        %3475 = vmatmul.mubr.f32.gmra.mrb[0].mxu0 %v3474
        %v3476 = vpop.f32.mrb[0].mxu0
        %v3477 = vadd.f32 %v3108, %v3476
        %v3478 = vpop.f32.mrb[0].mxu0
        %3479 = vmatprep.mubr.f32.mxu0 0.0
        %v3480 = vand.u32 %v743, 4294901760
        %3481 = vmatmul.mubr.f32.gmra.mrb[0].mxu0 %v3480
        %v3482 = vpop.f32.mrb[0].mxu0
        %v3483 = vadd.f32 %v3118, %v3482
        %v3484 = vpop.f32.mrb[0].mxu0
        %3485 = vmatprep.mubr.f32.mxu0 0.0
        %v3486 = vand.u32 %v744, 4294901760
        %3487 = vmatmul.mubr.f32.gmra.mrb[0].mxu0 %v3486
        %v3488 = vpop.f32.mrb[0].mxu0
        %v3489 = vadd.f32 %v3128, %v3488
        %v3490 = vpop.f32.mrb[0].mxu0
        %3491 = vmatprep.mubr.f32.mxu0 0.0
        %v3492 = vand.u32 %v745, 4294901760
        %3493 = vmatmul.mubr.f32.gmra.mrb[0].mxu0 %v3492
        %v3494 = vpop.f32.mrb[0].mxu0
        %v3495 = vadd.f32 %v3138, %v3494
        %v3496 = vpop.f32.mrb[0].mxu0
        %3497 = vmatprep.mubr.f32.mxu0 0.0
        %v3498 = vand.u32 %v746, 4294901760
        %3499 = vmatmul.mubr.f32.gmra.mrb[0].mxu0 %v3498
        %v3500 = vpop.f32.mrb[0].mxu0
        %v3501 = vadd.f32 %v3148, %v3500
        %v3502 = vpop.f32.mrb[0].mxu0
        %3503 = vmatprep.mubr.f32.mxu0 0.0
        %v3504 = vand.u32 %v747, 4294901760
        %3505 = vmatmul.mubr.f32.gmra.mrb[0].mxu0 %v3504
        %v3506 = vpop.f32.mrb[0].mxu0
        %v3507 = vadd.f32 %v3158, %v3506
        %v3508 = vpop.f32.mrb[0].mxu0
        %3509 = vmatprep.mubr.f32.mxu0 0.0
        %v3510 = vand.u32 %v748, 4294901760
        %3511 = vmatmul.mubr.f32.gmra.mrb[0].mxu0 %v3510
        %v3512 = vpop.f32.mrb[0].mxu0
        %v3513 = vadd.f32 %v3168, %v3512
        %v3514 = vpop.f32.mrb[0].mxu0
        %3515 = vmatprep.mubr.f32.mxu0 0.0
        %v3516 = vand.u32 %v749, 4294901760
        %3517 = vmatmul.mubr.f32.gmra.mrb[0].mxu0 %v3516
        %v3518 = vpop.f32.mrb[0].mxu0
        %v3519 = vadd.f32 %v3178, %v3518
        %v3520 = vpop.f32.mrb[0].mxu0
        %3521 = vmatprep.mubr.f32.mxu0 0.0
        %v3522 = vand.u32 %v750, 4294901760
        %3523 = vmatmul.mubr.f32.gmra.mrb[0].mxu0 %v3522
        %v3524 = vpop.f32.mrb[0].mxu0
        %v3525 = vadd.f32 %v3188, %v3524
        %v3526 = vpop.f32.mrb[0].mxu0
        %3527 = vdwg.mxu0
        %3528 = vmatprep.subr.mxu0 0.0
        %v3529 = vand.u32 %v2774, 4294901760
        %v3530 = vsub.f32 %v2774, %v3529
        %3531 = vmatpush1.msra.mxu0 %v3530
        %3532 = vmatprep.subr.mxu0 0.0
        %v3533 = vand.u32 %v2775, 4294901760
        %v3534 = vsub.f32 %v2775, %v3533
        %3535 = vmatpush1.msra.mxu0 %v3534
        %3536 = vmatprep.subr.mxu0 0.0
        %v3537 = vand.u32 %v2776, 4294901760
        %v3538 = vsub.f32 %v2776, %v3537
        %3539 = vmatpush1.msra.mxu0 %v3538
        %3540 = vmatprep.subr.mxu0 0.0
        %v3541 = vand.u32 %v2777, 4294901760
        %v3542 = vsub.f32 %v2777, %v3541
        %3543 = vmatpush1.msra.mxu0 %v3542
        %3544 = vmatprep.subr.mxu0 0.0
        %v3545 = vand.u32 %v2778, 4294901760
        %v3546 = vsub.f32 %v2778, %v3545
        %3547 = vmatpush1.msra.mxu0 %v3546
        %3548 = vmatprep.subr.mxu0 0.0
        %v3549 = vand.u32 %v2779, 4294901760
        %v3550 = vsub.f32 %v2779, %v3549
        %3551 = vmatpush1.msra.mxu0 %v3550
        %3552 = vmatprep.subr.mxu0 0.0
        %v3553 = vand.u32 %v2780, 4294901760
        %v3554 = vsub.f32 %v2780, %v3553
        %3555 = vmatpush1.msra.mxu0 %v3554
        %3556 = vmatprep.subr.mxu0 0.0
        %v3557 = vand.u32 %v2781, 4294901760
        %v3558 = vsub.f32 %v2781, %v3557
        %3559 = vmatpush1.msra.mxu0 %v3558
        %3560 = vmatprep.subr.mxu0 0.0
        %v3561 = vand.u32 %v2782, 4294901760
        %v3562 = vsub.f32 %v2782, %v3561
        %3563 = vmatpush1.msra.mxu0 %v3562
        %3564 = vmatprep.subr.mxu0 0.0
        %v3565 = vand.u32 %v2783, 4294901760
        %v3566 = vsub.f32 %v2783, %v3565
        %3567 = vmatpush1.msra.mxu0 %v3566
        %3568 = vmatprep.subr.mxu0 0.0
        %v3569 = vand.u32 %v2784, 4294901760
        %v3570 = vsub.f32 %v2784, %v3569
        %3571 = vmatpush1.msra.mxu0 %v3570
        %3572 = vmatprep.subr.mxu0 0.0
        %v3573 = vand.u32 %v2785, 4294901760
        %v3574 = vsub.f32 %v2785, %v3573
        %3575 = vmatpush1.msra.mxu0 %v3574
        %3576 = vmatprep.subr.mxu0 0.0
        %v3577 = vand.u32 %v2786, 4294901760
        %v3578 = vsub.f32 %v2786, %v3577
        %3579 = vmatpush1.msra.mxu0 %v3578
        %3580 = vmatprep.subr.mxu0 0.0
        %v3581 = vand.u32 %v2787, 4294901760
        %v3582 = vsub.f32 %v2787, %v3581
        %3583 = vmatpush1.msra.mxu0 %v3582
        %3584 = vmatprep.subr.mxu0 0.0
        %v3585 = vand.u32 %v2788, 4294901760
        %v3586 = vsub.f32 %v2788, %v3585
        %3587 = vmatpush1.msra.mxu0 %v3586
        %3588 = vmatprep.subr.mxu0 0.0
        %v3589 = vand.u32 %v2789, 4294901760
        %v3590 = vsub.f32 %v2789, %v3589
        %3591 = vmatpush1.msra.mxu0 %v3590
        %3592 = vmatprep.subr.mxu0 0.0
        %3593 = vmatpush1.msra.mxu0 0.0
        %3594 = vmatprep.subr.mxu0 0.0
        %3595 = vmatpush1.msra.mxu0 0.0
        %3596 = vmatprep.subr.mxu0 0.0
        %3597 = vmatpush1.msra.mxu0 0.0
        %3598 = vmatprep.subr.mxu0 0.0
        %3599 = vmatpush1.msra.mxu0 0.0
        %3600 = vmatprep.subr.mxu0 0.0
        %3601 = vmatpush1.msra.mxu0 0.0
        %3602 = vmatprep.subr.mxu0 0.0
        %3603 = vmatpush1.msra.mxu0 0.0
        %3604 = vmatprep.subr.mxu0 0.0
        %3605 = vmatpush1.msra.mxu0 0.0
        %3606 = vmatprep.subr.mxu0 0.0
        %3607 = vmatpush1.msra.mxu0 0.0
        %3608 = vmatprep.subr.mxu0 0.0
        %3609 = vmatpush1.msra.mxu0 0.0
        %3610 = vmatprep.subr.mxu0 0.0
        %3611 = vmatpush1.msra.mxu0 0.0
        %3612 = vmatprep.subr.mxu0 0.0
        %3613 = vmatpush1.msra.mxu0 0.0
        %3614 = vmatprep.subr.mxu0 0.0
        %3615 = vmatpush1.msra.mxu0 0.0
        %3616 = vmatprep.subr.mxu0 0.0
        %3617 = vmatpush1.msra.mxu0 0.0
        %3618 = vmatprep.subr.mxu0 0.0
        %3619 = vmatpush1.msra.mxu0 0.0
        %3620 = vmatprep.subr.mxu0 0.0
        %3621 = vmatpush1.msra.mxu0 0.0
        %3622 = vmatprep.subr.mxu0 0.0
        %3623 = vmatpush1.msra.mxu0 0.0
        %3624 = vmatprep.mubr.f32.mxu0 0.0
        %v3625 = vand.u32 %v719, 4294901760
        %v3626 = vsub.f32 %v719, %v3625
        %3627 = vmatmul.mubr.f32.gmra.mrb[0].mxu0 %v3626
        %v3628 = vpop.f32.mrb[0].mxu0
        %v3629 = vadd.f32 %v3339, %v3628
        %v3630 = vpop.f32.mrb[0].mxu0
        %3631 = vmatprep.mubr.f32.mxu0 0.0
        %v3632 = vand.u32 %v720, 4294901760
        %v3633 = vsub.f32 %v720, %v3632
        %3634 = vmatmul.mubr.f32.gmra.mrb[0].mxu0 %v3633
        %v3635 = vpop.f32.mrb[0].mxu0
        %v3636 = vadd.f32 %v3345, %v3635
        %v3637 = vpop.f32.mrb[0].mxu0
        %3638 = vmatprep.mubr.f32.mxu0 0.0
        %v3639 = vand.u32 %v721, 4294901760
        %v3640 = vsub.f32 %v721, %v3639
        %3641 = vmatmul.mubr.f32.gmra.mrb[0].mxu0 %v3640
        %v3642 = vpop.f32.mrb[0].mxu0
        %v3643 = vadd.f32 %v3351, %v3642
        %v3644 = vpop.f32.mrb[0].mxu0
        %3645 = vmatprep.mubr.f32.mxu0 0.0
        %v3646 = vand.u32 %v722, 4294901760
        %v3647 = vsub.f32 %v722, %v3646
        %3648 = vmatmul.mubr.f32.gmra.mrb[0].mxu0 %v3647
        %v3649 = vpop.f32.mrb[0].mxu0
        %v3650 = vadd.f32 %v3357, %v3649
        %v3651 = vpop.f32.mrb[0].mxu0
        %3652 = vmatprep.mubr.f32.mxu0 0.0
        %v3653 = vand.u32 %v723, 4294901760
        %v3654 = vsub.f32 %v723, %v3653
        %3655 = vmatmul.mubr.f32.gmra.mrb[0].mxu0 %v3654
        %v3656 = vpop.f32.mrb[0].mxu0
        %v3657 = vadd.f32 %v3363, %v3656
        %v3658 = vpop.f32.mrb[0].mxu0
        %3659 = vmatprep.mubr.f32.mxu0 0.0
        %v3660 = vand.u32 %v724, 4294901760
        %v3661 = vsub.f32 %v724, %v3660
        %3662 = vmatmul.mubr.f32.gmra.mrb[0].mxu0 %v3661
        %v3663 = vpop.f32.mrb[0].mxu0
        %v3664 = vadd.f32 %v3369, %v3663
        %v3665 = vpop.f32.mrb[0].mxu0
        %3666 = vmatprep.mubr.f32.mxu0 0.0
        %v3667 = vand.u32 %v725, 4294901760
        %v3668 = vsub.f32 %v725, %v3667
        %3669 = vmatmul.mubr.f32.gmra.mrb[0].mxu0 %v3668
        %v3670 = vpop.f32.mrb[0].mxu0
        %v3671 = vadd.f32 %v3375, %v3670
        %v3672 = vpop.f32.mrb[0].mxu0
        %3673 = vmatprep.mubr.f32.mxu0 0.0
        %v3674 = vand.u32 %v726, 4294901760
        %v3675 = vsub.f32 %v726, %v3674
        %3676 = vmatmul.mubr.f32.gmra.mrb[0].mxu0 %v3675
        %v3677 = vpop.f32.mrb[0].mxu0
        %v3678 = vadd.f32 %v3381, %v3677
        %v3679 = vpop.f32.mrb[0].mxu0
        %3680 = vmatprep.mubr.f32.mxu0 0.0
        %v3681 = vand.u32 %v727, 4294901760
        %v3682 = vsub.f32 %v727, %v3681
        %3683 = vmatmul.mubr.f32.gmra.mrb[0].mxu0 %v3682
        %v3684 = vpop.f32.mrb[0].mxu0
        %v3685 = vadd.f32 %v3387, %v3684
        %v3686 = vpop.f32.mrb[0].mxu0
        %3687 = vmatprep.mubr.f32.mxu0 0.0
        %v3688 = vand.u32 %v728, 4294901760
        %v3689 = vsub.f32 %v728, %v3688
        %3690 = vmatmul.mubr.f32.gmra.mrb[0].mxu0 %v3689
        %v3691 = vpop.f32.mrb[0].mxu0
        %v3692 = vadd.f32 %v3393, %v3691
        %v3693 = vpop.f32.mrb[0].mxu0
        %3694 = vmatprep.mubr.f32.mxu0 0.0
        %v3695 = vand.u32 %v729, 4294901760
        %v3696 = vsub.f32 %v729, %v3695
        %3697 = vmatmul.mubr.f32.gmra.mrb[0].mxu0 %v3696
        %v3698 = vpop.f32.mrb[0].mxu0
        %v3699 = vadd.f32 %v3399, %v3698
        %v3700 = vpop.f32.mrb[0].mxu0
        %3701 = vmatprep.mubr.f32.mxu0 0.0
        %v3702 = vand.u32 %v730, 4294901760
        %v3703 = vsub.f32 %v730, %v3702
        %3704 = vmatmul.mubr.f32.gmra.mrb[0].mxu0 %v3703
        %v3705 = vpop.f32.mrb[0].mxu0
        %v3706 = vadd.f32 %v3405, %v3705
        %v3707 = vpop.f32.mrb[0].mxu0
        %3708 = vmatprep.mubr.f32.mxu0 0.0
        %v3709 = vand.u32 %v731, 4294901760
        %v3710 = vsub.f32 %v731, %v3709
        %3711 = vmatmul.mubr.f32.gmra.mrb[0].mxu0 %v3710
        %v3712 = vpop.f32.mrb[0].mxu0
        %v3713 = vadd.f32 %v3411, %v3712
        %v3714 = vpop.f32.mrb[0].mxu0
        %3715 = vmatprep.mubr.f32.mxu0 0.0
        %v3716 = vand.u32 %v732, 4294901760
        %v3717 = vsub.f32 %v732, %v3716
        %3718 = vmatmul.mubr.f32.gmra.mrb[0].mxu0 %v3717
        %v3719 = vpop.f32.mrb[0].mxu0
        %v3720 = vadd.f32 %v3417, %v3719
        %v3721 = vpop.f32.mrb[0].mxu0
        %3722 = vmatprep.mubr.f32.mxu0 0.0
        %v3723 = vand.u32 %v733, 4294901760
        %v3724 = vsub.f32 %v733, %v3723
        %3725 = vmatmul.mubr.f32.gmra.mrb[0].mxu0 %v3724
        %v3726 = vpop.f32.mrb[0].mxu0
        %v3727 = vadd.f32 %v3423, %v3726
        %v3728 = vpop.f32.mrb[0].mxu0
        %3729 = vmatprep.mubr.f32.mxu0 0.0
        %v3730 = vand.u32 %v734, 4294901760
        %v3731 = vsub.f32 %v734, %v3730
        %3732 = vmatmul.mubr.f32.gmra.mrb[0].mxu0 %v3731
        %v3733 = vpop.f32.mrb[0].mxu0
        %v3734 = vadd.f32 %v3429, %v3733
        %v3735 = vpop.f32.mrb[0].mxu0
        %3736 = vmatprep.mubr.f32.mxu0 0.0
        %v3737 = vand.u32 %v735, 4294901760
        %v3738 = vsub.f32 %v735, %v3737
        %3739 = vmatmul.mubr.f32.gmra.mrb[0].mxu0 %v3738
        %v3740 = vpop.f32.mrb[0].mxu0
        %v3741 = vadd.f32 %v3435, %v3740
        %v3742 = vpop.f32.mrb[0].mxu0
        %3743 = vmatprep.mubr.f32.mxu0 0.0
        %v3744 = vand.u32 %v736, 4294901760
        %v3745 = vsub.f32 %v736, %v3744
        %3746 = vmatmul.mubr.f32.gmra.mrb[0].mxu0 %v3745
        %v3747 = vpop.f32.mrb[0].mxu0
        %v3748 = vadd.f32 %v3441, %v3747
        %v3749 = vpop.f32.mrb[0].mxu0
        %3750 = vmatprep.mubr.f32.mxu0 0.0
        %v3751 = vand.u32 %v737, 4294901760
        %v3752 = vsub.f32 %v737, %v3751
        %3753 = vmatmul.mubr.f32.gmra.mrb[0].mxu0 %v3752
        %v3754 = vpop.f32.mrb[0].mxu0
        %v3755 = vadd.f32 %v3447, %v3754
        %v3756 = vpop.f32.mrb[0].mxu0
        %3757 = vmatprep.mubr.f32.mxu0 0.0
        %v3758 = vand.u32 %v738, 4294901760
        %v3759 = vsub.f32 %v738, %v3758
        %3760 = vmatmul.mubr.f32.gmra.mrb[0].mxu0 %v3759
        %v3761 = vpop.f32.mrb[0].mxu0
        %v3762 = vadd.f32 %v3453, %v3761
        %v3763 = vpop.f32.mrb[0].mxu0
        %3764 = vmatprep.mubr.f32.mxu0 0.0
        %v3765 = vand.u32 %v739, 4294901760
        %v3766 = vsub.f32 %v739, %v3765
        %3767 = vmatmul.mubr.f32.gmra.mrb[0].mxu0 %v3766
        %v3768 = vpop.f32.mrb[0].mxu0
        %v3769 = vadd.f32 %v3459, %v3768
        %v3770 = vpop.f32.mrb[0].mxu0
        %3771 = vmatprep.mubr.f32.mxu0 0.0
        %v3772 = vand.u32 %v740, 4294901760
        %v3773 = vsub.f32 %v740, %v3772
        %3774 = vmatmul.mubr.f32.gmra.mrb[0].mxu0 %v3773
        %v3775 = vpop.f32.mrb[0].mxu0
        %v3776 = vadd.f32 %v3465, %v3775
        %v3777 = vpop.f32.mrb[0].mxu0
        %3778 = vmatprep.mubr.f32.mxu0 0.0
        %v3779 = vand.u32 %v741, 4294901760
        %v3780 = vsub.f32 %v741, %v3779
        %3781 = vmatmul.mubr.f32.gmra.mrb[0].mxu0 %v3780
        %v3782 = vpop.f32.mrb[0].mxu0
        %v3783 = vadd.f32 %v3471, %v3782
        %v3784 = vpop.f32.mrb[0].mxu0
        %3785 = vmatprep.mubr.f32.mxu0 0.0
        %v3786 = vand.u32 %v742, 4294901760
        %v3787 = vsub.f32 %v742, %v3786
        %3788 = vmatmul.mubr.f32.gmra.mrb[0].mxu0 %v3787
        %v3789 = vpop.f32.mrb[0].mxu0
        %v3790 = vadd.f32 %v3477, %v3789
        %v3791 = vpop.f32.mrb[0].mxu0
        %3792 = vmatprep.mubr.f32.mxu0 0.0
        %v3793 = vand.u32 %v743, 4294901760
        %v3794 = vsub.f32 %v743, %v3793
        %3795 = vmatmul.mubr.f32.gmra.mrb[0].mxu0 %v3794
        %v3796 = vpop.f32.mrb[0].mxu0
        %v3797 = vadd.f32 %v3483, %v3796
        %v3798 = vpop.f32.mrb[0].mxu0
        %3799 = vmatprep.mubr.f32.mxu0 0.0
        %v3800 = vand.u32 %v744, 4294901760
        %v3801 = vsub.f32 %v744, %v3800
        %3802 = vmatmul.mubr.f32.gmra.mrb[0].mxu0 %v3801
        %v3803 = vpop.f32.mrb[0].mxu0
        %v3804 = vadd.f32 %v3489, %v3803
        %v3805 = vpop.f32.mrb[0].mxu0
        %3806 = vmatprep.mubr.f32.mxu0 0.0
        %v3807 = vand.u32 %v745, 4294901760
        %v3808 = vsub.f32 %v745, %v3807
        %3809 = vmatmul.mubr.f32.gmra.mrb[0].mxu0 %v3808
        %v3810 = vpop.f32.mrb[0].mxu0
        %v3811 = vadd.f32 %v3495, %v3810
        %v3812 = vpop.f32.mrb[0].mxu0
        %3813 = vmatprep.mubr.f32.mxu0 0.0
        %v3814 = vand.u32 %v746, 4294901760
        %v3815 = vsub.f32 %v746, %v3814
        %3816 = vmatmul.mubr.f32.gmra.mrb[0].mxu0 %v3815
        %v3817 = vpop.f32.mrb[0].mxu0
        %v3818 = vadd.f32 %v3501, %v3817
        %v3819 = vpop.f32.mrb[0].mxu0
        %3820 = vmatprep.mubr.f32.mxu0 0.0
        %v3821 = vand.u32 %v747, 4294901760
        %v3822 = vsub.f32 %v747, %v3821
        %3823 = vmatmul.mubr.f32.gmra.mrb[0].mxu0 %v3822
        %v3824 = vpop.f32.mrb[0].mxu0
        %v3825 = vadd.f32 %v3507, %v3824
        %v3826 = vpop.f32.mrb[0].mxu0
        %3827 = vmatprep.mubr.f32.mxu0 0.0
        %v3828 = vand.u32 %v748, 4294901760
        %v3829 = vsub.f32 %v748, %v3828
        %3830 = vmatmul.mubr.f32.gmra.mrb[0].mxu0 %v3829
        %v3831 = vpop.f32.mrb[0].mxu0
        %v3832 = vadd.f32 %v3513, %v3831
        %v3833 = vpop.f32.mrb[0].mxu0
        %3834 = vmatprep.mubr.f32.mxu0 0.0
        %v3835 = vand.u32 %v749, 4294901760
        %v3836 = vsub.f32 %v749, %v3835
        %3837 = vmatmul.mubr.f32.gmra.mrb[0].mxu0 %v3836
        %v3838 = vpop.f32.mrb[0].mxu0
        %v3839 = vadd.f32 %v3519, %v3838
        %v3840 = vpop.f32.mrb[0].mxu0
        %3841 = vmatprep.mubr.f32.mxu0 0.0
        %v3842 = vand.u32 %v750, 4294901760
        %v3843 = vsub.f32 %v750, %v3842
        %3844 = vmatmul.mubr.f32.gmra.mrb[0].mxu0 %v3843
        %v3845 = vpop.f32.mrb[0].mxu0
        %v3846 = vadd.f32 %v3525, %v3845
        %v3847 = vpop.f32.mrb[0].mxu0
        %3848 = vdwg.mxu0
        %3849 = vmatprep.subr.mxu0 0.0
        %v3850 = vand.u32 %v2774, 4294901760
        %3851 = vmatpush1.msra.mxu0 %v3850
        %3852 = vmatprep.subr.mxu0 0.0
        %v3853 = vand.u32 %v2775, 4294901760
        %3854 = vmatpush1.msra.mxu0 %v3853
        %3855 = vmatprep.subr.mxu0 0.0
        %v3856 = vand.u32 %v2776, 4294901760
        %3857 = vmatpush1.msra.mxu0 %v3856
        %3858 = vmatprep.subr.mxu0 0.0
        %v3859 = vand.u32 %v2777, 4294901760
        %3860 = vmatpush1.msra.mxu0 %v3859
        %3861 = vmatprep.subr.mxu0 0.0
        %v3862 = vand.u32 %v2778, 4294901760
        %3863 = vmatpush1.msra.mxu0 %v3862
        %3864 = vmatprep.subr.mxu0 0.0
        %v3865 = vand.u32 %v2779, 4294901760
        %3866 = vmatpush1.msra.mxu0 %v3865
        %3867 = vmatprep.subr.mxu0 0.0
        %v3868 = vand.u32 %v2780, 4294901760
        %3869 = vmatpush1.msra.mxu0 %v3868
        %3870 = vmatprep.subr.mxu0 0.0
        %v3871 = vand.u32 %v2781, 4294901760
        %3872 = vmatpush1.msra.mxu0 %v3871
        %3873 = vmatprep.subr.mxu0 0.0
        %v3874 = vand.u32 %v2782, 4294901760
        %3875 = vmatpush1.msra.mxu0 %v3874
        %3876 = vmatprep.subr.mxu0 0.0
        %v3877 = vand.u32 %v2783, 4294901760
        %3878 = vmatpush1.msra.mxu0 %v3877
        %3879 = vmatprep.subr.mxu0 0.0
        %v3880 = vand.u32 %v2784, 4294901760
        %3881 = vmatpush1.msra.mxu0 %v3880
        %3882 = vmatprep.subr.mxu0 0.0
        %v3883 = vand.u32 %v2785, 4294901760
        %3884 = vmatpush1.msra.mxu0 %v3883
        %3885 = vmatprep.subr.mxu0 0.0
        %v3886 = vand.u32 %v2786, 4294901760
        %3887 = vmatpush1.msra.mxu0 %v3886
        %3888 = vmatprep.subr.mxu0 0.0
        %v3889 = vand.u32 %v2787, 4294901760
        %3890 = vmatpush1.msra.mxu0 %v3889
        %3891 = vmatprep.subr.mxu0 0.0
        %v3892 = vand.u32 %v2788, 4294901760
        %3893 = vmatpush1.msra.mxu0 %v3892
        %3894 = vmatprep.subr.mxu0 0.0
        %v3895 = vand.u32 %v2789, 4294901760
        %3896 = vmatpush1.msra.mxu0 %v3895
        %3897 = vmatprep.subr.mxu0 0.0
        %3898 = vmatpush1.msra.mxu0 0.0
        %3899 = vmatprep.subr.mxu0 0.0
        %3900 = vmatpush1.msra.mxu0 0.0
        %3901 = vmatprep.subr.mxu0 0.0
        %3902 = vmatpush1.msra.mxu0 0.0
        %3903 = vmatprep.subr.mxu0 0.0
        %3904 = vmatpush1.msra.mxu0 0.0
        %3905 = vmatprep.subr.mxu0 0.0
        %3906 = vmatpush1.msra.mxu0 0.0
        %3907 = vmatprep.subr.mxu0 0.0
        %3908 = vmatpush1.msra.mxu0 0.0
        %3909 = vmatprep.subr.mxu0 0.0
        %3910 = vmatpush1.msra.mxu0 0.0
        %3911 = vmatprep.subr.mxu0 0.0
        %3912 = vmatpush1.msra.mxu0 0.0
        %3913 = vmatprep.subr.mxu0 0.0
        %3914 = vmatpush1.msra.mxu0 0.0
        %3915 = vmatprep.subr.mxu0 0.0
        %3916 = vmatpush1.msra.mxu0 0.0
        %3917 = vmatprep.subr.mxu0 0.0
        %3918 = vmatpush1.msra.mxu0 0.0
        %3919 = vmatprep.subr.mxu0 0.0
        %3920 = vmatpush1.msra.mxu0 0.0
        %3921 = vmatprep.subr.mxu0 0.0
        %3922 = vmatpush1.msra.mxu0 0.0
        %3923 = vmatprep.subr.mxu0 0.0
        %3924 = vmatpush1.msra.mxu0 0.0
        %3925 = vmatprep.subr.mxu0 0.0
        %3926 = vmatpush1.msra.mxu0 0.0
        %3927 = vmatprep.subr.mxu0 0.0
        %3928 = vmatpush1.msra.mxu0 0.0
        %3929 = vmatprep.mubr.f32.mxu0 0.0
        %v3930 = vand.u32 %v719, 4294901760
        %v3931 = vsub.f32 %v719, %v3930
        %v3932 = vand.u32 %v3931, 4294901760
        %3933 = vmatmul.mubr.f32.gmra.mrb[0].mxu0 %v3932
        %v3934 = vpop.f32.mrb[0].mxu0
        %v3935 = vadd.f32 %v3629, %v3934
        %v3936 = vpop.f32.mrb[0].mxu0
        %3937 = vmatprep.mubr.f32.mxu0 0.0
        %v3938 = vand.u32 %v720, 4294901760
        %v3939 = vsub.f32 %v720, %v3938
        %v3940 = vand.u32 %v3939, 4294901760
        %3941 = vmatmul.mubr.f32.gmra.mrb[0].mxu0 %v3940
        %v3942 = vpop.f32.mrb[0].mxu0
        %v3943 = vadd.f32 %v3636, %v3942
        %v3944 = vpop.f32.mrb[0].mxu0
        %3945 = vmatprep.mubr.f32.mxu0 0.0
        %v3946 = vand.u32 %v721, 4294901760
        %v3947 = vsub.f32 %v721, %v3946
        %v3948 = vand.u32 %v3947, 4294901760
        %3949 = vmatmul.mubr.f32.gmra.mrb[0].mxu0 %v3948
        %v3950 = vpop.f32.mrb[0].mxu0
        %v3951 = vadd.f32 %v3643, %v3950
        %v3952 = vpop.f32.mrb[0].mxu0
        %3953 = vmatprep.mubr.f32.mxu0 0.0
        %v3954 = vand.u32 %v722, 4294901760
        %v3955 = vsub.f32 %v722, %v3954
        %v3956 = vand.u32 %v3955, 4294901760
        %3957 = vmatmul.mubr.f32.gmra.mrb[0].mxu0 %v3956
        %v3958 = vpop.f32.mrb[0].mxu0
        %v3959 = vadd.f32 %v3650, %v3958
        %v3960 = vpop.f32.mrb[0].mxu0
        %3961 = vmatprep.mubr.f32.mxu0 0.0
        %v3962 = vand.u32 %v723, 4294901760
        %v3963 = vsub.f32 %v723, %v3962
        %v3964 = vand.u32 %v3963, 4294901760
        %3965 = vmatmul.mubr.f32.gmra.mrb[0].mxu0 %v3964
        %v3966 = vpop.f32.mrb[0].mxu0
        %v3967 = vadd.f32 %v3657, %v3966
        %v3968 = vpop.f32.mrb[0].mxu0
        %3969 = vmatprep.mubr.f32.mxu0 0.0
        %v3970 = vand.u32 %v724, 4294901760
        %v3971 = vsub.f32 %v724, %v3970
        %v3972 = vand.u32 %v3971, 4294901760
        %3973 = vmatmul.mubr.f32.gmra.mrb[0].mxu0 %v3972
        %v3974 = vpop.f32.mrb[0].mxu0
        %v3975 = vadd.f32 %v3664, %v3974
        %v3976 = vpop.f32.mrb[0].mxu0
        %3977 = vmatprep.mubr.f32.mxu0 0.0
        %v3978 = vand.u32 %v725, 4294901760
        %v3979 = vsub.f32 %v725, %v3978
        %v3980 = vand.u32 %v3979, 4294901760
        %3981 = vmatmul.mubr.f32.gmra.mrb[0].mxu0 %v3980
        %v3982 = vpop.f32.mrb[0].mxu0
        %v3983 = vadd.f32 %v3671, %v3982
        %v3984 = vpop.f32.mrb[0].mxu0
        %3985 = vmatprep.mubr.f32.mxu0 0.0
        %v3986 = vand.u32 %v726, 4294901760
        %v3987 = vsub.f32 %v726, %v3986
        %v3988 = vand.u32 %v3987, 4294901760
        %3989 = vmatmul.mubr.f32.gmra.mrb[0].mxu0 %v3988
        %v3990 = vpop.f32.mrb[0].mxu0
        %v3991 = vadd.f32 %v3678, %v3990
        %v3992 = vpop.f32.mrb[0].mxu0
        %3993 = vmatprep.mubr.f32.mxu0 0.0
        %v3994 = vand.u32 %v727, 4294901760
        %v3995 = vsub.f32 %v727, %v3994
        %v3996 = vand.u32 %v3995, 4294901760
        %3997 = vmatmul.mubr.f32.gmra.mrb[0].mxu0 %v3996
        %v3998 = vpop.f32.mrb[0].mxu0
        %v3999 = vadd.f32 %v3685, %v3998
        %v4000 = vpop.f32.mrb[0].mxu0
        %4001 = vmatprep.mubr.f32.mxu0 0.0
        %v4002 = vand.u32 %v728, 4294901760
        %v4003 = vsub.f32 %v728, %v4002
        %v4004 = vand.u32 %v4003, 4294901760
        %4005 = vmatmul.mubr.f32.gmra.mrb[0].mxu0 %v4004
        %v4006 = vpop.f32.mrb[0].mxu0
        %v4007 = vadd.f32 %v3692, %v4006
        %v4008 = vpop.f32.mrb[0].mxu0
        %4009 = vmatprep.mubr.f32.mxu0 0.0
        %v4010 = vand.u32 %v729, 4294901760
        %v4011 = vsub.f32 %v729, %v4010
        %v4012 = vand.u32 %v4011, 4294901760
        %4013 = vmatmul.mubr.f32.gmra.mrb[0].mxu0 %v4012
        %v4014 = vpop.f32.mrb[0].mxu0
        %v4015 = vadd.f32 %v3699, %v4014
        %v4016 = vpop.f32.mrb[0].mxu0
        %4017 = vmatprep.mubr.f32.mxu0 0.0
        %v4018 = vand.u32 %v730, 4294901760
        %v4019 = vsub.f32 %v730, %v4018
        %v4020 = vand.u32 %v4019, 4294901760
        %4021 = vmatmul.mubr.f32.gmra.mrb[0].mxu0 %v4020
        %v4022 = vpop.f32.mrb[0].mxu0
        %v4023 = vadd.f32 %v3706, %v4022
        %v4024 = vpop.f32.mrb[0].mxu0
        %4025 = vmatprep.mubr.f32.mxu0 0.0
        %v4026 = vand.u32 %v731, 4294901760
        %v4027 = vsub.f32 %v731, %v4026
        %v4028 = vand.u32 %v4027, 4294901760
        %4029 = vmatmul.mubr.f32.gmra.mrb[0].mxu0 %v4028
        %v4030 = vpop.f32.mrb[0].mxu0
        %v4031 = vadd.f32 %v3713, %v4030
        %v4032 = vpop.f32.mrb[0].mxu0
        %4033 = vmatprep.mubr.f32.mxu0 0.0
        %v4034 = vand.u32 %v732, 4294901760
        %v4035 = vsub.f32 %v732, %v4034
        %v4036 = vand.u32 %v4035, 4294901760
        %4037 = vmatmul.mubr.f32.gmra.mrb[0].mxu0 %v4036
        %v4038 = vpop.f32.mrb[0].mxu0
        %v4039 = vadd.f32 %v3720, %v4038
        %v4040 = vpop.f32.mrb[0].mxu0
        %4041 = vmatprep.mubr.f32.mxu0 0.0
        %v4042 = vand.u32 %v733, 4294901760
        %v4043 = vsub.f32 %v733, %v4042
        %v4044 = vand.u32 %v4043, 4294901760
        %4045 = vmatmul.mubr.f32.gmra.mrb[0].mxu0 %v4044
        %v4046 = vpop.f32.mrb[0].mxu0
        %v4047 = vadd.f32 %v3727, %v4046
        %v4048 = vpop.f32.mrb[0].mxu0
        %4049 = vmatprep.mubr.f32.mxu0 0.0
        %v4050 = vand.u32 %v734, 4294901760
        %v4051 = vsub.f32 %v734, %v4050
        %v4052 = vand.u32 %v4051, 4294901760
        %4053 = vmatmul.mubr.f32.gmra.mrb[0].mxu0 %v4052
        %v4054 = vpop.f32.mrb[0].mxu0
        %v4055 = vadd.f32 %v3734, %v4054
        %v4056 = vpop.f32.mrb[0].mxu0
        %4057 = vmatprep.mubr.f32.mxu0 0.0
        %v4058 = vand.u32 %v735, 4294901760
        %v4059 = vsub.f32 %v735, %v4058
        %v4060 = vand.u32 %v4059, 4294901760
        %4061 = vmatmul.mubr.f32.gmra.mrb[0].mxu0 %v4060
        %v4062 = vpop.f32.mrb[0].mxu0
        %v4063 = vadd.f32 %v3741, %v4062
        %v4064 = vpop.f32.mrb[0].mxu0
        %4065 = vmatprep.mubr.f32.mxu0 0.0
        %v4066 = vand.u32 %v736, 4294901760
        %v4067 = vsub.f32 %v736, %v4066
        %v4068 = vand.u32 %v4067, 4294901760
        %4069 = vmatmul.mubr.f32.gmra.mrb[0].mxu0 %v4068
        %v4070 = vpop.f32.mrb[0].mxu0
        %v4071 = vadd.f32 %v3748, %v4070
        %v4072 = vpop.f32.mrb[0].mxu0
        %4073 = vmatprep.mubr.f32.mxu0 0.0
        %v4074 = vand.u32 %v737, 4294901760
        %v4075 = vsub.f32 %v737, %v4074
        %v4076 = vand.u32 %v4075, 4294901760
        %4077 = vmatmul.mubr.f32.gmra.mrb[0].mxu0 %v4076
        %v4078 = vpop.f32.mrb[0].mxu0
        %v4079 = vadd.f32 %v3755, %v4078
        %v4080 = vpop.f32.mrb[0].mxu0
        %4081 = vmatprep.mubr.f32.mxu0 0.0
        %v4082 = vand.u32 %v738, 4294901760
        %v4083 = vsub.f32 %v738, %v4082
        %v4084 = vand.u32 %v4083, 4294901760
        %4085 = vmatmul.mubr.f32.gmra.mrb[0].mxu0 %v4084
        %v4086 = vpop.f32.mrb[0].mxu0
        %v4087 = vadd.f32 %v3762, %v4086
        %v4088 = vpop.f32.mrb[0].mxu0
        %4089 = vmatprep.mubr.f32.mxu0 0.0
        %v4090 = vand.u32 %v739, 4294901760
        %v4091 = vsub.f32 %v739, %v4090
        %v4092 = vand.u32 %v4091, 4294901760
        %4093 = vmatmul.mubr.f32.gmra.mrb[0].mxu0 %v4092
        %v4094 = vpop.f32.mrb[0].mxu0
        %v4095 = vadd.f32 %v3769, %v4094
        %v4096 = vpop.f32.mrb[0].mxu0
        %4097 = vmatprep.mubr.f32.mxu0 0.0
        %v4098 = vand.u32 %v740, 4294901760
        %v4099 = vsub.f32 %v740, %v4098
        %v4100 = vand.u32 %v4099, 4294901760
        %4101 = vmatmul.mubr.f32.gmra.mrb[0].mxu0 %v4100
        %v4102 = vpop.f32.mrb[0].mxu0
        %v4103 = vadd.f32 %v3776, %v4102
        %v4104 = vpop.f32.mrb[0].mxu0
        %4105 = vmatprep.mubr.f32.mxu0 0.0
        %v4106 = vand.u32 %v741, 4294901760
        %v4107 = vsub.f32 %v741, %v4106
        %v4108 = vand.u32 %v4107, 4294901760
        %4109 = vmatmul.mubr.f32.gmra.mrb[0].mxu0 %v4108
        %v4110 = vpop.f32.mrb[0].mxu0
        %v4111 = vadd.f32 %v3783, %v4110
        %v4112 = vpop.f32.mrb[0].mxu0
        %4113 = vmatprep.mubr.f32.mxu0 0.0
        %v4114 = vand.u32 %v742, 4294901760
        %v4115 = vsub.f32 %v742, %v4114
        %v4116 = vand.u32 %v4115, 4294901760
        %4117 = vmatmul.mubr.f32.gmra.mrb[0].mxu0 %v4116
        %v4118 = vpop.f32.mrb[0].mxu0
        %v4119 = vadd.f32 %v3790, %v4118
        %v4120 = vpop.f32.mrb[0].mxu0
        %4121 = vmatprep.mubr.f32.mxu0 0.0
        %v4122 = vand.u32 %v743, 4294901760
        %v4123 = vsub.f32 %v743, %v4122
        %v4124 = vand.u32 %v4123, 4294901760
        %4125 = vmatmul.mubr.f32.gmra.mrb[0].mxu0 %v4124
        %v4126 = vpop.f32.mrb[0].mxu0
        %v4127 = vadd.f32 %v3797, %v4126
        %v4128 = vpop.f32.mrb[0].mxu0
        %4129 = vmatprep.mubr.f32.mxu0 0.0
        %v4130 = vand.u32 %v744, 4294901760
        %v4131 = vsub.f32 %v744, %v4130
        %v4132 = vand.u32 %v4131, 4294901760
        %4133 = vmatmul.mubr.f32.gmra.mrb[0].mxu0 %v4132
        %v4134 = vpop.f32.mrb[0].mxu0
        %v4135 = vadd.f32 %v3804, %v4134
        %v4136 = vpop.f32.mrb[0].mxu0
        %4137 = vmatprep.mubr.f32.mxu0 0.0
        %v4138 = vand.u32 %v745, 4294901760
        %v4139 = vsub.f32 %v745, %v4138
        %v4140 = vand.u32 %v4139, 4294901760
        %4141 = vmatmul.mubr.f32.gmra.mrb[0].mxu0 %v4140
        %v4142 = vpop.f32.mrb[0].mxu0
        %v4143 = vadd.f32 %v3811, %v4142
        %v4144 = vpop.f32.mrb[0].mxu0
        %4145 = vmatprep.mubr.f32.mxu0 0.0
        %v4146 = vand.u32 %v746, 4294901760
        %v4147 = vsub.f32 %v746, %v4146
        %v4148 = vand.u32 %v4147, 4294901760
        %4149 = vmatmul.mubr.f32.gmra.mrb[0].mxu0 %v4148
        %v4150 = vpop.f32.mrb[0].mxu0
        %v4151 = vadd.f32 %v3818, %v4150
        %v4152 = vpop.f32.mrb[0].mxu0
        %4153 = vmatprep.mubr.f32.mxu0 0.0
        %v4154 = vand.u32 %v747, 4294901760
        %v4155 = vsub.f32 %v747, %v4154
        %v4156 = vand.u32 %v4155, 4294901760
        %4157 = vmatmul.mubr.f32.gmra.mrb[0].mxu0 %v4156
        %v4158 = vpop.f32.mrb[0].mxu0
        %v4159 = vadd.f32 %v3825, %v4158
        %v4160 = vpop.f32.mrb[0].mxu0
        %4161 = vmatprep.mubr.f32.mxu0 0.0
        %v4162 = vand.u32 %v748, 4294901760
        %v4163 = vsub.f32 %v748, %v4162
        %v4164 = vand.u32 %v4163, 4294901760
        %4165 = vmatmul.mubr.f32.gmra.mrb[0].mxu0 %v4164
        %v4166 = vpop.f32.mrb[0].mxu0
        %v4167 = vadd.f32 %v3832, %v4166
        %v4168 = vpop.f32.mrb[0].mxu0
        %4169 = vmatprep.mubr.f32.mxu0 0.0
        %v4170 = vand.u32 %v749, 4294901760
        %v4171 = vsub.f32 %v749, %v4170
        %v4172 = vand.u32 %v4171, 4294901760
        %4173 = vmatmul.mubr.f32.gmra.mrb[0].mxu0 %v4172
        %v4174 = vpop.f32.mrb[0].mxu0
        %v4175 = vadd.f32 %v3839, %v4174
        %v4176 = vpop.f32.mrb[0].mxu0
        %4177 = vmatprep.mubr.f32.mxu0 0.0
        %v4178 = vand.u32 %v750, 4294901760
        %v4179 = vsub.f32 %v750, %v4178
        %v4180 = vand.u32 %v4179, 4294901760
        %4181 = vmatmul.mubr.f32.gmra.mrb[0].mxu0 %v4180
        %v4182 = vpop.f32.mrb[0].mxu0
        %v4183 = vadd.f32 %v3846, %v4182
        %v4184 = vpop.f32.mrb[0].mxu0
        %4185 = vdwg.mxu0
        %4186 = vmatprep.subr.mxu0 0.0
        %v4187 = vand.u32 %v2774, 4294901760
        %v4188 = vsub.f32 %v2774, %v4187
        %v4189 = vand.u32 %v4188, 4294901760
        %4190 = vmatpush1.msra.mxu0 %v4189
        %4191 = vmatprep.subr.mxu0 0.0
        %v4192 = vand.u32 %v2775, 4294901760
        %v4193 = vsub.f32 %v2775, %v4192
        %v4194 = vand.u32 %v4193, 4294901760
        %4195 = vmatpush1.msra.mxu0 %v4194
        %4196 = vmatprep.subr.mxu0 0.0
        %v4197 = vand.u32 %v2776, 4294901760
        %v4198 = vsub.f32 %v2776, %v4197
        %v4199 = vand.u32 %v4198, 4294901760
        %4200 = vmatpush1.msra.mxu0 %v4199
        %4201 = vmatprep.subr.mxu0 0.0
        %v4202 = vand.u32 %v2777, 4294901760
        %v4203 = vsub.f32 %v2777, %v4202
        %v4204 = vand.u32 %v4203, 4294901760
        %4205 = vmatpush1.msra.mxu0 %v4204
        %4206 = vmatprep.subr.mxu0 0.0
        %v4207 = vand.u32 %v2778, 4294901760
        %v4208 = vsub.f32 %v2778, %v4207
        %v4209 = vand.u32 %v4208, 4294901760
        %4210 = vmatpush1.msra.mxu0 %v4209
        %4211 = vmatprep.subr.mxu0 0.0
        %v4212 = vand.u32 %v2779, 4294901760
        %v4213 = vsub.f32 %v2779, %v4212
        %v4214 = vand.u32 %v4213, 4294901760
        %4215 = vmatpush1.msra.mxu0 %v4214
        %4216 = vmatprep.subr.mxu0 0.0
        %v4217 = vand.u32 %v2780, 4294901760
        %v4218 = vsub.f32 %v2780, %v4217
        %v4219 = vand.u32 %v4218, 4294901760
        %4220 = vmatpush1.msra.mxu0 %v4219
        %4221 = vmatprep.subr.mxu0 0.0
        %v4222 = vand.u32 %v2781, 4294901760
        %v4223 = vsub.f32 %v2781, %v4222
        %v4224 = vand.u32 %v4223, 4294901760
        %4225 = vmatpush1.msra.mxu0 %v4224
        %4226 = vmatprep.subr.mxu0 0.0
        %v4227 = vand.u32 %v2782, 4294901760
        %v4228 = vsub.f32 %v2782, %v4227
        %v4229 = vand.u32 %v4228, 4294901760
        %4230 = vmatpush1.msra.mxu0 %v4229
        %4231 = vmatprep.subr.mxu0 0.0
        %v4232 = vand.u32 %v2783, 4294901760
        %v4233 = vsub.f32 %v2783, %v4232
        %v4234 = vand.u32 %v4233, 4294901760
        %4235 = vmatpush1.msra.mxu0 %v4234
        %4236 = vmatprep.subr.mxu0 0.0
        %v4237 = vand.u32 %v2784, 4294901760
        %v4238 = vsub.f32 %v2784, %v4237
        %v4239 = vand.u32 %v4238, 4294901760
        %4240 = vmatpush1.msra.mxu0 %v4239
        %4241 = vmatprep.subr.mxu0 0.0
        %v4242 = vand.u32 %v2785, 4294901760
        %v4243 = vsub.f32 %v2785, %v4242
        %v4244 = vand.u32 %v4243, 4294901760
        %4245 = vmatpush1.msra.mxu0 %v4244
        %4246 = vmatprep.subr.mxu0 0.0
        %v4247 = vand.u32 %v2786, 4294901760
        %v4248 = vsub.f32 %v2786, %v4247
        %v4249 = vand.u32 %v4248, 4294901760
        %4250 = vmatpush1.msra.mxu0 %v4249
        %4251 = vmatprep.subr.mxu0 0.0
        %v4252 = vand.u32 %v2787, 4294901760
        %v4253 = vsub.f32 %v2787, %v4252
        %v4254 = vand.u32 %v4253, 4294901760
        %4255 = vmatpush1.msra.mxu0 %v4254
        %4256 = vmatprep.subr.mxu0 0.0
        %v4257 = vand.u32 %v2788, 4294901760
        %v4258 = vsub.f32 %v2788, %v4257
        %v4259 = vand.u32 %v4258, 4294901760
        %4260 = vmatpush1.msra.mxu0 %v4259
        %4261 = vmatprep.subr.mxu0 0.0
        %v4262 = vand.u32 %v2789, 4294901760
        %v4263 = vsub.f32 %v2789, %v4262
        %v4264 = vand.u32 %v4263, 4294901760
        %4265 = vmatpush1.msra.mxu0 %v4264
        %4266 = vmatprep.subr.mxu0 0.0
        %4267 = vmatpush1.msra.mxu0 0.0
        %4268 = vmatprep.subr.mxu0 0.0
        %4269 = vmatpush1.msra.mxu0 0.0
        %4270 = vmatprep.subr.mxu0 0.0
        %4271 = vmatpush1.msra.mxu0 0.0
        %4272 = vmatprep.subr.mxu0 0.0
        %4273 = vmatpush1.msra.mxu0 0.0
        %4274 = vmatprep.subr.mxu0 0.0
        %4275 = vmatpush1.msra.mxu0 0.0
        %4276 = vmatprep.subr.mxu0 0.0
        %4277 = vmatpush1.msra.mxu0 0.0
        %4278 = vmatprep.subr.mxu0 0.0
        %4279 = vmatpush1.msra.mxu0 0.0
        %4280 = vmatprep.subr.mxu0 0.0
        %4281 = vmatpush1.msra.mxu0 0.0
        %4282 = vmatprep.subr.mxu0 0.0
        %4283 = vmatpush1.msra.mxu0 0.0
        %4284 = vmatprep.subr.mxu0 0.0
        %4285 = vmatpush1.msra.mxu0 0.0
        %4286 = vmatprep.subr.mxu0 0.0
        %4287 = vmatpush1.msra.mxu0 0.0
        %4288 = vmatprep.subr.mxu0 0.0
        %4289 = vmatpush1.msra.mxu0 0.0
        %4290 = vmatprep.subr.mxu0 0.0
        %4291 = vmatpush1.msra.mxu0 0.0
        %4292 = vmatprep.subr.mxu0 0.0
        %4293 = vmatpush1.msra.mxu0 0.0
        %4294 = vmatprep.subr.mxu0 0.0
        %4295 = vmatpush1.msra.mxu0 0.0
        %4296 = vmatprep.subr.mxu0 0.0
        %4297 = vmatpush1.msra.mxu0 0.0
        %4298 = vmatprep.mubr.f32.mxu0 0.0
        %v4299 = vand.u32 %v719, 4294901760
        %4300 = vmatmul.mubr.f32.gmra.mrb[0].mxu0 %v4299
        %v4301 = vpop.f32.mrb[0].mxu0
        %v4302 = vadd.f32 %v3935, %v4301
        %v4303 = vpop.f32.mrb[0].mxu0
        %4304 = vmatprep.mubr.f32.mxu0 0.0
        %v4305 = vand.u32 %v720, 4294901760
        %4306 = vmatmul.mubr.f32.gmra.mrb[0].mxu0 %v4305
        %v4307 = vpop.f32.mrb[0].mxu0
        %v4308 = vadd.f32 %v3943, %v4307
        %v4309 = vpop.f32.mrb[0].mxu0
        %4310 = vmatprep.mubr.f32.mxu0 0.0
        %v4311 = vand.u32 %v721, 4294901760
        %4312 = vmatmul.mubr.f32.gmra.mrb[0].mxu0 %v4311
        %v4313 = vpop.f32.mrb[0].mxu0
        %v4314 = vadd.f32 %v3951, %v4313
        %v4315 = vpop.f32.mrb[0].mxu0
        %4316 = vmatprep.mubr.f32.mxu0 0.0
        %v4317 = vand.u32 %v722, 4294901760
        %4318 = vmatmul.mubr.f32.gmra.mrb[0].mxu0 %v4317
        %v4319 = vpop.f32.mrb[0].mxu0
        %v4320 = vadd.f32 %v3959, %v4319
        %v4321 = vpop.f32.mrb[0].mxu0
        %4322 = vmatprep.mubr.f32.mxu0 0.0
        %v4323 = vand.u32 %v723, 4294901760
        %4324 = vmatmul.mubr.f32.gmra.mrb[0].mxu0 %v4323
        %v4325 = vpop.f32.mrb[0].mxu0
        %v4326 = vadd.f32 %v3967, %v4325
        %v4327 = vpop.f32.mrb[0].mxu0
        %4328 = vmatprep.mubr.f32.mxu0 0.0
        %v4329 = vand.u32 %v724, 4294901760
        %4330 = vmatmul.mubr.f32.gmra.mrb[0].mxu0 %v4329
        %v4331 = vpop.f32.mrb[0].mxu0
        %v4332 = vadd.f32 %v3975, %v4331
        %v4333 = vpop.f32.mrb[0].mxu0
        %4334 = vmatprep.mubr.f32.mxu0 0.0
        %v4335 = vand.u32 %v725, 4294901760
        %4336 = vmatmul.mubr.f32.gmra.mrb[0].mxu0 %v4335
        %v4337 = vpop.f32.mrb[0].mxu0
        %v4338 = vadd.f32 %v3983, %v4337
        %v4339 = vpop.f32.mrb[0].mxu0
        %4340 = vmatprep.mubr.f32.mxu0 0.0
        %v4341 = vand.u32 %v726, 4294901760
        %4342 = vmatmul.mubr.f32.gmra.mrb[0].mxu0 %v4341
        %v4343 = vpop.f32.mrb[0].mxu0
        %v4344 = vadd.f32 %v3991, %v4343
        %v4345 = vpop.f32.mrb[0].mxu0
        %4346 = vmatprep.mubr.f32.mxu0 0.0
        %v4347 = vand.u32 %v727, 4294901760
        %4348 = vmatmul.mubr.f32.gmra.mrb[0].mxu0 %v4347
        %v4349 = vpop.f32.mrb[0].mxu0
        %v4350 = vadd.f32 %v3999, %v4349
        %v4351 = vpop.f32.mrb[0].mxu0
        %4352 = vmatprep.mubr.f32.mxu0 0.0
        %v4353 = vand.u32 %v728, 4294901760
        %4354 = vmatmul.mubr.f32.gmra.mrb[0].mxu0 %v4353
        %v4355 = vpop.f32.mrb[0].mxu0
        %v4356 = vadd.f32 %v4007, %v4355
        %v4357 = vpop.f32.mrb[0].mxu0
        %4358 = vmatprep.mubr.f32.mxu0 0.0
        %v4359 = vand.u32 %v729, 4294901760
        %4360 = vmatmul.mubr.f32.gmra.mrb[0].mxu0 %v4359
        %v4361 = vpop.f32.mrb[0].mxu0
        %v4362 = vadd.f32 %v4015, %v4361
        %v4363 = vpop.f32.mrb[0].mxu0
        %4364 = vmatprep.mubr.f32.mxu0 0.0
        %v4365 = vand.u32 %v730, 4294901760
        %4366 = vmatmul.mubr.f32.gmra.mrb[0].mxu0 %v4365
        %v4367 = vpop.f32.mrb[0].mxu0
        %v4368 = vadd.f32 %v4023, %v4367
        %v4369 = vpop.f32.mrb[0].mxu0
        %4370 = vmatprep.mubr.f32.mxu0 0.0
        %v4371 = vand.u32 %v731, 4294901760
        %4372 = vmatmul.mubr.f32.gmra.mrb[0].mxu0 %v4371
        %v4373 = vpop.f32.mrb[0].mxu0
        %v4374 = vadd.f32 %v4031, %v4373
        %v4375 = vpop.f32.mrb[0].mxu0
        %4376 = vmatprep.mubr.f32.mxu0 0.0
        %v4377 = vand.u32 %v732, 4294901760
        %4378 = vmatmul.mubr.f32.gmra.mrb[0].mxu0 %v4377
        %v4379 = vpop.f32.mrb[0].mxu0
        %v4380 = vadd.f32 %v4039, %v4379
        %v4381 = vpop.f32.mrb[0].mxu0
        %4382 = vmatprep.mubr.f32.mxu0 0.0
        %v4383 = vand.u32 %v733, 4294901760
        %4384 = vmatmul.mubr.f32.gmra.mrb[0].mxu0 %v4383
        %v4385 = vpop.f32.mrb[0].mxu0
        %v4386 = vadd.f32 %v4047, %v4385
        %v4387 = vpop.f32.mrb[0].mxu0
        %4388 = vmatprep.mubr.f32.mxu0 0.0
        %v4389 = vand.u32 %v734, 4294901760
        %4390 = vmatmul.mubr.f32.gmra.mrb[0].mxu0 %v4389
        %v4391 = vpop.f32.mrb[0].mxu0
        %v4392 = vadd.f32 %v4055, %v4391
        %v4393 = vpop.f32.mrb[0].mxu0
        %4394 = vmatprep.mubr.f32.mxu0 0.0
        %v4395 = vand.u32 %v735, 4294901760
        %4396 = vmatmul.mubr.f32.gmra.mrb[0].mxu0 %v4395
        %v4397 = vpop.f32.mrb[0].mxu0
        %v4398 = vadd.f32 %v4063, %v4397
        %v4399 = vpop.f32.mrb[0].mxu0
        %4400 = vmatprep.mubr.f32.mxu0 0.0
        %v4401 = vand.u32 %v736, 4294901760
        %4402 = vmatmul.mubr.f32.gmra.mrb[0].mxu0 %v4401
        %v4403 = vpop.f32.mrb[0].mxu0
        %v4404 = vadd.f32 %v4071, %v4403
        %v4405 = vpop.f32.mrb[0].mxu0
        %4406 = vmatprep.mubr.f32.mxu0 0.0
        %v4407 = vand.u32 %v737, 4294901760
        %4408 = vmatmul.mubr.f32.gmra.mrb[0].mxu0 %v4407
        %v4409 = vpop.f32.mrb[0].mxu0
        %v4410 = vadd.f32 %v4079, %v4409
        %v4411 = vpop.f32.mrb[0].mxu0
        %4412 = vmatprep.mubr.f32.mxu0 0.0
        %v4413 = vand.u32 %v738, 4294901760
        %4414 = vmatmul.mubr.f32.gmra.mrb[0].mxu0 %v4413
        %v4415 = vpop.f32.mrb[0].mxu0
        %v4416 = vadd.f32 %v4087, %v4415
        %v4417 = vpop.f32.mrb[0].mxu0
        %4418 = vmatprep.mubr.f32.mxu0 0.0
        %v4419 = vand.u32 %v739, 4294901760
        %4420 = vmatmul.mubr.f32.gmra.mrb[0].mxu0 %v4419
        %v4421 = vpop.f32.mrb[0].mxu0
        %v4422 = vadd.f32 %v4095, %v4421
        %v4423 = vpop.f32.mrb[0].mxu0
        %4424 = vmatprep.mubr.f32.mxu0 0.0
        %v4425 = vand.u32 %v740, 4294901760
        %4426 = vmatmul.mubr.f32.gmra.mrb[0].mxu0 %v4425
        %v4427 = vpop.f32.mrb[0].mxu0
        %v4428 = vadd.f32 %v4103, %v4427
        %v4429 = vpop.f32.mrb[0].mxu0
        %4430 = vmatprep.mubr.f32.mxu0 0.0
        %v4431 = vand.u32 %v741, 4294901760
        %4432 = vmatmul.mubr.f32.gmra.mrb[0].mxu0 %v4431
        %v4433 = vpop.f32.mrb[0].mxu0
        %v4434 = vadd.f32 %v4111, %v4433
        %v4435 = vpop.f32.mrb[0].mxu0
        %4436 = vmatprep.mubr.f32.mxu0 0.0
        %v4437 = vand.u32 %v742, 4294901760
        %4438 = vmatmul.mubr.f32.gmra.mrb[0].mxu0 %v4437
        %v4439 = vpop.f32.mrb[0].mxu0
        %v4440 = vadd.f32 %v4119, %v4439
        %v4441 = vpop.f32.mrb[0].mxu0
        %4442 = vmatprep.mubr.f32.mxu0 0.0
        %v4443 = vand.u32 %v743, 4294901760
        %4444 = vmatmul.mubr.f32.gmra.mrb[0].mxu0 %v4443
        %v4445 = vpop.f32.mrb[0].mxu0
        %v4446 = vadd.f32 %v4127, %v4445
        %v4447 = vpop.f32.mrb[0].mxu0
        %4448 = vmatprep.mubr.f32.mxu0 0.0
        %v4449 = vand.u32 %v744, 4294901760
        %4450 = vmatmul.mubr.f32.gmra.mrb[0].mxu0 %v4449
        %v4451 = vpop.f32.mrb[0].mxu0
        %v4452 = vadd.f32 %v4135, %v4451
        %v4453 = vpop.f32.mrb[0].mxu0
        %4454 = vmatprep.mubr.f32.mxu0 0.0
        %v4455 = vand.u32 %v745, 4294901760
        %4456 = vmatmul.mubr.f32.gmra.mrb[0].mxu0 %v4455
        %v4457 = vpop.f32.mrb[0].mxu0
        %v4458 = vadd.f32 %v4143, %v4457
        %v4459 = vpop.f32.mrb[0].mxu0
        %4460 = vmatprep.mubr.f32.mxu0 0.0
        %v4461 = vand.u32 %v746, 4294901760
        %4462 = vmatmul.mubr.f32.gmra.mrb[0].mxu0 %v4461
        %v4463 = vpop.f32.mrb[0].mxu0
        %v4464 = vadd.f32 %v4151, %v4463
        %v4465 = vpop.f32.mrb[0].mxu0
        %4466 = vmatprep.mubr.f32.mxu0 0.0
        %v4467 = vand.u32 %v747, 4294901760
        %4468 = vmatmul.mubr.f32.gmra.mrb[0].mxu0 %v4467
        %v4469 = vpop.f32.mrb[0].mxu0
        %v4470 = vadd.f32 %v4159, %v4469
        %v4471 = vpop.f32.mrb[0].mxu0
        %4472 = vmatprep.mubr.f32.mxu0 0.0
        %v4473 = vand.u32 %v748, 4294901760
        %4474 = vmatmul.mubr.f32.gmra.mrb[0].mxu0 %v4473
        %v4475 = vpop.f32.mrb[0].mxu0
        %v4476 = vadd.f32 %v4167, %v4475
        %v4477 = vpop.f32.mrb[0].mxu0
        %4478 = vmatprep.mubr.f32.mxu0 0.0
        %v4479 = vand.u32 %v749, 4294901760
        %4480 = vmatmul.mubr.f32.gmra.mrb[0].mxu0 %v4479
        %v4481 = vpop.f32.mrb[0].mxu0
        %v4482 = vadd.f32 %v4175, %v4481
        %v4483 = vpop.f32.mrb[0].mxu0
        %4484 = vmatprep.mubr.f32.mxu0 0.0
        %v4485 = vand.u32 %v750, 4294901760
        %4486 = vmatmul.mubr.f32.gmra.mrb[0].mxu0 %v4485
        %v4487 = vpop.f32.mrb[0].mxu0
        %v4488 = vadd.f32 %v4183, %v4487
        %v4489 = vpop.f32.mrb[0].mxu0
        %4490 = vdwg.mxu0
        %4491 = vmatprep.subr.mxu0 0.0
        %v4492 = vand.u32 %v2774, 4294901760
        %4493 = vmatpush1.msra.mxu0 %v4492
        %4494 = vmatprep.subr.mxu0 0.0
        %v4495 = vand.u32 %v2775, 4294901760
        %4496 = vmatpush1.msra.mxu0 %v4495
        %4497 = vmatprep.subr.mxu0 0.0
        %v4498 = vand.u32 %v2776, 4294901760
        %4499 = vmatpush1.msra.mxu0 %v4498
        %4500 = vmatprep.subr.mxu0 0.0
        %v4501 = vand.u32 %v2777, 4294901760
        %4502 = vmatpush1.msra.mxu0 %v4501
        %4503 = vmatprep.subr.mxu0 0.0
        %v4504 = vand.u32 %v2778, 4294901760
        %4505 = vmatpush1.msra.mxu0 %v4504
        %4506 = vmatprep.subr.mxu0 0.0
        %v4507 = vand.u32 %v2779, 4294901760
        %4508 = vmatpush1.msra.mxu0 %v4507
        %4509 = vmatprep.subr.mxu0 0.0
        %v4510 = vand.u32 %v2780, 4294901760
        %4511 = vmatpush1.msra.mxu0 %v4510
        %4512 = vmatprep.subr.mxu0 0.0
        %v4513 = vand.u32 %v2781, 4294901760
        %4514 = vmatpush1.msra.mxu0 %v4513
        %4515 = vmatprep.subr.mxu0 0.0
        %v4516 = vand.u32 %v2782, 4294901760
        %4517 = vmatpush1.msra.mxu0 %v4516
        %4518 = vmatprep.subr.mxu0 0.0
        %v4519 = vand.u32 %v2783, 4294901760
        %4520 = vmatpush1.msra.mxu0 %v4519
        %4521 = vmatprep.subr.mxu0 0.0
        %v4522 = vand.u32 %v2784, 4294901760
        %4523 = vmatpush1.msra.mxu0 %v4522
        %4524 = vmatprep.subr.mxu0 0.0
        %v4525 = vand.u32 %v2785, 4294901760
        %4526 = vmatpush1.msra.mxu0 %v4525
        %4527 = vmatprep.subr.mxu0 0.0
        %v4528 = vand.u32 %v2786, 4294901760
        %4529 = vmatpush1.msra.mxu0 %v4528
        %4530 = vmatprep.subr.mxu0 0.0
        %v4531 = vand.u32 %v2787, 4294901760
        %4532 = vmatpush1.msra.mxu0 %v4531
        %4533 = vmatprep.subr.mxu0 0.0
        %v4534 = vand.u32 %v2788, 4294901760
        %4535 = vmatpush1.msra.mxu0 %v4534
        %4536 = vmatprep.subr.mxu0 0.0
        %v4537 = vand.u32 %v2789, 4294901760
        %4538 = vmatpush1.msra.mxu0 %v4537
        %4539 = vmatprep.subr.mxu0 0.0
        %4540 = vmatpush1.msra.mxu0 0.0
        %4541 = vmatprep.subr.mxu0 0.0
        %4542 = vmatpush1.msra.mxu0 0.0
        %4543 = vmatprep.subr.mxu0 0.0
        %4544 = vmatpush1.msra.mxu0 0.0
        %4545 = vmatprep.subr.mxu0 0.0
        %4546 = vmatpush1.msra.mxu0 0.0
        %4547 = vmatprep.subr.mxu0 0.0
        %4548 = vmatpush1.msra.mxu0 0.0
        %4549 = vmatprep.subr.mxu0 0.0
        %4550 = vmatpush1.msra.mxu0 0.0
        %4551 = vmatprep.subr.mxu0 0.0
        %4552 = vmatpush1.msra.mxu0 0.0
        %4553 = vmatprep.subr.mxu0 0.0
        %4554 = vmatpush1.msra.mxu0 0.0
        %4555 = vmatprep.subr.mxu0 0.0
        %4556 = vmatpush1.msra.mxu0 0.0
        %4557 = vmatprep.subr.mxu0 0.0
        %4558 = vmatpush1.msra.mxu0 0.0
        %4559 = vmatprep.subr.mxu0 0.0
        %4560 = vmatpush1.msra.mxu0 0.0
        %4561 = vmatprep.subr.mxu0 0.0
        %4562 = vmatpush1.msra.mxu0 0.0
        %4563 = vmatprep.subr.mxu0 0.0
        %4564 = vmatpush1.msra.mxu0 0.0
        %4565 = vmatprep.subr.mxu0 0.0
        %4566 = vmatpush1.msra.mxu0 0.0
        %4567 = vmatprep.subr.mxu0 0.0
        %4568 = vmatpush1.msra.mxu0 0.0
        %4569 = vmatprep.subr.mxu0 0.0
        %4570 = vmatpush1.msra.mxu0 0.0
        %4571 = vmatprep.mubr.f32.mxu0 0.0
        %v4572 = vand.u32 %v719, 4294901760
        %4573 = vmatmul.mubr.f32.gmra.mrb[0].mxu0 %v4572
        %v4574 = vpop.f32.mrb[0].mxu0
        %v4575 = vadd.f32 %v4302, %v4574
        %v4576 = vpop.f32.mrb[0].mxu0
        %4577 = vmatprep.mubr.f32.mxu0 0.0
        %v4578 = vand.u32 %v720, 4294901760
        %4579 = vmatmul.mubr.f32.gmra.mrb[0].mxu0 %v4578
        %v4580 = vpop.f32.mrb[0].mxu0
        %v4581 = vadd.f32 %v4308, %v4580
        %v4582 = vpop.f32.mrb[0].mxu0
        %4583 = vmatprep.mubr.f32.mxu0 0.0
        %v4584 = vand.u32 %v721, 4294901760
        %4585 = vmatmul.mubr.f32.gmra.mrb[0].mxu0 %v4584
        %v4586 = vpop.f32.mrb[0].mxu0
        %v4587 = vadd.f32 %v4314, %v4586
        %v4588 = vpop.f32.mrb[0].mxu0
        %4589 = vmatprep.mubr.f32.mxu0 0.0
        %v4590 = vand.u32 %v722, 4294901760
        %4591 = vmatmul.mubr.f32.gmra.mrb[0].mxu0 %v4590
        %v4592 = vpop.f32.mrb[0].mxu0
        %v4593 = vadd.f32 %v4320, %v4592
        %v4594 = vpop.f32.mrb[0].mxu0
        %4595 = vmatprep.mubr.f32.mxu0 0.0
        %v4596 = vand.u32 %v723, 4294901760
        %4597 = vmatmul.mubr.f32.gmra.mrb[0].mxu0 %v4596
        %v4598 = vpop.f32.mrb[0].mxu0
        %v4599 = vadd.f32 %v4326, %v4598
        %v4600 = vpop.f32.mrb[0].mxu0
        %4601 = vmatprep.mubr.f32.mxu0 0.0
        %v4602 = vand.u32 %v724, 4294901760
        %4603 = vmatmul.mubr.f32.gmra.mrb[0].mxu0 %v4602
        %v4604 = vpop.f32.mrb[0].mxu0
        %v4605 = vadd.f32 %v4332, %v4604
        %v4606 = vpop.f32.mrb[0].mxu0
        %4607 = vmatprep.mubr.f32.mxu0 0.0
        %v4608 = vand.u32 %v725, 4294901760
        %4609 = vmatmul.mubr.f32.gmra.mrb[0].mxu0 %v4608
        %v4610 = vpop.f32.mrb[0].mxu0
        %v4611 = vadd.f32 %v4338, %v4610
        %v4612 = vpop.f32.mrb[0].mxu0
        %4613 = vmatprep.mubr.f32.mxu0 0.0
        %v4614 = vand.u32 %v726, 4294901760
        %4615 = vmatmul.mubr.f32.gmra.mrb[0].mxu0 %v4614
        %v4616 = vpop.f32.mrb[0].mxu0
        %v4617 = vadd.f32 %v4344, %v4616
        %v4618 = vpop.f32.mrb[0].mxu0
        %4619 = vmatprep.mubr.f32.mxu0 0.0
        %v4620 = vand.u32 %v727, 4294901760
        %4621 = vmatmul.mubr.f32.gmra.mrb[0].mxu0 %v4620
        %v4622 = vpop.f32.mrb[0].mxu0
        %v4623 = vadd.f32 %v4350, %v4622
        %v4624 = vpop.f32.mrb[0].mxu0
        %4625 = vmatprep.mubr.f32.mxu0 0.0
        %v4626 = vand.u32 %v728, 4294901760
        %4627 = vmatmul.mubr.f32.gmra.mrb[0].mxu0 %v4626
        %v4628 = vpop.f32.mrb[0].mxu0
        %v4629 = vadd.f32 %v4356, %v4628
        %v4630 = vpop.f32.mrb[0].mxu0
        %4631 = vmatprep.mubr.f32.mxu0 0.0
        %v4632 = vand.u32 %v729, 4294901760
        %4633 = vmatmul.mubr.f32.gmra.mrb[0].mxu0 %v4632
        %v4634 = vpop.f32.mrb[0].mxu0
        %v4635 = vadd.f32 %v4362, %v4634
        %v4636 = vpop.f32.mrb[0].mxu0
        %4637 = vmatprep.mubr.f32.mxu0 0.0
        %v4638 = vand.u32 %v730, 4294901760
        %4639 = vmatmul.mubr.f32.gmra.mrb[0].mxu0 %v4638
        %v4640 = vpop.f32.mrb[0].mxu0
        %v4641 = vadd.f32 %v4368, %v4640
        %v4642 = vpop.f32.mrb[0].mxu0
        %4643 = vmatprep.mubr.f32.mxu0 0.0
        %v4644 = vand.u32 %v731, 4294901760
        %4645 = vmatmul.mubr.f32.gmra.mrb[0].mxu0 %v4644
        %v4646 = vpop.f32.mrb[0].mxu0
        %v4647 = vadd.f32 %v4374, %v4646
        %v4648 = vpop.f32.mrb[0].mxu0
        %4649 = vmatprep.mubr.f32.mxu0 0.0
        %v4650 = vand.u32 %v732, 4294901760
        %4651 = vmatmul.mubr.f32.gmra.mrb[0].mxu0 %v4650
        %v4652 = vpop.f32.mrb[0].mxu0
        %v4653 = vadd.f32 %v4380, %v4652
        %v4654 = vpop.f32.mrb[0].mxu0
        %4655 = vmatprep.mubr.f32.mxu0 0.0
        %v4656 = vand.u32 %v733, 4294901760
        %4657 = vmatmul.mubr.f32.gmra.mrb[0].mxu0 %v4656
        %v4658 = vpop.f32.mrb[0].mxu0
        %v4659 = vadd.f32 %v4386, %v4658
        %v4660 = vpop.f32.mrb[0].mxu0
        %4661 = vmatprep.mubr.f32.mxu0 0.0
        %v4662 = vand.u32 %v734, 4294901760
        %4663 = vmatmul.mubr.f32.gmra.mrb[0].mxu0 %v4662
        %v4664 = vpop.f32.mrb[0].mxu0
        %v4665 = vadd.f32 %v4392, %v4664
        %v4666 = vpop.f32.mrb[0].mxu0
        %4667 = vmatprep.mubr.f32.mxu0 0.0
        %v4668 = vand.u32 %v735, 4294901760
        %4669 = vmatmul.mubr.f32.gmra.mrb[0].mxu0 %v4668
        %v4670 = vpop.f32.mrb[0].mxu0
        %v4671 = vadd.f32 %v4398, %v4670
        %v4672 = vpop.f32.mrb[0].mxu0
        %4673 = vmatprep.mubr.f32.mxu0 0.0
        %v4674 = vand.u32 %v736, 4294901760
        %4675 = vmatmul.mubr.f32.gmra.mrb[0].mxu0 %v4674
        %v4676 = vpop.f32.mrb[0].mxu0
        %v4677 = vadd.f32 %v4404, %v4676
        %v4678 = vpop.f32.mrb[0].mxu0
        %4679 = vmatprep.mubr.f32.mxu0 0.0
        %v4680 = vand.u32 %v737, 4294901760
        %4681 = vmatmul.mubr.f32.gmra.mrb[0].mxu0 %v4680
        %v4682 = vpop.f32.mrb[0].mxu0
        %v4683 = vadd.f32 %v4410, %v4682
        %v4684 = vpop.f32.mrb[0].mxu0
        %4685 = vmatprep.mubr.f32.mxu0 0.0
        %v4686 = vand.u32 %v738, 4294901760
        %4687 = vmatmul.mubr.f32.gmra.mrb[0].mxu0 %v4686
        %v4688 = vpop.f32.mrb[0].mxu0
        %v4689 = vadd.f32 %v4416, %v4688
        %v4690 = vpop.f32.mrb[0].mxu0
        %4691 = vmatprep.mubr.f32.mxu0 0.0
        %v4692 = vand.u32 %v739, 4294901760
        %4693 = vmatmul.mubr.f32.gmra.mrb[0].mxu0 %v4692
        %v4694 = vpop.f32.mrb[0].mxu0
        %v4695 = vadd.f32 %v4422, %v4694
        %v4696 = vpop.f32.mrb[0].mxu0
        %4697 = vmatprep.mubr.f32.mxu0 0.0
        %v4698 = vand.u32 %v740, 4294901760
        %4699 = vmatmul.mubr.f32.gmra.mrb[0].mxu0 %v4698
        %v4700 = vpop.f32.mrb[0].mxu0
        %v4701 = vadd.f32 %v4428, %v4700
        %v4702 = vpop.f32.mrb[0].mxu0
        %4703 = vmatprep.mubr.f32.mxu0 0.0
        %v4704 = vand.u32 %v741, 4294901760
        %4705 = vmatmul.mubr.f32.gmra.mrb[0].mxu0 %v4704
        %v4706 = vpop.f32.mrb[0].mxu0
        %v4707 = vadd.f32 %v4434, %v4706
        %v4708 = vpop.f32.mrb[0].mxu0
        %4709 = vmatprep.mubr.f32.mxu0 0.0
        %v4710 = vand.u32 %v742, 4294901760
        %4711 = vmatmul.mubr.f32.gmra.mrb[0].mxu0 %v4710
        %v4712 = vpop.f32.mrb[0].mxu0
        %v4713 = vadd.f32 %v4440, %v4712
        %v4714 = vpop.f32.mrb[0].mxu0
        %4715 = vmatprep.mubr.f32.mxu0 0.0
        %v4716 = vand.u32 %v743, 4294901760
        %4717 = vmatmul.mubr.f32.gmra.mrb[0].mxu0 %v4716
        %v4718 = vpop.f32.mrb[0].mxu0
        %v4719 = vadd.f32 %v4446, %v4718
        %v4720 = vpop.f32.mrb[0].mxu0
        %4721 = vmatprep.mubr.f32.mxu0 0.0
        %v4722 = vand.u32 %v744, 4294901760
        %4723 = vmatmul.mubr.f32.gmra.mrb[0].mxu0 %v4722
        %v4724 = vpop.f32.mrb[0].mxu0
        %v4725 = vadd.f32 %v4452, %v4724
        %v4726 = vpop.f32.mrb[0].mxu0
        %4727 = vmatprep.mubr.f32.mxu0 0.0
        %v4728 = vand.u32 %v745, 4294901760
        %4729 = vmatmul.mubr.f32.gmra.mrb[0].mxu0 %v4728
        %v4730 = vpop.f32.mrb[0].mxu0
        %v4731 = vadd.f32 %v4458, %v4730
        %v4732 = vpop.f32.mrb[0].mxu0
        %4733 = vmatprep.mubr.f32.mxu0 0.0
        %v4734 = vand.u32 %v746, 4294901760
        %4735 = vmatmul.mubr.f32.gmra.mrb[0].mxu0 %v4734
        %v4736 = vpop.f32.mrb[0].mxu0
        %v4737 = vadd.f32 %v4464, %v4736
        %v4738 = vpop.f32.mrb[0].mxu0
        %4739 = vmatprep.mubr.f32.mxu0 0.0
        %v4740 = vand.u32 %v747, 4294901760
        %4741 = vmatmul.mubr.f32.gmra.mrb[0].mxu0 %v4740
        %v4742 = vpop.f32.mrb[0].mxu0
        %v4743 = vadd.f32 %v4470, %v4742
        %v4744 = vpop.f32.mrb[0].mxu0
        %4745 = vmatprep.mubr.f32.mxu0 0.0
        %v4746 = vand.u32 %v748, 4294901760
        %4747 = vmatmul.mubr.f32.gmra.mrb[0].mxu0 %v4746
        %v4748 = vpop.f32.mrb[0].mxu0
        %v4749 = vadd.f32 %v4476, %v4748
        %v4750 = vpop.f32.mrb[0].mxu0
        %4751 = vmatprep.mubr.f32.mxu0 0.0
        %v4752 = vand.u32 %v749, 4294901760
        %4753 = vmatmul.mubr.f32.gmra.mrb[0].mxu0 %v4752
        %v4754 = vpop.f32.mrb[0].mxu0
        %v4755 = vadd.f32 %v4482, %v4754
        %v4756 = vpop.f32.mrb[0].mxu0
        %4757 = vmatprep.mubr.f32.mxu0 0.0
        %v4758 = vand.u32 %v750, 4294901760
        %4759 = vmatmul.mubr.f32.gmra.mrb[0].mxu0 %v4758
        %v4760 = vpop.f32.mrb[0].mxu0
        %v4761 = vadd.f32 %v4488, %v4760
        %v4762 = vpop.f32.mrb[0].mxu0
        %4763 = vdwg.mxu0
        %4764 = vst.msk [vmem:[%s286] sm:$0xff] %vm2741, %v4575
        %4765 = vst.msk [vmem:[%s286 + $0x8] sm:$0xff] %vm2741, %v4581
        %4766 = vst.msk [vmem:[%s286 + $0x10] sm:$0xff] %vm2741, %v4587
        %4767 = vst.msk [vmem:[%s286 + $0x18] sm:$0xff] %vm2741, %v4593
        %4768 = vst.msk [vmem:[%s286 + $0x20] sm:$0xff] %vm2741, %v4599
        %4769 = vst.msk [vmem:[%s286 + $0x28] sm:$0xff] %vm2741, %v4605
        %4770 = vst.msk [vmem:[%s286 + $0x30] sm:$0xff] %vm2741, %v4611
        %4771 = vst.msk [vmem:[%s286 + $0x38] sm:$0xff] %vm2741, %v4617
        %4772 = vst.msk [vmem:[%s286 + $0x40] sm:$0xff] %vm2741, %v4623
        %4773 = vst.msk [vmem:[%s286 + $0x48] sm:$0xff] %vm2741, %v4629
        %4774 = vst.msk [vmem:[%s286 + $0x50] sm:$0xff] %vm2741, %v4635
        %4775 = vst.msk [vmem:[%s286 + $0x58] sm:$0xff] %vm2741, %v4641
        %4776 = vst.msk [vmem:[%s286 + $0x60] sm:$0xff] %vm2741, %v4647
        %4777 = vst.msk [vmem:[%s286 + $0x68] sm:$0xff] %vm2741, %v4653
        %4778 = vst.msk [vmem:[%s286 + $0x70] sm:$0xff] %vm2741, %v4659
        %4779 = vst.msk [vmem:[%s286 + $0x78] sm:$0xff] %vm2741, %v4665
        %4780 = vst.msk [vmem:[%s286 + $0x80] sm:$0xff] %vm2741, %v4671
        %4781 = vst.msk [vmem:[%s286 + $0x88] sm:$0xff] %vm2741, %v4677
        %4782 = vst.msk [vmem:[%s286 + $0x90] sm:$0xff] %vm2741, %v4683
        %4783 = vst.msk [vmem:[%s286 + $0x98] sm:$0xff] %vm2741, %v4689
        %4784 = vst.msk [vmem:[%s286 + $0xa0] sm:$0xff] %vm2741, %v4695
        %4785 = vst.msk [vmem:[%s286 + $0xa8] sm:$0xff] %vm2741, %v4701
        %4786 = vst.msk [vmem:[%s286 + $0xb0] sm:$0xff] %vm2741, %v4707
        %4787 = vst.msk [vmem:[%s286 + $0xb8] sm:$0xff] %vm2741, %v4713
        %4788 = vst.msk [vmem:[%s286 + $0xc0] sm:$0xff] %vm2741, %v4719
        %4789 = vst.msk [vmem:[%s286 + $0xc8] sm:$0xff] %vm2741, %v4725
        %4790 = vst.msk [vmem:[%s286 + $0xd0] sm:$0xff] %vm2741, %v4731
        %4791 = vst.msk [vmem:[%s286 + $0xd8] sm:$0xff] %vm2741, %v4737
        %4792 = vst.msk [vmem:[%s286 + $0xe0] sm:$0xff] %vm2741, %v4743
        %4793 = vst.msk [vmem:[%s286 + $0xe8] sm:$0xff] %vm2741, %v4749
        %4794 = vst.msk [vmem:[%s286 + $0xf0] sm:$0xff] %vm2741, %v4755
        %4795 = vst.msk [vmem:[%s286 + $0xf8] sm:$0xff] %vm2741, %v4761
        %s4796 = smul.u32 32, %s21
        %p4797 = scmp.lt.s32.totalorder %s4796, 63
        %s4798 = scalar_select %p4797, %s4796, 63
        %s4799 = smul.addr %s4798, 8
        %s4800 = scalar_lea.vmem %s5, %s4799
        %s4801 = smul.u32 32, %s21
        %p4802 = scmp.lt.s32.totalorder %s4801, 63
        %s4803 = scalar_select %p4802, %s4801, 63
        %s4804 = smul.addr %s4803, 8
        %s4805 = scalar_lea.vmem %s6, %s4804
        // Predicated region
        $region45: #{tpu_custom_call.1} parent=39 // pred_check
          %p4806 = pneg %p149
        $region46: #{tpu_custom_call.1} parent=39 // pred_check_branch
          %4808 = sbr.rel (%p4806) target = $region48
        $region47: #{tpu_custom_call.1} parent=39 // pred_region
          %s4809 = smul.u32 32, %s21
        $region48: #{tpu_custom_call.1} parent=39 // pred_fallthru
          _
        // Predicated region
        $region49: #{tpu_custom_call.1} parent=39 // pred_check
          %p4810 = pneg %p175
        $region50: #{tpu_custom_call.1} parent=39 // pred_check_branch
          %4812 = sbr.rel (%p4810) target = $region52
        $region51: #{tpu_custom_call.1} parent=39 // pred_region
          %s4813 = smul.u32 32, %s21
        $region52: #{tpu_custom_call.1} parent=39 // pred_fallthru
          _
      $region40: #{tpu_custom_call.1} parent=5 // pred_fallthru
        _
      %p4814 = scmp.le.s32.totalorder 2, %s16
      // Predicated region
      $region53: #{tpu_custom_call.1} parent=5 // pred_check
        %p4815 = pneg %p4814
      $region54: #{tpu_custom_call.1} parent=5 // pred_check_branch
        %4817 = sbr.rel (%p4815) target = $region56
      $region55: #{tpu_custom_call.1} parent=5 // pred_region
        %s4818 = ssub.s32 %s16, 2
        // Predicated region
        $region57: #{tpu_custom_call.1} parent=55 // pred_check
          %p4819 = pneg %p155
        $region58: #{tpu_custom_call.1} parent=55 // pred_check_branch
          %4821 = sbr.rel (%p4819) target = $region60
        $region59: #{tpu_custom_call.1} parent=55 // pred_region
          %s4822 = smul.u32 32, %s22
          %p4823 = scmp.lt.s32.totalorder %s4822, 63
          %s4824 = scalar_select %p4823, %s4822, 63
          %s4825 = smul.addr %s4824, 8
          %s4826 = scalar_lea.vmem %s5, %s4825
        $region60: #{tpu_custom_call.1} parent=55 // pred_fallthru
          _
        // Predicated region
        $region61: #{tpu_custom_call.1} parent=55 // pred_check
          %p4827 = pneg %p181
        $region62: #{tpu_custom_call.1} parent=55 // pred_check_branch
          %4829 = sbr.rel (%p4827) target = $region64
        $region63: #{tpu_custom_call.1} parent=55 // pred_region
          %s4830 = smul.u32 32, %s22
          %p4831 = scmp.lt.s32.totalorder %s4830, 63
          %s4832 = scalar_select %p4831, %s4830, 63
          %s4833 = smul.addr %s4832, 8
          %s4834 = scalar_lea.vmem %s6, %s4833
        $region64: #{tpu_custom_call.1} parent=55 // pred_fallthru
          _
      $region56: #{tpu_custom_call.1} parent=5 // pred_fallthru
        _
    $region6: #{tpu_custom_call.1} parent=1 // loop_footer
      %s20 = sadd.s32 1, %s16
    $region7: #{tpu_custom_call.1} parent=1 // loop_footer_branch
      %15 = sbr.rel target = $region3
    $region8: #{tpu_custom_call.1} parent=1 // loop_exit
      _
    %4835 = vsyncpa [#allocation3], 1
    %s4836 = scalar_lea.sflag [#allocation3], 1
    %4837 = vsyncpa %s4836, 1

</llo_original>
